<compile_context>
chip_gen: v7x
topology: tpu7x:2x2x1
jax: 0.10.0
libtpu: 0.0.40
codegen_flags: <defaults>
</compile_context>

<pallas_src>
import functools
import math

import jax
import jax.numpy as jnp
from jax.experimental import pallas as pl
from jax.experimental.pallas import tpu as pltpu

NUM_HEADS = 12          # hard-coded in SceneEncoder.__init__
LN_EPS = 1e-5           # nn.LayerNorm default
DIM_FEEDFORWARD = 2048  # nn.TransformerEncoderLayer default
NEG_INF = -1e30         # additive mask for off-head (block-diagonal) positions


def _layer_norm(x, w, b):
    mean = jnp.mean(x, axis=-1, keepdims=True)
    var = jnp.mean((x - mean) * (x - mean), axis=-1, keepdims=True)
    return (x - mean) * jax.lax.rsqrt(var + LN_EPS) * w + b


def _gelu(x, approximate):
    if approximate:
        # tanh approximation -> EUP slot (idle outside softmax exp)
        return jax.nn.gelu(x, approximate=True)
    # exact erf GELU (PyTorch F.gelu default) for strict parity
    return 0.5 * x * (1.0 + jax.lax.erf(x * (1.0 / math.sqrt(2.0))))


# ----------------------------------------------------------------------------
# Fused SceneEncoder kernel: one grid step = one (batch, layer) pair.
# ----------------------------------------------------------------------------
# TODO(synk): plucker_dist source is not included in the reference module; this
# implements the standard GBT Pluecker ray distance (reciprocal product over
# cross-norm for skew rays, moment-difference formula for parallel rays).
def _scene_encoder_kernel(rays_ref, x_ref, e_ref, hm_ref, negbase_ref,
                          wqkv_ref, wo_ref, w1_ref, w2_ref,
                          bqkv_ref, bo_ref, b1_ref, b2_ref,
                          ln1w_ref, ln1b_ref, ln2w_ref, ln2b_ref,
                          o_ref,
                          x_sc, mask_sc,
                          *, head_dim, geo_eps, neg_w2, use_geometry,
                          approximate_gelu):
    f32 = jnp.float32
    bf16 = jnp.bfloat16

    layer = pl.program_id(1)
    n_layers = pl.num_programs(1)

    S = x_ref.shape[1]
    D = x_ref.shape[2]

    E_f = e_ref[...]      # (H*S, S)  0/1 head-replication matrix (f32)
    hm = hm_ref[...]      # (H*S, D)  own-head column selector (f32)

    # -------- per-batch init (layer 0 only): load x, build geometric mask ----
    @pl.when(layer == 0)
    def _init():
        x_sc[...] = x_ref[0].astype(f32)

        if use_geometry:
            r6 = rays_ref[0].astype(f32)                 # (S, 6)
            d = r6[:, 0:3]                               # directions (S, 3)
            m = r6[:, 3:6]                               # moments    (S, 3)

            def gram(a, b):  # (S,3),(S,3) -> (S,S) with [i,j] = a_i . b_j
                return jax.lax.dot_general(a, b, (((1,), (1,)), ((), ())),
                                           preferred_element_type=f32)

            # Four tiny MXU pushes (no lane-crossing slices of a stacked gram).
            DD = gram(d, d)
            DM = gram(d, m)
            MD = gram(m, d)
            MM = gram(m, m)

            dn2 = jnp.sum(d * d, axis=1, keepdims=True)   # (S,1) ||d_i||^2
            mn2 = jnp.sum(m * m, axis=1, keepdims=True)   # (S,1) ||m_i||^2
            dm_dot = jnp.sum(d * m, axis=1, keepdims=True)
            ones = jnp.ones_like(dn2)

            def outer(a, b):  # (S,1),(S,1) -> (S,S) with [i,j] = a_i * b_j
                return jax.lax.dot_general(a, b, (((1,), (1,)), ((), ())),
                                           preferred_element_type=f32)

            # ||d_i x d_j||^2 = ||d_i||^2 ||d_j||^2 - (d_i . d_j)^2
            cn2 = jnp.maximum(outer(dn2, dn2) - DD * DD, 0.0)
            cn = jnp.sqrt(cn2)

            # skew-ray distance: |d_i.m_j + d_j.m_i| / ||d_i x d_j||
            dist_skew = jnp.abs(DM + MD) / (cn + geo_eps)

            # parallel-ray distance: ||d_i x (m_i - m_j)|| / ||d_i||^2
            mm_diff2 = mn2 + outer(ones, mn2) - 2.0 * MM
            dproj = dm_dot - DM
            par_num2 = jnp.maximum(dn2 * mm_diff2 - dproj * dproj, 0.0)
            dist_par = jnp.sqrt(par_num2) / (dn2 + geo_eps)

            dist = jnp.where(cn < geo_eps, dist_par, dist_skew)
            geo = neg_w2 * dist                           # (S, S) additive mask

            # expand to (H*S, H*S): geometric mask on same-head blocks,
            # NEG_INF skeleton (from negbase) everywhere else.
            geo_big = jax.lax.dot_general(
                jnp.dot(E_f, geo, preferred_element_type=f32), E_f,
                (((1,), (1,)), ((), ())), preferred_element_type=f32)
            mask_sc[...] = (negbase_ref[...] + geo_big).astype(mask_sc.dtype)
        else:
            mask_sc[...] = negbase_ref[...].astype(mask_sc.dtype)

    # -------- one transformer encoder layer (post-norm, GELU, eval) ----------
    scale = 1.0 / math.sqrt(head_dim)
    x = x_sc[...]                                         # (S, D) f32
    x_b = x.astype(bf16)

    # fused QKV projection: single MXU push, N = 3*D
    qkv = jnp.dot(x_b, wqkv_ref[0], preferred_element_type=f32) + bqkv_ref[0]
    q = qkv[:, 0:D] * scale
    k = qkv[:, D:2 * D]
    v = qkv[:, 2 * D:3 * D]

    # expand to (H*S, D) "one row per (seq, head)"; mask q/v to own-head cols
    q_e = jnp.dot(E_f, q, preferred_element_type=f32) * hm
    k_e = jnp.dot(E_f, k, preferred_element_type=f32)
    v_e = jnp.dot(E_f, v, preferred_element_type=f32) * hm

    # one big score matmul + (geometric + block-diagonal) mask + softmax
    s = jax.lax.dot_general(q_e.astype(bf16), k_e.astype(bf16),
                            (((1,), (1,)), ((), ())),
                            preferred_element_type=f32)    # (H*S, H*S)
    s = s + mask_sc[...].astype(f32)
    s = s - jnp.max(s, axis=-1, keepdims=True)
    p = jnp.exp(s)
    p = p * pl.reciprocal(jnp.sum(p, axis=-1, keepdims=True), approx=True)

    # one big P @ V matmul, then collapse heads back to (S, D) via E^T
    o_e = jnp.dot(p.astype(bf16), v_e.astype(bf16),
                  preferred_element_type=f32)              # (H*S, D)
    attn = jax.lax.dot_general(E_f, o_e, (((0,), (0,)), ((), ())),
                               preferred_element_type=f32)  # (S, D)
    attn = jnp.dot(attn.astype(bf16), wo_ref[0],
                   preferred_element_type=f32) + bo_ref[0]

    x = _layer_norm(x + attn, ln1w_ref[0], ln1b_ref[0])

    # feed-forward
    h1 = jnp.dot(x.astype(bf16), w1_ref[0], preferred_element_type=f32) + b1_ref[0]
    h1 = _gelu(h1, approximate_gelu)
    h2 = jnp.dot(h1.astype(bf16), w2_ref[0], preferred_element_type=f32) + b2_ref[0]
    x = _layer_norm(x + h2, ln2w_ref[0], ln2b_ref[0])

    x_sc[...] = x                                          # carry to next layer

    @pl.when(layer == n_layers - 1)
    def _finalize():
        o_ref[0] = x.astype(o_ref.dtype)


# ----------------------------------------------------------------------------
# SceneEncoder forward wrapper
# ----------------------------------------------------------------------------
def scene_encoder_forward(scene_features, input_patch_rays_plucker, layer_params,
                          *, geometric_weight, geometric_eps, use_geometry=True,
                          num_heads=NUM_HEADS, approximate_gelu=False):
    b, n_inp, n_patch, d_model = scene_features.shape
    S = n_inp * n_patch
    assert d_model % num_heads == 0
    head_dim = d_model // num_heads
    HS = num_heads * S
    L = len(layer_params)

    x = scene_features.reshape(b, S, d_model).astype(jnp.float32)
    rays = input_patch_rays_plucker.reshape(b, S, 6).astype(jnp.float32)

    # ---- per-layer parameters, stacked along a leading layer axis ----
    # Matmul weights stored bf16 (streamed per layer); biases / LN stay f32.
    def stackL(i, dtype=jnp.float32):
        return jnp.stack([p[i] for p in layer_params], axis=0).astype(dtype)

    wq = stackL(0, jnp.bfloat16); bq = stackL(1)
    wk = stackL(2, jnp.bfloat16); bk = stackL(3)
    wv = stackL(4, jnp.bfloat16); bv = stackL(5)
    # fused QKV weight / bias
    wqkv = jnp.concatenate([wq, wk, wv], axis=-1)          # (L, D, 3D) bf16
    bqkv = jnp.concatenate([bq, bk, bv], axis=-1)          # (L, 1, 3D) f32
    wo = stackL(6, jnp.bfloat16); bo = stackL(7)
    ln1w = stackL(8); ln1b = stackL(9)
    w1 = stackL(10, jnp.bfloat16); b1 = stackL(11)
    w2 = stackL(12, jnp.bfloat16); b2 = stackL(13)
    ln2w = stackL(14); ln2b = stackL(15)

    # ---- batch-invariant constants (hoisted out of the kernel) ----
    seq_of_row = jnp.arange(HS, dtype=jnp.int32) // num_heads
    head_of_row = jnp.arange(HS, dtype=jnp.int32) % num_heads
    # E[r, s] = 1 iff r // H == s  (row r = seq r//H, head r%H): replicates each
    # sequence row H times == torch.repeat_interleave over heads.
    E_f = (seq_of_row[:, None] ==
           jnp.arange(S, dtype=jnp.int32)[None, :]).astype(jnp.float32)      # (HS, S)
    # hm[r, c] = 1 iff column c belongs to head (r % H)
    hm = ((jnp.arange(d_model, dtype=jnp.int32)[None, :] // head_dim) ==
          head_of_row[:, None]).astype(jnp.float32)                          # (HS, D)
    # additive skeleton: 0 on same-head blocks, NEG_INF elsewhere
    same_head = head_of_row[:, None] == head_of_row[None, :]
    neg_base = jnp.where(same_head, 0.0, NEG_INF).astype(jnp.float32)        # (HS, HS)

    # ---- BlockSpecs ----
    def batch_spec(shape):
        nz = len(shape) - 1
        return pl.BlockSpec((1,) + tuple(shape[1:]),
                            lambda bb, ll, _n=nz: (bb,) + (0,) * _n)

    def layer_spec(shape):
        nz = len(shape) - 1
        return pl.BlockSpec((1,) + tuple(shape[1:]),
                            lambda bb, ll, _n=nz: (ll,) + (0,) * _n)

    def const_spec(shape):
        nd = len(shape)
        return pl.BlockSpec(tuple(shape), lambda bb, ll, _n=nd: (0,) * _n)

    # ---- VMEM budget estimate (double-buffered blocks + constants + scratch) ----
    def nbytes(a):
        return int(a.size) * a.dtype.itemsize

    per_layer_bytes = sum(nbytes(a) // L for a in
                          (wqkv, wo, w1, w2, bqkv, bo, b1, b2,
                           ln1w, ln1b, ln2w, ln2b))
    per_batch_bytes = nbytes(x) // b + nbytes(rays) // b + S * d_model * 4
    const_bytes = nbytes(E_f) + nbytes(hm) + nbytes(neg_base)
    scratch_bytes = S * d_model * 4 + HS * HS * 2
    vmem_est = 2 * (per_layer_bytes + per_batch_bytes + const_bytes) + scratch_bytes
    vmem_limit = int(min(max(4 * vmem_est, 16 * 1024 * 1024), 40 * 1024 * 1024))

    kernel = functools.partial(
        _scene_encoder_kernel,
        head_dim=head_dim,
        geo_eps=float(geometric_eps),
        neg_w2=float(-(geometric_weight ** 2)),
        use_geometry=bool(use_geometry),
        approximate_gelu=bool(approximate_gelu))

    out = pl.pallas_call(
        kernel,
        out_shape=jax.ShapeDtypeStruct((b, S, d_model), jnp.float32),
        grid=(b, L),
        in_specs=[
            batch_spec(rays.shape), batch_spec(x.shape),
            const_spec(E_f.shape), const_spec(hm.shape), const_spec(neg_base.shape),
            layer_spec(wqkv.shape), layer_spec(wo.shape),
            layer_spec(w1.shape), layer_spec(w2.shape),
            layer_spec(bqkv.shape), layer_spec(bo.shape),
            layer_spec(b1.shape), layer_spec(b2.shape),
            layer_spec(ln1w.shape), layer_spec(ln1b.shape),
            layer_spec(ln2w.shape), layer_spec(ln2b.shape),
        ],
        out_specs=batch_spec((b, S, d_model)),
        scratch_shapes=[
            pltpu.VMEM((S, d_model), jnp.float32),     # resident activation x
            pltpu.VMEM((HS, HS), jnp.bfloat16),        # per-batch attention mask
        ],
        compiler_params=pltpu.CompilerParams(
            # batch axis parallel (both v7x TensorCores); layer axis carries the
            # sequential dependency through the x scratch -> arbitrary.
            dimension_semantics=("parallel", "arbitrary"),
            vmem_limit_bytes=vmem_limit),
    )(rays, x, E_f, hm, neg_base,
      wqkv, wo, w1, w2, bqkv, bo, b1, b2, ln1w, ln1b, ln2w, ln2b)

    # PyTorch returns (n_inp*patch, b, d_model)
    return jnp.transpose(out, (1, 0, 2))


# ----------------------------------------------------------------------------
# Deterministic synthetic parameters (weights stored x @ W^T-style, pre-transposed)
# ----------------------------------------------------------------------------
def init_layer_params(key, d_model, d_ff):
    ks = jax.random.split(key, 12)
    s = 0.02
    wqT = jax.random.normal(ks[0], (d_model, d_model), jnp.float32) * s
    wkT = jax.random.normal(ks[1], (d_model, d_model), jnp.float32) * s
    wvT = jax.random.normal(ks[2], (d_model, d_model), jnp.float32) * s
    woT = jax.random.normal(ks[3], (d_model, d_model), jnp.float32) * s
    bq = jax.random.normal(ks[4], (1, d_model), jnp.float32) * s
    bk = jax.random.normal(ks[5], (1, d_model), jnp.float32) * s
    bv = jax.random.normal(ks[6], (1, d_model), jnp.float32) * s
    bo = jax.random.normal(ks[7], (1, d_model), jnp.float32) * s
    w1T = jax.random.normal(ks[8], (d_model, d_ff), jnp.float32) * s
    b1 = jax.random.normal(ks[9], (1, d_ff), jnp.float32) * s
    w2T = jax.random.normal(ks[10], (d_ff, d_model), jnp.float32) * s
    b2 = jax.random.normal(ks[11], (1, d_model), jnp.float32) * s
    ln1w = jnp.ones((1, d_model), jnp.float32)
    ln1b = jnp.zeros((1, d_model), jnp.float32)
    ln2w = jnp.ones((1, d_model), jnp.float32)
    ln2b = jnp.zeros((1, d_model), jnp.float32)
    return (wqT, bq, wkT, bk, wvT, bv, woT, bo,
            ln1w, ln1b, w1T, b1, w2T, b2, ln2w, ln2b)


if __name__ == "__main__":
    B, N_INP, PATCH = 2, 2, 4
    D_MODEL = 48                      # cfg.transformer_dim (divisible by 12 heads)
    NUM_LAYERS = 2                    # cfg.num_encoder_layers
    GEO_WEIGHT = 0.5                  # cfg.geometric_weight_init_value = [0.5]
    GEO_EPS = 1e-6                    # cfg.geometric_distance_eps

    key = jax.random.PRNGKey(0)
    kf, kd, ko, kp = jax.random.split(key, 4)

    scene_features = jax.random.normal(kf, (B, N_INP, PATCH, D_MODEL), jnp.float32)

    # Pluecker rays: unit direction + moment = origin x direction
    dirs = jax.random.normal(kd, (B, N_INP, PATCH, 3), jnp.float32)
    dirs = dirs / jnp.linalg.norm(dirs, axis=-1, keepdims=True)
    origins = jax.random.normal(ko, (B, N_INP, PATCH, 3), jnp.float32)
    moments = jnp.cross(origins, dirs)
    rays = jnp.concatenate([dirs, moments], axis=-1)          # (B, N_INP, PATCH, 6)

    layer_params = [init_layer_params(k, D_MODEL, DIM_FEEDFORWARD)
                    for k in jax.random.split(kp, NUM_LAYERS)]

    out = scene_encoder_forward(scene_features, rays, layer_params,
                                geometric_weight=GEO_WEIGHT,
                                geometric_eps=GEO_EPS,
                                use_geometry=True)
    out = jax.block_until_ready(out)
    assert out.shape == (N_INP * PATCH, B, D_MODEL), out.shape
    assert bool(jnp.all(jnp.isfinite(out)))
    print("KERNEL_OK")
</pallas_src>

<mosaic_0001>
module attributes {stable_mosaic.version = 11 : i64} {
  func.func @_scene_encoder_kernel(%arg0: i32, %arg1: i32, %arg2: memref<1x8x6xf32, #tpu.memory_space<vmem>>, %arg3: memref<1x8x48xf32, #tpu.memory_space<vmem>>, %arg4: memref<96x8xf32, #tpu.memory_space<vmem>>, %arg5: memref<96x48xf32, #tpu.memory_space<vmem>>, %arg6: memref<96x96xf32, #tpu.memory_space<vmem>>, %arg7: memref<1x48x144xbf16, #tpu.memory_space<vmem>>, %arg8: memref<1x48x48xbf16, #tpu.memory_space<vmem>>, %arg9: memref<1x48x2048xbf16, #tpu.memory_space<vmem>>, %arg10: memref<1x2048x48xbf16, #tpu.memory_space<vmem>>, %arg11: memref<1x1x144xf32, #tpu.memory_space<vmem>>, %arg12: memref<1x1x48xf32, #tpu.memory_space<vmem>>, %arg13: memref<1x1x2048xf32, #tpu.memory_space<vmem>>, %arg14: memref<1x1x48xf32, #tpu.memory_space<vmem>>, %arg15: memref<1x1x48xf32, #tpu.memory_space<vmem>>, %arg16: memref<1x1x48xf32, #tpu.memory_space<vmem>>, %arg17: memref<1x1x48xf32, #tpu.memory_space<vmem>>, %arg18: memref<1x1x48xf32, #tpu.memory_space<vmem>>, %arg19: memref<1x8x48xf32, #tpu.memory_space<vmem>>, %arg20: memref<8x48xf32, #tpu.memory_space<vmem>>, %arg21: memref<96x96xbf16, #tpu.memory_space<vmem>>) attributes {dimension_semantics = [#tpu.dimension_semantics<parallel>, #tpu.dimension_semantics<arbitrary>], iteration_bounds = array<i64: 2, 2>, scalar_prefetch = 0 : i64, scratch_operands = 2 : i64, tpu.core_type = #tpu.core_type<tc>, window_params = [{transform_indices = @transform_0, window_bounds = array<i64: 1, 8, 6>}, {transform_indices = @transform_1, window_bounds = array<i64: 1, 8, 48>}, {pipeline_mode = #tpu.pipeline_mode<synchronous>, transform_indices = @transform_2, window_bounds = array<i64: 96, 8>}, {pipeline_mode = #tpu.pipeline_mode<synchronous>, transform_indices = @transform_3, window_bounds = array<i64: 96, 48>}, {pipeline_mode = #tpu.pipeline_mode<synchronous>, transform_indices = @transform_4, window_bounds = array<i64: 96, 96>}, {transform_indices = @transform_5, window_bounds = array<i64: 1, 48, 144>}, {transform_indices = @transform_6, window_bounds = array<i64: 1, 48, 48>}, {transform_indices = @transform_7, window_bounds = array<i64: 1, 48, 2048>}, {transform_indices = @transform_8, window_bounds = array<i64: 1, 2048, 48>}, {transform_indices = @transform_9, window_bounds = array<i64: 1, 1, 144>}, {transform_indices = @transform_10, window_bounds = array<i64: 1, 1, 48>}, {transform_indices = @transform_11, window_bounds = array<i64: 1, 1, 2048>}, {transform_indices = @transform_12, window_bounds = array<i64: 1, 1, 48>}, {transform_indices = @transform_13, window_bounds = array<i64: 1, 1, 48>}, {transform_indices = @transform_14, window_bounds = array<i64: 1, 1, 48>}, {transform_indices = @transform_15, window_bounds = array<i64: 1, 1, 48>}, {transform_indices = @transform_16, window_bounds = array<i64: 1, 1, 48>}, {transform_indices = @transform_17, window_bounds = array<i64: 1, 8, 48>}]} {
    %c0 = arith.constant 0 : index
    %c0_0 = arith.constant 0 : index
    %0 = vector.load %arg4[%c0, %c0_0] : memref<96x8xf32, #tpu.memory_space<vmem>>, vector<96x8xf32>
    %c0_1 = arith.constant 0 : index
    %c0_2 = arith.constant 0 : index
    %1 = vector.load %arg5[%c0_1, %c0_2] : memref<96x48xf32, #tpu.memory_space<vmem>>, vector<96x48xf32>
    %c0_i32 = arith.constant 0 : i32
    %2 = arith.cmpi eq, %arg1, %c0_i32 : i32
    %3 = arith.extui %2 : i1 to i32
    %c0_i32_3 = arith.constant 0 : i32
    %4 = arith.cmpi ne, %3, %c0_i32_3 : i32
    scf.if %4 {
      %c0_72 = arith.constant 0 : index
      %c0_73 = arith.constant 0 : index
      %c0_74 = arith.constant 0 : index
      %138 = vector.load %arg3[%c0_72, %c0_73, %c0_74] : memref<1x8x48xf32, #tpu.memory_space<vmem>>, vector<1x8x48xf32>
      %139 = vector.shape_cast %138 : vector<1x8x48xf32> to vector<8x48xf32>
      %c0_75 = arith.constant 0 : index
      %c0_76 = arith.constant 0 : index
      %140 = vector.load %arg20[%c0_75, %c0_76] : memref<8x48xf32, #tpu.memory_space<vmem>>, vector<8x48xf32>
      tpu.vector_store %arg20[%c0_75, %c0_76], %139 {strides = array<i32>} : memref<8x48xf32, #tpu.memory_space<vmem>>, vector<8x48xf32>,
      %c0_77 = arith.constant 0 : index
      %c0_78 = arith.constant 0 : index
      %c0_79 = arith.constant 0 : index
      %141 = vector.load %arg2[%c0_77, %c0_78, %c0_79] : memref<1x8x6xf32, #tpu.memory_space<vmem>>, vector<1x8x6xf32>
      %142 = vector.shape_cast %141 : vector<1x8x6xf32> to vector<8x6xf32>
      %143 = vector.extract_strided_slice %142 {offsets = [0, 0], sizes = [8, 3], strides = [1, 1]} : vector<8x6xf32> to vector<8x3xf32>
      %144 = vector.extract_strided_slice %142 {offsets = [0, 3], sizes = [8, 3], strides = [1, 1]} : vector<8x6xf32> to vector<8x3xf32>
      %cst_80 = arith.constant dense<0.000000e+00> : vector<8x8xf32>
      %145 = tpu.matmul %143, %143, %cst_80 {dimension_numbers = #tpu.dot_dimension_numbers<[1], [1], [0], [0], [0, 0, 1, 0], [], []>} : vector<8x3xf32>, vector<8x3xf32>, vector<8x8xf32> -> vector<8x8xf32>
      %cst_81 = arith.constant dense<0.000000e+00> : vector<8x8xf32>
      %146 = tpu.matmul %143, %144, %cst_81 {dimension_numbers = #tpu.dot_dimension_numbers<[1], [1], [0], [0], [0, 0, 1, 0], [], []>} : vector<8x3xf32>, vector<8x3xf32>, vector<8x8xf32> -> vector<8x8xf32>
      %cst_82 = arith.constant dense<0.000000e+00> : vector<8x8xf32>
      %147 = tpu.matmul %144, %143, %cst_82 {dimension_numbers = #tpu.dot_dimension_numbers<[1], [1], [0], [0], [0, 0, 1, 0], [], []>} : vector<8x3xf32>, vector<8x3xf32>, vector<8x8xf32> -> vector<8x8xf32>
      %cst_83 = arith.constant dense<0.000000e+00> : vector<8x8xf32>
      %148 = tpu.matmul %144, %144, %cst_83 {dimension_numbers = #tpu.dot_dimension_numbers<[1], [1], [0], [0], [0, 0, 1, 0], [], []>} : vector<8x3xf32>, vector<8x3xf32>, vector<8x8xf32> -> vector<8x8xf32>
      %149 = arith.mulf %143, %143 : vector<8x3xf32>
      %cst_84 = arith.constant dense<0.000000e+00> : vector<8xf32>
      %150 = vector.multi_reduction <add>, %149, %cst_84 [1] : vector<8x3xf32> to vector<8xf32>
      %151 = vector.shape_cast %150 : vector<8xf32> to vector<8x1xf32>
      %152 = arith.mulf %144, %144 : vector<8x3xf32>
      %cst_85 = arith.constant dense<0.000000e+00> : vector<8xf32>
      %153 = vector.multi_reduction <add>, %152, %cst_85 [1] : vector<8x3xf32> to vector<8xf32>
      %154 = vector.shape_cast %153 : vector<8xf32> to vector<8x1xf32>
      %155 = arith.mulf %143, %144 : vector<8x3xf32>
      %cst_86 = arith.constant dense<0.000000e+00> : vector<8xf32>
      %156 = vector.multi_reduction <add>, %155, %cst_86 [1] : vector<8x3xf32> to vector<8xf32>
      %157 = vector.shape_cast %156 : vector<8xf32> to vector<8x1xf32>
      %cst_87 = arith.constant 1.000000e+00 : f32
      %158 = vector.broadcast %cst_87 : f32 to vector<8x1xf32>
      %cst_88 = arith.constant dense<0.000000e+00> : vector<8x8xf32>
      %159 = tpu.matmul %151, %151, %cst_88 {dimension_numbers = #tpu.dot_dimension_numbers<[1], [1], [0], [0], [0, 0, 1, 0], [], []>} : vector<8x1xf32>, vector<8x1xf32>, vector<8x8xf32> -> vector<8x8xf32>
      %160 = arith.mulf %145, %145 : vector<8x8xf32>
      %161 = arith.subf %159, %160 : vector<8x8xf32>
      %cst_89 = arith.constant 0.000000e+00 : f32
      %162 = vector.broadcast %cst_89 : f32 to vector<8x8xf32>
      %163 = arith.maximumf %161, %162 : vector<8x8xf32>
      %164 = math.sqrt %163 : vector<8x8xf32>
      %165 = arith.addf %146, %147 : vector<8x8xf32>
      %166 = math.absf %165 : vector<8x8xf32>
      %cst_90 = arith.constant 9.99999997E-7 : f32
      %167 = vector.broadcast %cst_90 : f32 to vector<8x8xf32>
      %168 = arith.addf %164, %167 : vector<8x8xf32>
      %169 = arith.divf %166, %168 : vector<8x8xf32>
      %cst_91 = arith.constant dense<0.000000e+00> : vector<8x8xf32>
      %170 = tpu.matmul %158, %154, %cst_91 {dimension_numbers = #tpu.dot_dimension_numbers<[1], [1], [0], [0], [0, 0, 1, 0], [], []>} : vector<8x1xf32>, vector<8x1xf32>, vector<8x8xf32> -> vector<8x8xf32>
      %171 = vector.broadcast %154 : vector<8x1xf32> to vector<8x8xf32>
      %172 = arith.addf %171, %170 : vector<8x8xf32>
      %cst_92 = arith.constant 2.000000e+00 : f32
      %173 = vector.broadcast %cst_92 : f32 to vector<8x8xf32>
      %174 = arith.mulf %173, %148 : vector<8x8xf32>
      %175 = arith.subf %172, %174 : vector<8x8xf32>
      %176 = vector.broadcast %157 : vector<8x1xf32> to vector<8x8xf32>
      %177 = arith.subf %176, %146 : vector<8x8xf32>
      %178 = vector.broadcast %151 : vector<8x1xf32> to vector<8x8xf32>
      %179 = arith.mulf %178, %175 : vector<8x8xf32>
      %180 = arith.mulf %177, %177 : vector<8x8xf32>
      %181 = arith.subf %179, %180 : vector<8x8xf32>
      %cst_93 = arith.constant 0.000000e+00 : f32
      %182 = vector.broadcast %cst_93 : f32 to vector<8x8xf32>
      %183 = arith.maximumf %181, %182 : vector<8x8xf32>
      %184 = math.sqrt %183 : vector<8x8xf32>
      %cst_94 = arith.constant 9.99999997E-7 : f32
      %185 = vector.broadcast %cst_94 : f32 to vector<8x1xf32>
      %186 = arith.addf %151, %185 : vector<8x1xf32>
      %187 = vector.broadcast %186 : vector<8x1xf32> to vector<8x8xf32>
      %188 = arith.divf %184, %187 : vector<8x8xf32>
      %cst_95 = arith.constant 9.99999997E-7 : f32
      %189 = vector.broadcast %cst_95 : f32 to vector<8x8xf32>
      %190 = arith.cmpf olt, %164, %189 : vector<8x8xf32>
      %191 = arith.select %190, %188, %169 : vector<8x8xi1>, vector<8x8xf32>
      %cst_96 = arith.constant -2.500000e-01 : f32
      %192 = vector.broadcast %cst_96 : f32 to vector<8x8xf32>
      %193 = arith.mulf %192, %191 : vector<8x8xf32>
      %cst_97 = arith.constant dense<0.000000e+00> : vector<96x8xf32>
      %194 = tpu.matmul %0, %193, %cst_97 {dimension_numbers = #tpu.dot_dimension_numbers<[1], [0], [0], [1], [0, 0, 1, 1], [], []>} : vector<96x8xf32>, vector<8x8xf32>, vector<96x8xf32> -> vector<96x8xf32>
      %cst_98 = arith.constant dense<0.000000e+00> : vector<96x96xf32>
      %195 = tpu.matmul %194, %0, %cst_98 {dimension_numbers = #tpu.dot_dimension_numbers<[1], [1], [0], [0], [0, 0, 1, 0], [], []>} : vector<96x8xf32>, vector<96x8xf32>, vector<96x96xf32> -> vector<96x96xf32>
      %c0_99 = arith.constant 0 : index
      %c0_100 = arith.constant 0 : index
      %196 = vector.load %arg6[%c0_99, %c0_100] : memref<96x96xf32, #tpu.memory_space<vmem>>, vector<96x96xf32>
      %197 = arith.addf %196, %195 : vector<96x96xf32>
      %198 = arith.truncf %197 : vector<96x96xf32> to vector<96x96xbf16>
      %c0_101 = arith.constant 0 : index
      %c0_102 = arith.constant 0 : index
      %199 = vector.load %arg21[%c0_101, %c0_102] : memref<96x96xbf16, #tpu.memory_space<vmem>>, vector<96x96xbf16>
      tpu.vector_store %arg21[%c0_101, %c0_102], %198 {strides = array<i32>} : memref<96x96xbf16, #tpu.memory_space<vmem>>, vector<96x96xbf16>,
    } else {
    }
    %c0_4 = arith.constant 0 : index
    %c0_5 = arith.constant 0 : index
    %5 = vector.load %arg20[%c0_4, %c0_5] : memref<8x48xf32, #tpu.memory_space<vmem>>, vector<8x48xf32>
    %6 = arith.truncf %5 : vector<8x48xf32> to vector<8x48xbf16>
    %c0_6 = arith.constant 0 : index
    %c0_7 = arith.constant 0 : index
    %c0_8 = arith.constant 0 : index
    %7 = vector.load %arg7[%c0_6, %c0_7, %c0_8] : memref<1x48x144xbf16, #tpu.memory_space<vmem>>, vector<1x48x144xbf16>
    %8 = vector.shape_cast %7 : vector<1x48x144xbf16> to vector<48x144xbf16>
    %cst = arith.constant dense<0.000000e+00> : vector<8x144xf32>
    %9 = tpu.matmul %6, %8, %cst {dimension_numbers = #tpu.dot_dimension_numbers<[1], [0], [0], [1], [0, 0, 1, 1], [], []>} : vector<8x48xbf16>, vector<48x144xbf16>, vector<8x144xf32> -> vector<8x144xf32>
    %c0_9 = arith.constant 0 : index
    %c0_10 = arith.constant 0 : index
    %c0_11 = arith.constant 0 : index
    %10 = vector.load %arg11[%c0_9, %c0_10, %c0_11] : memref<1x1x144xf32, #tpu.memory_space<vmem>>, vector<1x1x144xf32>
    %11 = vector.shape_cast %10 : vector<1x1x144xf32> to vector<1x144xf32>
    %12 = vector.broadcast %11 : vector<1x144xf32> to vector<8x144xf32>
    %13 = arith.addf %9, %12 : vector<8x144xf32>
    %14 = vector.extract_strided_slice %13 {offsets = [0, 0], sizes = [8, 48], strides = [1, 1]} : vector<8x144xf32> to vector<8x48xf32>
    %cst_12 = arith.constant 5.000000e-01 : f32
    %15 = vector.broadcast %cst_12 : f32 to vector<8x48xf32>
    %16 = arith.mulf %14, %15 : vector<8x48xf32>
    %17 = vector.extract_strided_slice %13 {offsets = [0, 48], sizes = [8, 48], strides = [1, 1]} : vector<8x144xf32> to vector<8x48xf32>
    %18 = vector.extract_strided_slice %13 {offsets = [0, 96], sizes = [8, 48], strides = [1, 1]} : vector<8x144xf32> to vector<8x48xf32>
    %cst_13 = arith.constant dense<0.000000e+00> : vector<96x48xf32>
    %19 = tpu.matmul %0, %16, %cst_13 {dimension_numbers = #tpu.dot_dimension_numbers<[1], [0], [0], [1], [0, 0, 1, 1], [], []>} : vector<96x8xf32>, vector<8x48xf32>, vector<96x48xf32> -> vector<96x48xf32>
    %20 = arith.mulf %19, %1 : vector<96x48xf32>
    %cst_14 = arith.constant dense<0.000000e+00> : vector<96x48xf32>
    %21 = tpu.matmul %0, %17, %cst_14 {dimension_numbers = #tpu.dot_dimension_numbers<[1], [0], [0], [1], [0, 0, 1, 1], [], []>} : vector<96x8xf32>, vector<8x48xf32>, vector<96x48xf32> -> vector<96x48xf32>
    %cst_15 = arith.constant dense<0.000000e+00> : vector<96x48xf32>
    %22 = tpu.matmul %0, %18, %cst_15 {dimension_numbers = #tpu.dot_dimension_numbers<[1], [0], [0], [1], [0, 0, 1, 1], [], []>} : vector<96x8xf32>, vector<8x48xf32>, vector<96x48xf32> -> vector<96x48xf32>
    %23 = arith.mulf %22, %1 : vector<96x48xf32>
    %24 = arith.truncf %20 : vector<96x48xf32> to vector<96x48xbf16>
    %25 = arith.truncf %21 : vector<96x48xf32> to vector<96x48xbf16>
    %cst_16 = arith.constant dense<0.000000e+00> : vector<96x96xf32>
    %26 = tpu.matmul %24, %25, %cst_16 {dimension_numbers = #tpu.dot_dimension_numbers<[1], [1], [0], [0], [0, 0, 1, 0], [], []>} : vector<96x48xbf16>, vector<96x48xbf16>, vector<96x96xf32> -> vector<96x96xf32>
    %c0_17 = arith.constant 0 : index
    %c0_18 = arith.constant 0 : index
    %27 = vector.load %arg21[%c0_17, %c0_18] : memref<96x96xbf16, #tpu.memory_space<vmem>>, vector<96x96xbf16>
    %28 = arith.extf %27 : vector<96x96xbf16> to vector<96x96xf32>
    %29 = arith.addf %26, %28 : vector<96x96xf32>
    %cst_19 = arith.constant dense<0xFF800000> : vector<96xf32>
    %30 = vector.multi_reduction <maximumf>, %29, %cst_19 [1] : vector<96x96xf32> to vector<96xf32>
    %31 = vector.shape_cast %30 : vector<96xf32> to vector<96x1xf32>
    %32 = vector.broadcast %31 : vector<96x1xf32> to vector<96x96xf32>
    %33 = arith.subf %29, %32 : vector<96x96xf32>
    %34 = math.exp %33 : vector<96x96xf32>
    %cst_20 = arith.constant dense<0.000000e+00> : vector<96xf32>
    %35 = vector.multi_reduction <add>, %34, %cst_20 [1] : vector<96x96xf32> to vector<96xf32>
    %36 = vector.shape_cast %35 : vector<96xf32> to vector<96x1xf32>
    %37 = tpu.reciprocal %36 {approx = true} : vector<96x1xf32> -> vector<96x1xf32>
    %38 = vector.broadcast %37 : vector<96x1xf32> to vector<96x96xf32>
    %39 = arith.mulf %34, %38 : vector<96x96xf32>
    %40 = arith.truncf %39 : vector<96x96xf32> to vector<96x96xbf16>
    %41 = arith.truncf %23 : vector<96x48xf32> to vector<96x48xbf16>
    %cst_21 = arith.constant dense<0.000000e+00> : vector<96x48xf32>
    %42 = tpu.matmul %40, %41, %cst_21 {dimension_numbers = #tpu.dot_dimension_numbers<[1], [0], [0], [1], [0, 0, 1, 1], [], []>} : vector<96x96xbf16>, vector<96x48xbf16>, vector<96x48xf32> -> vector<96x48xf32>
    %cst_22 = arith.constant dense<0.000000e+00> : vector<8x48xf32>
    %43 = tpu.matmul %0, %42, %cst_22 {dimension_numbers = #tpu.dot_dimension_numbers<[0], [0], [1], [1], [0, 1, 1, 1], [], []>} : vector<96x8xf32>, vector<96x48xf32>, vector<8x48xf32> -> vector<8x48xf32>
    %44 = arith.truncf %43 : vector<8x48xf32> to vector<8x48xbf16>
    %c0_23 = arith.constant 0 : index
    %c0_24 = arith.constant 0 : index
    %c0_25 = arith.constant 0 : index
    %45 = vector.load %arg8[%c0_23, %c0_24, %c0_25] : memref<1x48x48xbf16, #tpu.memory_space<vmem>>, vector<1x48x48xbf16>
    %46 = vector.shape_cast %45 : vector<1x48x48xbf16> to vector<48x48xbf16>
    %cst_26 = arith.constant dense<0.000000e+00> : vector<8x48xf32>
    %47 = tpu.matmul %44, %46, %cst_26 {dimension_numbers = #tpu.dot_dimension_numbers<[1], [0], [0], [1], [0, 0, 1, 1], [], []>} : vector<8x48xbf16>, vector<48x48xbf16>, vector<8x48xf32> -> vector<8x48xf32>
    %c0_27 = arith.constant 0 : index
    %c0_28 = arith.constant 0 : index
    %c0_29 = arith.constant 0 : index
    %48 = vector.load %arg12[%c0_27, %c0_28, %c0_29] : memref<1x1x48xf32, #tpu.memory_space<vmem>>, vector<1x1x48xf32>
    %49 = vector.shape_cast %48 : vector<1x1x48xf32> to vector<1x48xf32>
    %50 = vector.broadcast %49 : vector<1x48xf32> to vector<8x48xf32>
    %51 = arith.addf %47, %50 : vector<8x48xf32>
    %52 = arith.addf %5, %51 : vector<8x48xf32>
    %c0_30 = arith.constant 0 : index
    %c0_31 = arith.constant 0 : index
    %c0_32 = arith.constant 0 : index
    %53 = vector.load %arg15[%c0_30, %c0_31, %c0_32] : memref<1x1x48xf32, #tpu.memory_space<vmem>>, vector<1x1x48xf32>
    %54 = vector.shape_cast %53 : vector<1x1x48xf32> to vector<1x48xf32>
    %c0_33 = arith.constant 0 : index
    %c0_34 = arith.constant 0 : index
    %c0_35 = arith.constant 0 : index
    %55 = vector.load %arg16[%c0_33, %c0_34, %c0_35] : memref<1x1x48xf32, #tpu.memory_space<vmem>>, vector<1x1x48xf32>
    %56 = vector.shape_cast %55 : vector<1x1x48xf32> to vector<1x48xf32>
    %cst_36 = arith.constant dense<0.000000e+00> : vector<8xf32>
    %57 = vector.multi_reduction <add>, %52, %cst_36 [1] : vector<8x48xf32> to vector<8xf32>
    %58 = vector.shape_cast %57 : vector<8xf32> to vector<8x1xf32>
    %cst_37 = arith.constant 4.800000e+01 : f32
    %59 = vector.broadcast %cst_37 : f32 to vector<8x1xf32>
    %60 = arith.divf %58, %59 : vector<8x1xf32>
    %61 = vector.broadcast %60 : vector<8x1xf32> to vector<8x48xf32>
    %62 = arith.subf %52, %61 : vector<8x48xf32>
    %63 = vector.broadcast %60 : vector<8x1xf32> to vector<8x48xf32>
    %64 = arith.subf %52, %63 : vector<8x48xf32>
    %65 = arith.mulf %62, %64 : vector<8x48xf32>
    %cst_38 = arith.constant dense<0.000000e+00> : vector<8xf32>
    %66 = vector.multi_reduction <add>, %65, %cst_38 [1] : vector<8x48xf32> to vector<8xf32>
    %67 = vector.shape_cast %66 : vector<8xf32> to vector<8x1xf32>
    %cst_39 = arith.constant 4.800000e+01 : f32
    %68 = vector.broadcast %cst_39 : f32 to vector<8x1xf32>
    %69 = arith.divf %67, %68 : vector<8x1xf32>
    %70 = vector.broadcast %60 : vector<8x1xf32> to vector<8x48xf32>
    %71 = arith.subf %52, %70 : vector<8x48xf32>
    %cst_40 = arith.constant 9.99999974E-6 : f32
    %72 = vector.broadcast %cst_40 : f32 to vector<8x1xf32>
    %73 = arith.addf %69, %72 : vector<8x1xf32>
    %74 = math.rsqrt %73 : vector<8x1xf32>
    %75 = vector.broadcast %74 : vector<8x1xf32> to vector<8x48xf32>
    %76 = arith.mulf %71, %75 : vector<8x48xf32>
    %77 = vector.broadcast %54 : vector<1x48xf32> to vector<8x48xf32>
    %78 = arith.mulf %76, %77 : vector<8x48xf32>
    %79 = vector.broadcast %56 : vector<1x48xf32> to vector<8x48xf32>
    %80 = arith.addf %78, %79 : vector<8x48xf32>
    %81 = arith.truncf %80 : vector<8x48xf32> to vector<8x48xbf16>
    %c0_41 = arith.constant 0 : index
    %c0_42 = arith.constant 0 : index
    %c0_43 = arith.constant 0 : index
    %82 = vector.load %arg9[%c0_41, %c0_42, %c0_43] : memref<1x48x2048xbf16, #tpu.memory_space<vmem>>, vector<1x48x2048xbf16>
    %83 = vector.shape_cast %82 : vector<1x48x2048xbf16> to vector<48x2048xbf16>
    %cst_44 = arith.constant dense<0.000000e+00> : vector<8x2048xf32>
    %84 = tpu.matmul %81, %83, %cst_44 {dimension_numbers = #tpu.dot_dimension_numbers<[1], [0], [0], [1], [0, 0, 1, 1], [], []>} : vector<8x48xbf16>, vector<48x2048xbf16>, vector<8x2048xf32> -> vector<8x2048xf32>
    %c0_45 = arith.constant 0 : index
    %c0_46 = arith.constant 0 : index
    %c0_47 = arith.constant 0 : index
    %85 = vector.load %arg13[%c0_45, %c0_46, %c0_47] : memref<1x1x2048xf32, #tpu.memory_space<vmem>>, vector<1x1x2048xf32>
    %86 = vector.shape_cast %85 : vector<1x1x2048xf32> to vector<1x2048xf32>
    %87 = vector.broadcast %86 : vector<1x2048xf32> to vector<8x2048xf32>
    %88 = arith.addf %84, %87 : vector<8x2048xf32>
    %cst_48 = arith.constant 5.000000e-01 : f32
    %89 = vector.broadcast %cst_48 : f32 to vector<8x2048xf32>
    %90 = arith.mulf %89, %88 : vector<8x2048xf32>
    %cst_49 = arith.constant 0.707106769 : f32
    %91 = vector.broadcast %cst_49 : f32 to vector<8x2048xf32>
    %92 = arith.mulf %88, %91 : vector<8x2048xf32>
    %93 = math.erf %92 : vector<8x2048xf32>
    %cst_50 = arith.constant 1.000000e+00 : f32
    %94 = vector.broadcast %cst_50 : f32 to vector<8x2048xf32>
    %95 = arith.addf %94, %93 : vector<8x2048xf32>
    %96 = arith.mulf %90, %95 : vector<8x2048xf32>
    %97 = arith.truncf %96 : vector<8x2048xf32> to vector<8x2048xbf16>
    %c0_51 = arith.constant 0 : index
    %c0_52 = arith.constant 0 : index
    %c0_53 = arith.constant 0 : index
    %98 = vector.load %arg10[%c0_51, %c0_52, %c0_53] : memref<1x2048x48xbf16, #tpu.memory_space<vmem>>, vector<1x2048x48xbf16>
    %99 = vector.shape_cast %98 : vector<1x2048x48xbf16> to vector<2048x48xbf16>
    %cst_54 = arith.constant dense<0.000000e+00> : vector<8x48xf32>
    %100 = tpu.matmul %97, %99, %cst_54 {dimension_numbers = #tpu.dot_dimension_numbers<[1], [0], [0], [1], [0, 0, 1, 1], [], []>} : vector<8x2048xbf16>, vector<2048x48xbf16>, vector<8x48xf32> -> vector<8x48xf32>
    %c0_55 = arith.constant 0 : index
    %c0_56 = arith.constant 0 : index
    %c0_57 = arith.constant 0 : index
    %101 = vector.load %arg14[%c0_55, %c0_56, %c0_57] : memref<1x1x48xf32, #tpu.memory_space<vmem>>, vector<1x1x48xf32>
    %102 = vector.shape_cast %101 : vector<1x1x48xf32> to vector<1x48xf32>
    %103 = vector.broadcast %102 : vector<1x48xf32> to vector<8x48xf32>
    %104 = arith.addf %100, %103 : vector<8x48xf32>
    %105 = arith.addf %80, %104 : vector<8x48xf32>
    %c0_58 = arith.constant 0 : index
    %c0_59 = arith.constant 0 : index
    %c0_60 = arith.constant 0 : index
    %106 = vector.load %arg17[%c0_58, %c0_59, %c0_60] : memref<1x1x48xf32, #tpu.memory_space<vmem>>, vector<1x1x48xf32>
    %107 = vector.shape_cast %106 : vector<1x1x48xf32> to vector<1x48xf32>
    %c0_61 = arith.constant 0 : index
    %c0_62 = arith.constant 0 : index
    %c0_63 = arith.constant 0 : index
    %108 = vector.load %arg18[%c0_61, %c0_62, %c0_63] : memref<1x1x48xf32, #tpu.memory_space<vmem>>, vector<1x1x48xf32>
    %109 = vector.shape_cast %108 : vector<1x1x48xf32> to vector<1x48xf32>
    %cst_64 = arith.constant dense<0.000000e+00> : vector<8xf32>
    %110 = vector.multi_reduction <add>, %105, %cst_64 [1] : vector<8x48xf32> to vector<8xf32>
    %111 = vector.shape_cast %110 : vector<8xf32> to vector<8x1xf32>
    %cst_65 = arith.constant 4.800000e+01 : f32
    %112 = vector.broadcast %cst_65 : f32 to vector<8x1xf32>
    %113 = arith.divf %111, %112 : vector<8x1xf32>
    %114 = vector.broadcast %113 : vector<8x1xf32> to vector<8x48xf32>
    %115 = arith.subf %105, %114 : vector<8x48xf32>
    %116 = vector.broadcast %113 : vector<8x1xf32> to vector<8x48xf32>
    %117 = arith.subf %105, %116 : vector<8x48xf32>
    %118 = arith.mulf %115, %117 : vector<8x48xf32>
    %cst_66 = arith.constant dense<0.000000e+00> : vector<8xf32>
    %119 = vector.multi_reduction <add>, %118, %cst_66 [1] : vector<8x48xf32> to vector<8xf32>
    %120 = vector.shape_cast %119 : vector<8xf32> to vector<8x1xf32>
    %cst_67 = arith.constant 4.800000e+01 : f32
    %121 = vector.broadcast %cst_67 : f32 to vector<8x1xf32>
    %122 = arith.divf %120, %121 : vector<8x1xf32>
    %123 = vector.broadcast %113 : vector<8x1xf32> to vector<8x48xf32>
    %124 = arith.subf %105, %123 : vector<8x48xf32>
    %cst_68 = arith.constant 9.99999974E-6 : f32
    %125 = vector.broadcast %cst_68 : f32 to vector<8x1xf32>
    %126 = arith.addf %122, %125 : vector<8x1xf32>
    %127 = math.rsqrt %126 : vector<8x1xf32>
    %128 = vector.broadcast %127 : vector<8x1xf32> to vector<8x48xf32>
    %129 = arith.mulf %124, %128 : vector<8x48xf32>
    %130 = vector.broadcast %107 : vector<1x48xf32> to vector<8x48xf32>
    %131 = arith.mulf %129, %130 : vector<8x48xf32>
    %132 = vector.broadcast %109 : vector<1x48xf32> to vector<8x48xf32>
    %133 = arith.addf %131, %132 : vector<8x48xf32>
    %c0_69 = arith.constant 0 : index
    %c0_70 = arith.constant 0 : index
    %134 = vector.load %arg20[%c0_69, %c0_70] : memref<8x48xf32, #tpu.memory_space<vmem>>, vector<8x48xf32>
    tpu.vector_store %arg20[%c0_69, %c0_70], %133 {strides = array<i32>} : memref<8x48xf32, #tpu.memory_space<vmem>>, vector<8x48xf32>,
    %c1_i32 = arith.constant 1 : i32
    %135 = arith.cmpi eq, %arg1, %c1_i32 : i32
    %136 = arith.extui %135 : i1 to i32
    %c0_i32_71 = arith.constant 0 : i32
    %137 = arith.cmpi ne, %136, %c0_i32_71 : i32
    scf.if %137 {
      %c0_72 = arith.constant 0 : index
      %c0_73 = arith.constant 0 : index
      %c0_74 = arith.constant 0 : index
      %138 = vector.load %arg19[%c0_72, %c0_73, %c0_74] : memref<1x8x48xf32, #tpu.memory_space<vmem>>, vector<1x8x48xf32>
      %139 = vector.shape_cast %138 : vector<1x8x48xf32> to vector<8x48xf32>
      %140 = vector.shape_cast %133 : vector<8x48xf32> to vector<1x8x48xf32>
      tpu.vector_store %arg19[%c0_72, %c0_73, %c0_74], %140 {strides = array<i32>} : memref<1x8x48xf32, #tpu.memory_space<vmem>>, vector<1x8x48xf32>,
    } else {
    }
    return
  }
  func.func @transform_0(%arg0: i32, %arg1: i32) -> (i32, i32, i32) {
    %c0_i32 = arith.constant 0 : i32
    %c0_i32_0 = arith.constant 0 : i32
    %c0_i32_1 = arith.constant 0 : i32
    return %arg0, %c0_i32, %c0_i32_0 : i32, i32, i32
  }
  func.func @transform_1(%arg0: i32, %arg1: i32) -> (i32, i32, i32) {
    %c0_i32 = arith.constant 0 : i32
    %c0_i32_0 = arith.constant 0 : i32
    %c0_i32_1 = arith.constant 0 : i32
    return %arg0, %c0_i32, %c0_i32_0 : i32, i32, i32
  }
  func.func @transform_2(%arg0: i32, %arg1: i32) -> (i32, i32) {
    %c0_i32 = arith.constant 0 : i32
    %c0_i32_0 = arith.constant 0 : i32
    %c0_i32_1 = arith.constant 0 : i32
    return %c0_i32, %c0_i32_0 : i32, i32
  }
  func.func @transform_3(%arg0: i32, %arg1: i32) -> (i32, i32) {
    %c0_i32 = arith.constant 0 : i32
    %c0_i32_0 = arith.constant 0 : i32
    %c0_i32_1 = arith.constant 0 : i32
    return %c0_i32, %c0_i32_0 : i32, i32
  }
  func.func @transform_4(%arg0: i32, %arg1: i32) -> (i32, i32) {
    %c0_i32 = arith.constant 0 : i32
    %c0_i32_0 = arith.constant 0 : i32
    %c0_i32_1 = arith.constant 0 : i32
    return %c0_i32, %c0_i32_0 : i32, i32
  }
  func.func @transform_5(%arg0: i32, %arg1: i32) -> (i32, i32, i32) {
    %c0_i32 = arith.constant 0 : i32
    %c0_i32_0 = arith.constant 0 : i32
    %c0_i32_1 = arith.constant 0 : i32
    return %arg1, %c0_i32, %c0_i32_0 : i32, i32, i32
  }
  func.func @transform_6(%arg0: i32, %arg1: i32) -> (i32, i32, i32) {
    %c0_i32 = arith.constant 0 : i32
    %c0_i32_0 = arith.constant 0 : i32
    %c0_i32_1 = arith.constant 0 : i32
    return %arg1, %c0_i32, %c0_i32_0 : i32, i32, i32
  }
  func.func @transform_7(%arg0: i32, %arg1: i32) -> (i32, i32, i32) {
    %c0_i32 = arith.constant 0 : i32
    %c0_i32_0 = arith.constant 0 : i32
    %c0_i32_1 = arith.constant 0 : i32
    return %arg1, %c0_i32, %c0_i32_0 : i32, i32, i32
  }
  func.func @transform_8(%arg0: i32, %arg1: i32) -> (i32, i32, i32) {
    %c0_i32 = arith.constant 0 : i32
    %c0_i32_0 = arith.constant 0 : i32
    %c0_i32_1 = arith.constant 0 : i32
    return %arg1, %c0_i32, %c0_i32_0 : i32, i32, i32
  }
  func.func @transform_9(%arg0: i32, %arg1: i32) -> (i32, i32, i32) {
    %c0_i32 = arith.constant 0 : i32
    %c0_i32_0 = arith.constant 0 : i32
    %c0_i32_1 = arith.constant 0 : i32
    return %arg1, %c0_i32, %c0_i32_0 : i32, i32, i32
  }
  func.func @transform_10(%arg0: i32, %arg1: i32) -> (i32, i32, i32) {
    %c0_i32 = arith.constant 0 : i32
    %c0_i32_0 = arith.constant 0 : i32
    %c0_i32_1 = arith.constant 0 : i32
    return %arg1, %c0_i32, %c0_i32_0 : i32, i32, i32
  }
  func.func @transform_11(%arg0: i32, %arg1: i32) -> (i32, i32, i32) {
    %c0_i32 = arith.constant 0 : i32
    %c0_i32_0 = arith.constant 0 : i32
    %c0_i32_1 = arith.constant 0 : i32
    return %arg1, %c0_i32, %c0_i32_0 : i32, i32, i32
  }
  func.func @transform_12(%arg0: i32, %arg1: i32) -> (i32, i32, i32) {
    %c0_i32 = arith.constant 0 : i32
    %c0_i32_0 = arith.constant 0 : i32
    %c0_i32_1 = arith.constant 0 : i32
    return %arg1, %c0_i32, %c0_i32_0 : i32, i32, i32
  }
  func.func @transform_13(%arg0: i32, %arg1: i32) -> (i32, i32, i32) {
    %c0_i32 = arith.constant 0 : i32
    %c0_i32_0 = arith.constant 0 : i32
    %c0_i32_1 = arith.constant 0 : i32
    return %arg1, %c0_i32, %c0_i32_0 : i32, i32, i32
  }
  func.func @transform_14(%arg0: i32, %arg1: i32) -> (i32, i32, i32) {
    %c0_i32 = arith.constant 0 : i32
    %c0_i32_0 = arith.constant 0 : i32
    %c0_i32_1 = arith.constant 0 : i32
    return %arg1, %c0_i32, %c0_i32_0 : i32, i32, i32
  }
  func.func @transform_15(%arg0: i32, %arg1: i32) -> (i32, i32, i32) {
    %c0_i32 = arith.constant 0 : i32
    %c0_i32_0 = arith.constant 0 : i32
    %c0_i32_1 = arith.constant 0 : i32
    return %arg1, %c0_i32, %c0_i32_0 : i32, i32, i32
  }
  func.func @transform_16(%arg0: i32, %arg1: i32) -> (i32, i32, i32) {
    %c0_i32 = arith.constant 0 : i32
    %c0_i32_0 = arith.constant 0 : i32
    %c0_i32_1 = arith.constant 0 : i32
    return %arg1, %c0_i32, %c0_i32_0 : i32, i32, i32
  }
  func.func @transform_17(%arg0: i32, %arg1: i32) -> (i32, i32, i32) {
    %c0_i32 = arith.constant 0 : i32
    %c0_i32_0 = arith.constant 0 : i32
    %c0_i32_1 = arith.constant 0 : i32
    return %arg0, %c0_i32, %c0_i32_0 : i32, i32, i32
  }
}

</mosaic_0001>

<llo_original>
// kernel: tpu_custom_call.1
$region0: #{tpu_custom_call.1}
  #allocation0 [shape = 'u32[]', space=smem, size = 0x4, offset = 0x4, fixed_abs, tag = 'smem constant byte address 0x4 - core index']
  #allocation1 [shape = 'u32[144,128]{1,0:T(1,128)}', space=vmem, size = 0x12000, scoped, tag = 'internal scratch']
  #allocation2 [shape = 'f32[8,48]{1,0:T(8,128)}', space=vmem, size = 0x1000, scoped, tag = 'scratch operand']
  #allocation3 [shape = 'bf16[96,96]{1,0:T(16,128)(2,1)}', space=vmem, size = 0x6000, scoped, tag = 'scratch operand']
  %s0 = inlined_call_operand.vmem [shape: f32[2,8,6], index: 0, kind: input, shape index: {}]
  %s1 = inlined_call_operand.vmem [shape: f32[2,8,48], index: 1, kind: input, shape index: {}]
  %s2 = inlined_call_operand.vmem [shape: f32[96,8], index: 2, kind: input, shape index: {}]
  %s3 = inlined_call_operand.vmem [shape: f32[96,48], index: 3, kind: input, shape index: {}]
  %s4 = inlined_call_operand.vmem [shape: f32[96,96], index: 4, kind: input, shape index: {}]
  %s5 = inlined_call_operand.vmem [shape: bf16[2,48,144], index: 5, kind: input, shape index: {}]
  %s6 = inlined_call_operand.vmem [shape: bf16[2,48,48], index: 6, kind: input, shape index: {}]
  %s7 = inlined_call_operand.vmem [shape: bf16[2,48,2048], index: 7, kind: input, shape index: {}]
  %s8 = inlined_call_operand.vmem [shape: bf16[2,2048,48], index: 8, kind: input, shape index: {}]
  %s9 = inlined_call_operand.vmem [shape: f32[2,1,144], index: 9, kind: input, shape index: {}]
  %s10 = inlined_call_operand.vmem [shape: f32[2,1,48], index: 10, kind: input, shape index: {}]
  %s11 = inlined_call_operand.vmem [shape: f32[2,1,2048], index: 11, kind: input, shape index: {}]
  %s12 = inlined_call_operand.vmem [shape: f32[2,1,48], index: 12, kind: input, shape index: {}]
  %s13 = inlined_call_operand.vmem [shape: f32[2,1,48], index: 13, kind: input, shape index: {}]
  %s14 = inlined_call_operand.vmem [shape: f32[2,1,48], index: 14, kind: input, shape index: {}]
  %s15 = inlined_call_operand.vmem [shape: f32[2,1,48], index: 15, kind: input, shape index: {}]
  %s16 = inlined_call_operand.vmem [shape: f32[2,1,48], index: 16, kind: input, shape index: {}]
  %s17 = inlined_call_operand.hbm [shape: f32[2,8,48], index: 17, kind: output, shape index: {}]
  %s18 = sld [smem:[#allocation0]]
  $region109: #{tpu_custom_call.1} parent=0
    _
  %s20 = ssub.s32 1, %s18
  %s21 = scalar_select 0, %s20, %s18
  $region1: #{tpu_custom_call.1} parent=0
    #allocation4 [shape = 'u8[8192]{0}', space=vmem, size = 0x2000, scoped, tag = 'output window, operand 0']
    #allocation5 [shape = 's32[2]{0}', space=sflag, size = 0x8, scoped, tag = 'scoped memory for tpu_custom_call.1']
    %22 = vsyncpa [#allocation5], 0
    %s23 = scalar_lea.sflag [#allocation5], 1
    %24 = vsyncpa %s23, 0
    loop: start=0, step=1, limit=6
    $region2: #{tpu_custom_call.1} parent=1 // loop_pre_header
      _
    $region3: #{tpu_custom_call.1} parent=1 // loop_header
      %s26 = sphi 0, %s30
      %p27 = scmp.ge.s32.totalorder %s26, 6
      %s33 = sphi 0, %s45
      %s34 = sphi 0, %s41
      %s35 = sphi 0, %s33
      %s36 = sphi 0, %s34
      %s37 = sphi 0, %s35
      %s38 = sphi 0, %s36
      %s48 = sphi 0, %s50
      %s51 = sphi 0, %s48
      %s52 = sphi 0, %s51
      %s68 = sphi 0, %s52
      %s74 = sphi 0, %s76
      %s77 = sphi 0, %s74
      %s78 = sphi 0, %s77
      %s94 = sphi 0, %s78
      %s98 = sphi 0, %s98
      %s100 = sphi 0, %s98
      %s101 = sphi 0, %s100
      %s115 = sphi 0, %s101
      %s119 = sphi 0, %s119
      %s121 = sphi 0, %s119
      %s122 = sphi 0, %s121
      %s136 = sphi 0, %s122
      %s140 = sphi 0, %s140
      %s142 = sphi 0, %s140
      %s143 = sphi 0, %s142
      %s157 = sphi 0, %s143
      %s163 = sphi 0, %s165
      %s166 = sphi 0, %s163
      %s167 = sphi 0, %s166
      %s183 = sphi 0, %s167
      %s189 = sphi 0, %s191
      %s192 = sphi 0, %s189
      %s193 = sphi 0, %s192
      %s209 = sphi 0, %s193
      %s215 = sphi 0, %s217
      %s218 = sphi 0, %s215
      %s219 = sphi 0, %s218
      %s235 = sphi 0, %s219
      %s241 = sphi 0, %s243
      %s244 = sphi 0, %s241
      %s245 = sphi 0, %s244
      %s261 = sphi 0, %s245
      %s267 = sphi 0, %s269
      %s270 = sphi 0, %s267
      %s271 = sphi 0, %s270
      %s287 = sphi 0, %s271
      %s293 = sphi 0, %s295
      %s296 = sphi 0, %s293
      %s297 = sphi 0, %s296
      %s313 = sphi 0, %s297
      %s319 = sphi 0, %s321
      %s322 = sphi 0, %s319
      %s323 = sphi 0, %s322
      %s339 = sphi 0, %s323
      %s345 = sphi 0, %s347
      %s348 = sphi 0, %s345
      %s349 = sphi 0, %s348
      %s365 = sphi 0, %s349
      %s371 = sphi 0, %s373
      %s374 = sphi 0, %s371
      %s375 = sphi 0, %s374
      %s391 = sphi 0, %s375
      %s397 = sphi 0, %s399
      %s400 = sphi 0, %s397
      %s401 = sphi 0, %s400
      %s417 = sphi 0, %s401
      %s423 = sphi 0, %s425
      %s426 = sphi 0, %s423
      %s427 = sphi 0, %s426
      %s443 = sphi 0, %s427
      %s449 = sphi 0, %s451
      %s452 = sphi 0, %s449
      %s453 = sphi 0, %s452
      %s469 = sphi 0, %s453
      %s475 = sphi 0, %s477
      %s478 = sphi 0, %s475
      %s479 = sphi 0, %s478
      %s495 = sphi 0, %s479
    $region4: #{tpu_custom_call.1} parent=1 // loop_header_branch
      %29 = sbr.rel (%p27) target = $region8
    $region5: #{tpu_custom_call.1} parent=1 // loop_body
      %s31 = ssub.s32 %s26, 1
      %s32 = ssub.s32 %s26, 2
      %s39 = sadd.s32 1, %s34
      %p40 = scmp.ge.s32.totalorder %s39, 2
      %s41 = scalar_select %p40, 0, %s39
      %s42 = sadd.s32 1, %s33
      %s43 = scalar_select %p40, %s42, %s33
      %p44 = scmp.ge.s32.totalorder %s43, 2
      %s45 = scalar_select %p44, 0, %s43
      %s46 = ssub.s32 %s33, %s45
      %p47 = scmp.eq.s32.totalorder %s46, 0
      %s49 = sadd.s32 %s48, 1
      %s50 = scalar_select %p47, %s48, %s49
      %p53 = pneg %p47
      %p54 = scmp.eq.s32.totalorder %s26, 3
      %p55 = por %p53, %p54
      %p56 = scmp.ne.s32.totalorder %s48, %s51
      %p57 = scmp.eq.s32.totalorder %s26, 0
      %p58 = por %p56, %p57
      %p59 = scmp.ne.s32.totalorder %s48, %s51
      %p60 = scmp.eq.s32.totalorder %s31, 3
      %p61 = por %p59, %p60
      %p62 = scmp.ne.s32.totalorder %s51, %s52
      %p63 = scmp.eq.s32.totalorder %s31, 0
      %p64 = por %p62, %p63
      %p65 = scmp.ne.s32.totalorder %s51, %s52
      %p66 = scmp.eq.s32.totalorder %s32, 3
      %p67 = por %p65, %p66
      %p69 = scmp.ne.s32.totalorder %s52, %s68
      %p70 = scmp.eq.s32.totalorder %s32, 0
      %p71 = por %p69, %p70
      %s72 = ssub.s32 %s33, %s45
      %p73 = scmp.eq.s32.totalorder %s72, 0
      %s75 = sadd.s32 %s74, 1
      %s76 = scalar_select %p73, %s74, %s75
      %p79 = pneg %p73
      %p80 = scmp.eq.s32.totalorder %s26, 3
      %p81 = por %p79, %p80
      %p82 = scmp.ne.s32.totalorder %s74, %s77
      %p83 = scmp.eq.s32.totalorder %s26, 0
      %p84 = por %p82, %p83
      %p85 = scmp.ne.s32.totalorder %s74, %s77
      %p86 = scmp.eq.s32.totalorder %s31, 3
      %p87 = por %p85, %p86
      %p88 = scmp.ne.s32.totalorder %s77, %s78
      %p89 = scmp.eq.s32.totalorder %s31, 0
      %p90 = por %p88, %p89
      %p91 = scmp.ne.s32.totalorder %s77, %s78
      %p92 = scmp.eq.s32.totalorder %s32, 3
      %p93 = por %p91, %p92
      %p95 = scmp.ne.s32.totalorder %s78, %s94
      %p96 = scmp.eq.s32.totalorder %s32, 0
      %p97 = por %p95, %p96
      %s99 = sadd.s32 %s98, 1
      %p102 = scmp.eq.s32.totalorder %s26, 3
      %p103 = scmp.ne.s32.totalorder %s98, %s100
      %p104 = scmp.eq.s32.totalorder %s26, 0
      %p105 = por %p103, %p104
      %p106 = scmp.ne.s32.totalorder %s98, %s100
      %p107 = scmp.eq.s32.totalorder %s31, 3
      %p108 = por %p106, %p107
      %p109 = scmp.ne.s32.totalorder %s100, %s101
      %p110 = scmp.eq.s32.totalorder %s31, 0
      %p111 = por %p109, %p110
      %p112 = scmp.ne.s32.totalorder %s100, %s101
      %p113 = scmp.eq.s32.totalorder %s32, 3
      %p114 = por %p112, %p113
      %p116 = scmp.ne.s32.totalorder %s101, %s115
      %p117 = scmp.eq.s32.totalorder %s32, 0
      %p118 = por %p116, %p117
      %s120 = sadd.s32 %s119, 1
      %p123 = scmp.eq.s32.totalorder %s26, 3
      %p124 = scmp.ne.s32.totalorder %s119, %s121
      %p125 = scmp.eq.s32.totalorder %s26, 0
      %p126 = por %p124, %p125
      %p127 = scmp.ne.s32.totalorder %s119, %s121
      %p128 = scmp.eq.s32.totalorder %s31, 3
      %p129 = por %p127, %p128
      %p130 = scmp.ne.s32.totalorder %s121, %s122
      %p131 = scmp.eq.s32.totalorder %s31, 0
      %p132 = por %p130, %p131
      %p133 = scmp.ne.s32.totalorder %s121, %s122
      %p134 = scmp.eq.s32.totalorder %s32, 3
      %p135 = por %p133, %p134
      %p137 = scmp.ne.s32.totalorder %s122, %s136
      %p138 = scmp.eq.s32.totalorder %s32, 0
      %p139 = por %p137, %p138
      %s141 = sadd.s32 %s140, 1
      %p144 = scmp.eq.s32.totalorder %s26, 3
      %p145 = scmp.ne.s32.totalorder %s140, %s142
      %p146 = scmp.eq.s32.totalorder %s26, 0
      %p147 = por %p145, %p146
      %p148 = scmp.ne.s32.totalorder %s140, %s142
      %p149 = scmp.eq.s32.totalorder %s31, 3
      %p150 = por %p148, %p149
      %p151 = scmp.ne.s32.totalorder %s142, %s143
      %p152 = scmp.eq.s32.totalorder %s31, 0
      %p153 = por %p151, %p152
      %p154 = scmp.ne.s32.totalorder %s142, %s143
      %p155 = scmp.eq.s32.totalorder %s32, 3
      %p156 = por %p154, %p155
      %p158 = scmp.ne.s32.totalorder %s143, %s157
      %p159 = scmp.eq.s32.totalorder %s32, 0
      %p160 = por %p158, %p159
      %s161 = ssub.s32 %s34, %s41
      %p162 = scmp.eq.s32.totalorder %s161, 0
      %s164 = sadd.s32 %s163, 1
      %s165 = scalar_select %p162, %s163, %s164
      %p168 = pneg %p162
      %p169 = scmp.eq.s32.totalorder %s26, 3
      %p170 = por %p168, %p169
      %p171 = scmp.ne.s32.totalorder %s163, %s166
      %p172 = scmp.eq.s32.totalorder %s26, 0
      %p173 = por %p171, %p172
      %p174 = scmp.ne.s32.totalorder %s163, %s166
      %p175 = scmp.eq.s32.totalorder %s31, 3
      %p176 = por %p174, %p175
      %p177 = scmp.ne.s32.totalorder %s166, %s167
      %p178 = scmp.eq.s32.totalorder %s31, 0
      %p179 = por %p177, %p178
      %p180 = scmp.ne.s32.totalorder %s166, %s167
      %p181 = scmp.eq.s32.totalorder %s32, 3
      %p182 = por %p180, %p181
      %p184 = scmp.ne.s32.totalorder %s167, %s183
      %p185 = scmp.eq.s32.totalorder %s32, 0
      %p186 = por %p184, %p185
      %s187 = ssub.s32 %s34, %s41
      %p188 = scmp.eq.s32.totalorder %s187, 0
      %s190 = sadd.s32 %s189, 1
      %s191 = scalar_select %p188, %s189, %s190
      %p194 = pneg %p188
      %p195 = scmp.eq.s32.totalorder %s26, 3
      %p196 = por %p194, %p195
      %p197 = scmp.ne.s32.totalorder %s189, %s192
      %p198 = scmp.eq.s32.totalorder %s26, 0
      %p199 = por %p197, %p198
      %p200 = scmp.ne.s32.totalorder %s189, %s192
      %p201 = scmp.eq.s32.totalorder %s31, 3
      %p202 = por %p200, %p201
      %p203 = scmp.ne.s32.totalorder %s192, %s193
      %p204 = scmp.eq.s32.totalorder %s31, 0
      %p205 = por %p203, %p204
      %p206 = scmp.ne.s32.totalorder %s192, %s193
      %p207 = scmp.eq.s32.totalorder %s32, 3
      %p208 = por %p206, %p207
      %p210 = scmp.ne.s32.totalorder %s193, %s209
      %p211 = scmp.eq.s32.totalorder %s32, 0
      %p212 = por %p210, %p211
      %s213 = ssub.s32 %s34, %s41
      %p214 = scmp.eq.s32.totalorder %s213, 0
      %s216 = sadd.s32 %s215, 1
      %s217 = scalar_select %p214, %s215, %s216
      %p220 = pneg %p214
      %p221 = scmp.eq.s32.totalorder %s26, 3
      %p222 = por %p220, %p221
      %p223 = scmp.ne.s32.totalorder %s215, %s218
      %p224 = scmp.eq.s32.totalorder %s26, 0
      %p225 = por %p223, %p224
      %p226 = scmp.ne.s32.totalorder %s215, %s218
      %p227 = scmp.eq.s32.totalorder %s31, 3
      %p228 = por %p226, %p227
      %p229 = scmp.ne.s32.totalorder %s218, %s219
      %p230 = scmp.eq.s32.totalorder %s31, 0
      %p231 = por %p229, %p230
      %p232 = scmp.ne.s32.totalorder %s218, %s219
      %p233 = scmp.eq.s32.totalorder %s32, 3
      %p234 = por %p232, %p233
      %p236 = scmp.ne.s32.totalorder %s219, %s235
      %p237 = scmp.eq.s32.totalorder %s32, 0
      %p238 = por %p236, %p237
      %s239 = ssub.s32 %s34, %s41
      %p240 = scmp.eq.s32.totalorder %s239, 0
      %s242 = sadd.s32 %s241, 1
      %s243 = scalar_select %p240, %s241, %s242
      %p246 = pneg %p240
      %p247 = scmp.eq.s32.totalorder %s26, 3
      %p248 = por %p246, %p247
      %p249 = scmp.ne.s32.totalorder %s241, %s244
      %p250 = scmp.eq.s32.totalorder %s26, 0
      %p251 = por %p249, %p250
      %p252 = scmp.ne.s32.totalorder %s241, %s244
      %p253 = scmp.eq.s32.totalorder %s31, 3
      %p254 = por %p252, %p253
      %p255 = scmp.ne.s32.totalorder %s244, %s245
      %p256 = scmp.eq.s32.totalorder %s31, 0
      %p257 = por %p255, %p256
      %p258 = scmp.ne.s32.totalorder %s244, %s245
      %p259 = scmp.eq.s32.totalorder %s32, 3
      %p260 = por %p258, %p259
      %p262 = scmp.ne.s32.totalorder %s245, %s261
      %p263 = scmp.eq.s32.totalorder %s32, 0
      %p264 = por %p262, %p263
      %s265 = ssub.s32 %s34, %s41
      %p266 = scmp.eq.s32.totalorder %s265, 0
      %s268 = sadd.s32 %s267, 1
      %s269 = scalar_select %p266, %s267, %s268
      %p272 = pneg %p266
      %p273 = scmp.eq.s32.totalorder %s26, 3
      %p274 = por %p272, %p273
      %p275 = scmp.ne.s32.totalorder %s267, %s270
      %p276 = scmp.eq.s32.totalorder %s26, 0
      %p277 = por %p275, %p276
      %p278 = scmp.ne.s32.totalorder %s267, %s270
      %p279 = scmp.eq.s32.totalorder %s31, 3
      %p280 = por %p278, %p279
      %p281 = scmp.ne.s32.totalorder %s270, %s271
      %p282 = scmp.eq.s32.totalorder %s31, 0
      %p283 = por %p281, %p282
      %p284 = scmp.ne.s32.totalorder %s270, %s271
      %p285 = scmp.eq.s32.totalorder %s32, 3
      %p286 = por %p284, %p285
      %p288 = scmp.ne.s32.totalorder %s271, %s287
      %p289 = scmp.eq.s32.totalorder %s32, 0
      %p290 = por %p288, %p289
      %s291 = ssub.s32 %s34, %s41
      %p292 = scmp.eq.s32.totalorder %s291, 0
      %s294 = sadd.s32 %s293, 1
      %s295 = scalar_select %p292, %s293, %s294
      %p298 = pneg %p292
      %p299 = scmp.eq.s32.totalorder %s26, 3
      %p300 = por %p298, %p299
      %p301 = scmp.ne.s32.totalorder %s293, %s296
      %p302 = scmp.eq.s32.totalorder %s26, 0
      %p303 = por %p301, %p302
      %p304 = scmp.ne.s32.totalorder %s293, %s296
      %p305 = scmp.eq.s32.totalorder %s31, 3
      %p306 = por %p304, %p305
      %p307 = scmp.ne.s32.totalorder %s296, %s297
      %p308 = scmp.eq.s32.totalorder %s31, 0
      %p309 = por %p307, %p308
      %p310 = scmp.ne.s32.totalorder %s296, %s297
      %p311 = scmp.eq.s32.totalorder %s32, 3
      %p312 = por %p310, %p311
      %p314 = scmp.ne.s32.totalorder %s297, %s313
      %p315 = scmp.eq.s32.totalorder %s32, 0
      %p316 = por %p314, %p315
      %s317 = ssub.s32 %s34, %s41
      %p318 = scmp.eq.s32.totalorder %s317, 0
      %s320 = sadd.s32 %s319, 1
      %s321 = scalar_select %p318, %s319, %s320
      %p324 = pneg %p318
      %p325 = scmp.eq.s32.totalorder %s26, 3
      %p326 = por %p324, %p325
      %p327 = scmp.ne.s32.totalorder %s319, %s322
      %p328 = scmp.eq.s32.totalorder %s26, 0
      %p329 = por %p327, %p328
      %p330 = scmp.ne.s32.totalorder %s319, %s322
      %p331 = scmp.eq.s32.totalorder %s31, 3
      %p332 = por %p330, %p331
      %p333 = scmp.ne.s32.totalorder %s322, %s323
      %p334 = scmp.eq.s32.totalorder %s31, 0
      %p335 = por %p333, %p334
      %p336 = scmp.ne.s32.totalorder %s322, %s323
      %p337 = scmp.eq.s32.totalorder %s32, 3
      %p338 = por %p336, %p337
      %p340 = scmp.ne.s32.totalorder %s323, %s339
      %p341 = scmp.eq.s32.totalorder %s32, 0
      %p342 = por %p340, %p341
      %s343 = ssub.s32 %s34, %s41
      %p344 = scmp.eq.s32.totalorder %s343, 0
      %s346 = sadd.s32 %s345, 1
      %s347 = scalar_select %p344, %s345, %s346
      %p350 = pneg %p344
      %p351 = scmp.eq.s32.totalorder %s26, 3
      %p352 = por %p350, %p351
      %p353 = scmp.ne.s32.totalorder %s345, %s348
      %p354 = scmp.eq.s32.totalorder %s26, 0
      %p355 = por %p353, %p354
      %p356 = scmp.ne.s32.totalorder %s345, %s348
      %p357 = scmp.eq.s32.totalorder %s31, 3
      %p358 = por %p356, %p357
      %p359 = scmp.ne.s32.totalorder %s348, %s349
      %p360 = scmp.eq.s32.totalorder %s31, 0
      %p361 = por %p359, %p360
      %p362 = scmp.ne.s32.totalorder %s348, %s349
      %p363 = scmp.eq.s32.totalorder %s32, 3
      %p364 = por %p362, %p363
      %p366 = scmp.ne.s32.totalorder %s349, %s365
      %p367 = scmp.eq.s32.totalorder %s32, 0
      %p368 = por %p366, %p367
      %s369 = ssub.s32 %s34, %s41
      %p370 = scmp.eq.s32.totalorder %s369, 0
      %s372 = sadd.s32 %s371, 1
      %s373 = scalar_select %p370, %s371, %s372
      %p376 = pneg %p370
      %p377 = scmp.eq.s32.totalorder %s26, 3
      %p378 = por %p376, %p377
      %p379 = scmp.ne.s32.totalorder %s371, %s374
      %p380 = scmp.eq.s32.totalorder %s26, 0
      %p381 = por %p379, %p380
      %p382 = scmp.ne.s32.totalorder %s371, %s374
      %p383 = scmp.eq.s32.totalorder %s31, 3
      %p384 = por %p382, %p383
      %p385 = scmp.ne.s32.totalorder %s374, %s375
      %p386 = scmp.eq.s32.totalorder %s31, 0
      %p387 = por %p385, %p386
      %p388 = scmp.ne.s32.totalorder %s374, %s375
      %p389 = scmp.eq.s32.totalorder %s32, 3
      %p390 = por %p388, %p389
      %p392 = scmp.ne.s32.totalorder %s375, %s391
      %p393 = scmp.eq.s32.totalorder %s32, 0
      %p394 = por %p392, %p393
      %s395 = ssub.s32 %s34, %s41
      %p396 = scmp.eq.s32.totalorder %s395, 0
      %s398 = sadd.s32 %s397, 1
      %s399 = scalar_select %p396, %s397, %s398
      %p402 = pneg %p396
      %p403 = scmp.eq.s32.totalorder %s26, 3
      %p404 = por %p402, %p403
      %p405 = scmp.ne.s32.totalorder %s397, %s400
      %p406 = scmp.eq.s32.totalorder %s26, 0
      %p407 = por %p405, %p406
      %p408 = scmp.ne.s32.totalorder %s397, %s400
      %p409 = scmp.eq.s32.totalorder %s31, 3
      %p410 = por %p408, %p409
      %p411 = scmp.ne.s32.totalorder %s400, %s401
      %p412 = scmp.eq.s32.totalorder %s31, 0
      %p413 = por %p411, %p412
      %p414 = scmp.ne.s32.totalorder %s400, %s401
      %p415 = scmp.eq.s32.totalorder %s32, 3
      %p416 = por %p414, %p415
      %p418 = scmp.ne.s32.totalorder %s401, %s417
      %p419 = scmp.eq.s32.totalorder %s32, 0
      %p420 = por %p418, %p419
      %s421 = ssub.s32 %s34, %s41
      %p422 = scmp.eq.s32.totalorder %s421, 0
      %s424 = sadd.s32 %s423, 1
      %s425 = scalar_select %p422, %s423, %s424
      %p428 = pneg %p422
      %p429 = scmp.eq.s32.totalorder %s26, 3
      %p430 = por %p428, %p429
      %p431 = scmp.ne.s32.totalorder %s423, %s426
      %p432 = scmp.eq.s32.totalorder %s26, 0
      %p433 = por %p431, %p432
      %p434 = scmp.ne.s32.totalorder %s423, %s426
      %p435 = scmp.eq.s32.totalorder %s31, 3
      %p436 = por %p434, %p435
      %p437 = scmp.ne.s32.totalorder %s426, %s427
      %p438 = scmp.eq.s32.totalorder %s31, 0
      %p439 = por %p437, %p438
      %p440 = scmp.ne.s32.totalorder %s426, %s427
      %p441 = scmp.eq.s32.totalorder %s32, 3
      %p442 = por %p440, %p441
      %p444 = scmp.ne.s32.totalorder %s427, %s443
      %p445 = scmp.eq.s32.totalorder %s32, 0
      %p446 = por %p444, %p445
      %s447 = ssub.s32 %s34, %s41
      %p448 = scmp.eq.s32.totalorder %s447, 0
      %s450 = sadd.s32 %s449, 1
      %s451 = scalar_select %p448, %s449, %s450
      %p454 = pneg %p448
      %p455 = scmp.eq.s32.totalorder %s26, 3
      %p456 = por %p454, %p455
      %p457 = scmp.ne.s32.totalorder %s449, %s452
      %p458 = scmp.eq.s32.totalorder %s26, 0
      %p459 = por %p457, %p458
      %p460 = scmp.ne.s32.totalorder %s449, %s452
      %p461 = scmp.eq.s32.totalorder %s31, 3
      %p462 = por %p460, %p461
      %p463 = scmp.ne.s32.totalorder %s452, %s453
      %p464 = scmp.eq.s32.totalorder %s31, 0
      %p465 = por %p463, %p464
      %p466 = scmp.ne.s32.totalorder %s452, %s453
      %p467 = scmp.eq.s32.totalorder %s32, 3
      %p468 = por %p466, %p467
      %p470 = scmp.ne.s32.totalorder %s453, %s469
      %p471 = scmp.eq.s32.totalorder %s32, 0
      %p472 = por %p470, %p471
      %s473 = ssub.s32 %s33, %s45
      %p474 = scmp.eq.s32.totalorder %s473, 0
      %s476 = sadd.s32 %s475, 1
      %s477 = scalar_select %p474, %s475, %s476
      %p480 = pneg %p474
      %p481 = scmp.eq.s32.totalorder %s26, 3
      %p482 = por %p480, %p481
      %p483 = scmp.ne.s32.totalorder %s475, %s478
      %p484 = scmp.eq.s32.totalorder %s26, 0
      %p485 = por %p483, %p484
      %p486 = scmp.ne.s32.totalorder %s475, %s478
      %p487 = scmp.eq.s32.totalorder %s31, 3
      %p488 = por %p486, %p487
      %p489 = scmp.ne.s32.totalorder %s478, %s479
      %p490 = scmp.eq.s32.totalorder %s31, 0
      %p491 = por %p489, %p490
      %p492 = scmp.ne.s32.totalorder %s478, %s479
      %p493 = scmp.eq.s32.totalorder %s32, 3
      %p494 = por %p492, %p493
      %p496 = scmp.ne.s32.totalorder %s479, %s495
      %p497 = scmp.eq.s32.totalorder %s32, 0
      %p498 = por %p496, %p497
      %p499 = scmp.le.s32.totalorder 1, %s26
      %p500 = scmp.lt.s32.totalorder %s26, 5
      %p501 = pnand %p499, %p500
      %p502 = pneg %p501
      // Predicated region
      $region9: #{tpu_custom_call.1} parent=5 // pred_check
        _
      $region10: #{tpu_custom_call.1} parent=5 // pred_check_branch
        %504 = sbr.rel (%p501) target = $region12
      $region11: #{tpu_custom_call.1} parent=5 // pred_region
        %s505 = ssub.s32 %s26, 1
        // Predicated region
        $region13: #{tpu_custom_call.1} parent=11 // pred_check
          %p506 = pneg %p111
        $region14: #{tpu_custom_call.1} parent=11 // pred_check_branch
          %508 = sbr.rel (%p506) target = $region16
        $region15: #{tpu_custom_call.1} parent=11 // pred_region
          _
        $region16: #{tpu_custom_call.1} parent=11 // pred_fallthru
          _
        // Predicated region
        $region17: #{tpu_custom_call.1} parent=11 // pred_check
          %p509 = pneg %p132
        $region18: #{tpu_custom_call.1} parent=11 // pred_check_branch
          %511 = sbr.rel (%p509) target = $region20
        $region19: #{tpu_custom_call.1} parent=11 // pred_region
          _
        $region20: #{tpu_custom_call.1} parent=11 // pred_fallthru
          _
        // Predicated region
        $region21: #{tpu_custom_call.1} parent=11 // pred_check
          %p512 = pneg %p153
        $region22: #{tpu_custom_call.1} parent=11 // pred_check_branch
          %514 = sbr.rel (%p512) target = $region24
        $region23: #{tpu_custom_call.1} parent=11 // pred_region
          _
        $region24: #{tpu_custom_call.1} parent=11 // pred_fallthru
          _
      $region12: #{tpu_custom_call.1} parent=5 // pred_fallthru
        _
      %p515 = scmp.lt.s32.totalorder %s26, 4
      // Predicated region
      $region25: #{tpu_custom_call.1} parent=5 // pred_check
        %p516 = pneg %p515
      $region26: #{tpu_custom_call.1} parent=5 // pred_check_branch
        %518 = sbr.rel (%p516) target = $region28
      $region27: #{tpu_custom_call.1} parent=5 // pred_region
        // Predicated region
        $region29: #{tpu_custom_call.1} parent=27 // pred_check
          %p519 = pneg %p58
        $region30: #{tpu_custom_call.1} parent=27 // pred_check_branch
          %521 = sbr.rel (%p519) target = $region32
        $region31: #{tpu_custom_call.1} parent=27 // pred_region
          %p522 = scmp.lt.s32.totalorder %s33, 1
          %s523 = scalar_select %p522, %s33, 1
          %s524 = smul.addr %s523, 8
          %s525 = scalar_lea.vmem %s0, %s524
        $region32: #{tpu_custom_call.1} parent=27 // pred_fallthru
          _
        // Predicated region
        $region33: #{tpu_custom_call.1} parent=27 // pred_check
          %p526 = pneg %p84
        $region34: #{tpu_custom_call.1} parent=27 // pred_check_branch
          %528 = sbr.rel (%p526) target = $region36
        $region35: #{tpu_custom_call.1} parent=27 // pred_region
          %p529 = scmp.lt.s32.totalorder %s33, 1
          %s530 = scalar_select %p529, %s33, 1
          %s531 = smul.addr %s530, 8
          %s532 = scalar_lea.vmem %s1, %s531
        $region36: #{tpu_custom_call.1} parent=27 // pred_fallthru
          _
        // Predicated region
        $region37: #{tpu_custom_call.1} parent=27 // pred_check
          %p533 = pneg %p173
        $region38: #{tpu_custom_call.1} parent=27 // pred_check_branch
          %535 = sbr.rel (%p533) target = $region40
        $region39: #{tpu_custom_call.1} parent=27 // pred_region
          %p536 = scmp.lt.s32.totalorder %s34, 1
          %s537 = scalar_select %p536, %s34, 1
          %s538 = smul.addr %s537, 12
          %s539 = smul.addr %s538, 4
          %s540 = scalar_lea.vmem %s5, %s539
        $region40: #{tpu_custom_call.1} parent=27 // pred_fallthru
          _
        // Predicated region
        $region41: #{tpu_custom_call.1} parent=27 // pred_check
          %p541 = pneg %p199
        $region42: #{tpu_custom_call.1} parent=27 // pred_check_branch
          %543 = sbr.rel (%p541) target = $region44
        $region43: #{tpu_custom_call.1} parent=27 // pred_region
          %p544 = scmp.lt.s32.totalorder %s34, 1
          %s545 = scalar_select %p544, %s34, 1
          %s546 = smul.addr %s545, 6
          %s547 = smul.addr %s546, 4
          %s548 = scalar_lea.vmem %s6, %s547
        $region44: #{tpu_custom_call.1} parent=27 // pred_fallthru
          _
        // Predicated region
        $region45: #{tpu_custom_call.1} parent=27 // pred_check
          %p549 = pneg %p225
        $region46: #{tpu_custom_call.1} parent=27 // pred_check_branch
          %551 = sbr.rel (%p549) target = $region48
        $region47: #{tpu_custom_call.1} parent=27 // pred_region
          %p552 = scmp.lt.s32.totalorder %s34, 1
          %s553 = scalar_select %p552, %s34, 1
          %s554 = smul.addr %s553, 96
          %s555 = smul.addr %s554, 4
          %s556 = scalar_lea.vmem %s7, %s555
        $region48: #{tpu_custom_call.1} parent=27 // pred_fallthru
          _
        // Predicated region
        $region49: #{tpu_custom_call.1} parent=27 // pred_check
          %p557 = pneg %p251
        $region50: #{tpu_custom_call.1} parent=27 // pred_check_branch
          %559 = sbr.rel (%p557) target = $region52
        $region51: #{tpu_custom_call.1} parent=27 // pred_region
          %p560 = scmp.lt.s32.totalorder %s34, 1
          %s561 = scalar_select %p560, %s34, 1
          %s562 = smul.addr %s561, 256
          %s563 = smul.addr %s562, 4
          %s564 = scalar_lea.vmem %s8, %s563
        $region52: #{tpu_custom_call.1} parent=27 // pred_fallthru
          _
        // Predicated region
        $region53: #{tpu_custom_call.1} parent=27 // pred_check
          %p565 = pneg %p277
        $region54: #{tpu_custom_call.1} parent=27 // pred_check_branch
          %567 = sbr.rel (%p565) target = $region56
        $region55: #{tpu_custom_call.1} parent=27 // pred_region
          %p568 = scmp.lt.s32.totalorder %s34, 1
          %s569 = scalar_select %p568, %s34, 1
          %s570 = smul.addr %s569, 2
          %s571 = scalar_lea.vmem %s9, %s570
        $region56: #{tpu_custom_call.1} parent=27 // pred_fallthru
          _
        // Predicated region
        $region57: #{tpu_custom_call.1} parent=27 // pred_check
          %p572 = pneg %p303
        $region58: #{tpu_custom_call.1} parent=27 // pred_check_branch
          %574 = sbr.rel (%p572) target = $region60
        $region59: #{tpu_custom_call.1} parent=27 // pred_region
          %p575 = scmp.lt.s32.totalorder %s34, 1
          %s576 = scalar_select %p575, %s34, 1
          %s577 = scalar_lea.vmem %s10, %s576
        $region60: #{tpu_custom_call.1} parent=27 // pred_fallthru
          _
        // Predicated region
        $region61: #{tpu_custom_call.1} parent=27 // pred_check
          %p578 = pneg %p329
        $region62: #{tpu_custom_call.1} parent=27 // pred_check_branch
          %580 = sbr.rel (%p578) target = $region64
        $region63: #{tpu_custom_call.1} parent=27 // pred_region
          %p581 = scmp.lt.s32.totalorder %s34, 1
          %s582 = scalar_select %p581, %s34, 1
          %s583 = smul.addr %s582, 16
          %s584 = scalar_lea.vmem %s11, %s583
        $region64: #{tpu_custom_call.1} parent=27 // pred_fallthru
          _
        // Predicated region
        $region65: #{tpu_custom_call.1} parent=27 // pred_check
          %p585 = pneg %p355
        $region66: #{tpu_custom_call.1} parent=27 // pred_check_branch
          %587 = sbr.rel (%p585) target = $region68
        $region67: #{tpu_custom_call.1} parent=27 // pred_region
          %p588 = scmp.lt.s32.totalorder %s34, 1
          %s589 = scalar_select %p588, %s34, 1
          %s590 = scalar_lea.vmem %s12, %s589
        $region68: #{tpu_custom_call.1} parent=27 // pred_fallthru
          _
        // Predicated region
        $region69: #{tpu_custom_call.1} parent=27 // pred_check
          %p591 = pneg %p381
        $region70: #{tpu_custom_call.1} parent=27 // pred_check_branch
          %593 = sbr.rel (%p591) target = $region72
        $region71: #{tpu_custom_call.1} parent=27 // pred_region
          %p594 = scmp.lt.s32.totalorder %s34, 1
          %s595 = scalar_select %p594, %s34, 1
          %s596 = scalar_lea.vmem %s13, %s595
        $region72: #{tpu_custom_call.1} parent=27 // pred_fallthru
          _
        // Predicated region
        $region73: #{tpu_custom_call.1} parent=27 // pred_check
          %p597 = pneg %p407
        $region74: #{tpu_custom_call.1} parent=27 // pred_check_branch
          %599 = sbr.rel (%p597) target = $region76
        $region75: #{tpu_custom_call.1} parent=27 // pred_region
          %p600 = scmp.lt.s32.totalorder %s34, 1
          %s601 = scalar_select %p600, %s34, 1
          %s602 = scalar_lea.vmem %s14, %s601
        $region76: #{tpu_custom_call.1} parent=27 // pred_fallthru
          _
        // Predicated region
        $region77: #{tpu_custom_call.1} parent=27 // pred_check
          %p603 = pneg %p433
        $region78: #{tpu_custom_call.1} parent=27 // pred_check_branch
          %605 = sbr.rel (%p603) target = $region80
        $region79: #{tpu_custom_call.1} parent=27 // pred_region
          %p606 = scmp.lt.s32.totalorder %s34, 1
          %s607 = scalar_select %p606, %s34, 1
          %s608 = scalar_lea.vmem %s15, %s607
        $region80: #{tpu_custom_call.1} parent=27 // pred_fallthru
          _
        // Predicated region
        $region81: #{tpu_custom_call.1} parent=27 // pred_check
          %p609 = pneg %p459
        $region82: #{tpu_custom_call.1} parent=27 // pred_check_branch
          %611 = sbr.rel (%p609) target = $region84
        $region83: #{tpu_custom_call.1} parent=27 // pred_region
          %p612 = scmp.lt.s32.totalorder %s34, 1
          %s613 = scalar_select %p612, %s34, 1
          %s614 = scalar_lea.vmem %s16, %s613
        $region84: #{tpu_custom_call.1} parent=27 // pred_fallthru
          _
      $region28: #{tpu_custom_call.1} parent=5 // pred_fallthru
        _
      %p615 = scmp.le.s32.totalorder 1, %s26
      %p616 = scmp.lt.s32.totalorder %s26, 5
      %p617 = pnand %p615, %p616
      %p618 = pneg %p617
      // Predicated region
      $region85: #{tpu_custom_call.1} parent=5 // pred_check
        _
      $region86: #{tpu_custom_call.1} parent=5 // pred_check_branch
        %620 = sbr.rel (%p617) target = $region88
      $region87: #{tpu_custom_call.1} parent=5 // pred_region
        %s621 = ssub.s32 %s26, 1
        %p622 = scmp.lt.s32.totalorder %s35, 1
        %s623 = scalar_select %p622, %s35, 1
        %s624 = smul.addr %s623, 8
        %s625 = scalar_lea.vmem %s0, %s624
        %p626 = pneg %p64
        %p627 = pneg %p61
        %p628 = scmp.lt.s32.totalorder %s35, 1
        %s629 = scalar_select %p628, %s35, 1
        %s630 = smul.addr %s629, 8
        %s631 = scalar_lea.vmem %s1, %s630
        %p632 = pneg %p90
        %p633 = pneg %p87
        %p634 = pneg %p111
        %p635 = pneg %p108
        %p636 = pneg %p132
        %p637 = pneg %p129
        %p638 = pneg %p153
        %p639 = pneg %p150
        %p640 = scmp.lt.s32.totalorder %s36, 1
        %s641 = scalar_select %p640, %s36, 1
        %s642 = smul.addr %s641, 12
        %s643 = smul.addr %s642, 4
        %s644 = scalar_lea.vmem %s5, %s643
        %p645 = pneg %p179
        %p646 = pneg %p176
        %p647 = scmp.lt.s32.totalorder %s36, 1
        %s648 = scalar_select %p647, %s36, 1
        %s649 = smul.addr %s648, 6
        %s650 = smul.addr %s649, 4
        %s651 = scalar_lea.vmem %s6, %s650
        %p652 = pneg %p205
        %p653 = pneg %p202
        %p654 = scmp.lt.s32.totalorder %s36, 1
        %s655 = scalar_select %p654, %s36, 1
        %s656 = smul.addr %s655, 96
        %s657 = smul.addr %s656, 4
        %s658 = scalar_lea.vmem %s7, %s657
        %p659 = pneg %p231
        %p660 = pneg %p228
        %p661 = scmp.lt.s32.totalorder %s36, 1
        %s662 = scalar_select %p661, %s36, 1
        %s663 = smul.addr %s662, 256
        %s664 = smul.addr %s663, 4
        %s665 = scalar_lea.vmem %s8, %s664
        %p666 = pneg %p257
        %p667 = pneg %p254
        %p668 = scmp.lt.s32.totalorder %s36, 1
        %s669 = scalar_select %p668, %s36, 1
        %s670 = smul.addr %s669, 2
        %s671 = scalar_lea.vmem %s9, %s670
        %p672 = pneg %p283
        %p673 = pneg %p280
        %p674 = scmp.lt.s32.totalorder %s36, 1
        %s675 = scalar_select %p674, %s36, 1
        %s676 = scalar_lea.vmem %s10, %s675
        %p677 = pneg %p309
        %p678 = pneg %p306
        %p679 = scmp.lt.s32.totalorder %s36, 1
        %s680 = scalar_select %p679, %s36, 1
        %s681 = smul.addr %s680, 16
        %s682 = scalar_lea.vmem %s11, %s681
        %p683 = pneg %p335
        %p684 = pneg %p332
        %p685 = scmp.lt.s32.totalorder %s36, 1
        %s686 = scalar_select %p685, %s36, 1
        %s687 = scalar_lea.vmem %s12, %s686
        %p688 = pneg %p361
        %p689 = pneg %p358
        %p690 = scmp.lt.s32.totalorder %s36, 1
        %s691 = scalar_select %p690, %s36, 1
        %s692 = scalar_lea.vmem %s13, %s691
        %p693 = pneg %p387
        %p694 = pneg %p384
        %p695 = scmp.lt.s32.totalorder %s36, 1
        %s696 = scalar_select %p695, %s36, 1
        %s697 = scalar_lea.vmem %s14, %s696
        %p698 = pneg %p413
        %p699 = pneg %p410
        %p700 = scmp.lt.s32.totalorder %s36, 1
        %s701 = scalar_select %p700, %s36, 1
        %s702 = scalar_lea.vmem %s15, %s701
        %p703 = pneg %p439
        %p704 = pneg %p436
        %p705 = scmp.lt.s32.totalorder %s36, 1
        %s706 = scalar_select %p705, %s36, 1
        %s707 = scalar_lea.vmem %s16, %s706
        %p708 = pneg %p465
        %p709 = pneg %p462
        %p710 = pneg %p491
        %p711 = pneg %p488
        %s712 = sand.u32 %s478, 1
        %s713 = scalar_lea.sflag [#allocation5], %s712
        %s714 = sand.u32 %s478, 1
        %s715 = smul.addr %s714, 8
        %s716 = scalar_lea.vmem [#allocation4], %s715
        %p717 = scmp.lt.s32.totalorder %s35, 1
        %s718 = scalar_select %p717, %s35, 1
        %s719 = smul.addr %s718, 8
        %s720 = scalar_lea.vmem %s0, %s719
        %p721 = scmp.lt.s32.totalorder %s35, 1
        %s722 = scalar_select %p721, %s35, 1
        %s723 = smul.addr %s722, 8
        %s724 = scalar_lea.vmem %s1, %s723
        %p725 = scmp.lt.s32.totalorder %s36, 1
        %s726 = scalar_select %p725, %s36, 1
        %s727 = smul.addr %s726, 12
        %s728 = smul.addr %s727, 4
        %s729 = scalar_lea.vmem %s5, %s728
        %p730 = scmp.lt.s32.totalorder %s36, 1
        %s731 = scalar_select %p730, %s36, 1
        %s732 = smul.addr %s731, 6
        %s733 = smul.addr %s732, 4
        %s734 = scalar_lea.vmem %s6, %s733
        %p735 = scmp.lt.s32.totalorder %s36, 1
        %s736 = scalar_select %p735, %s36, 1
        %s737 = smul.addr %s736, 96
        %s738 = smul.addr %s737, 4
        %s739 = scalar_lea.vmem %s7, %s738
        %p740 = scmp.lt.s32.totalorder %s36, 1
        %s741 = scalar_select %p740, %s36, 1
        %s742 = smul.addr %s741, 256
        %s743 = smul.addr %s742, 4
        %s744 = scalar_lea.vmem %s8, %s743
        %p745 = scmp.lt.s32.totalorder %s36, 1
        %s746 = scalar_select %p745, %s36, 1
        %s747 = smul.addr %s746, 2
        %s748 = scalar_lea.vmem %s9, %s747
        %p749 = scmp.lt.s32.totalorder %s36, 1
        %s750 = scalar_select %p749, %s36, 1
        %s751 = scalar_lea.vmem %s10, %s750
        %p752 = scmp.lt.s32.totalorder %s36, 1
        %s753 = scalar_select %p752, %s36, 1
        %s754 = smul.addr %s753, 16
        %s755 = scalar_lea.vmem %s11, %s754
        %p756 = scmp.lt.s32.totalorder %s36, 1
        %s757 = scalar_select %p756, %s36, 1
        %s758 = scalar_lea.vmem %s12, %s757
        %p759 = scmp.lt.s32.totalorder %s36, 1
        %s760 = scalar_select %p759, %s36, 1
        %s761 = scalar_lea.vmem %s13, %s760
        %p762 = scmp.lt.s32.totalorder %s36, 1
        %s763 = scalar_select %p762, %s36, 1
        %s764 = scalar_lea.vmem %s14, %s763
        %p765 = scmp.lt.s32.totalorder %s36, 1
        %s766 = scalar_select %p765, %s36, 1
        %s767 = scalar_lea.vmem %s15, %s766
        %p768 = scmp.lt.s32.totalorder %s36, 1
        %s769 = scalar_select %p768, %s36, 1
        %s770 = scalar_lea.vmem %s16, %s769
        %v772 = vld [vmem:[%s2] sm:$0xff]
        %v773 = vld [vmem:[%s2 + $0x8] sm:$0xff]
        %v774 = vld [vmem:[%s2 + $0x10] sm:$0xff]
        %v775 = vld [vmem:[%s2 + $0x18] sm:$0xff]
        %v776 = vld [vmem:[%s2 + $0x20] sm:$0xff]
        %v777 = vld [vmem:[%s2 + $0x28] sm:$0xff]
        %v778 = vld [vmem:[%s2 + $0x30] sm:$0xff]
        %v779 = vld [vmem:[%s2 + $0x38] sm:$0xff]
        %v780 = vld [vmem:[%s2 + $0x40] sm:$0xff]
        %v781 = vld [vmem:[%s2 + $0x48] sm:$0xff]
        %v782 = vld [vmem:[%s2 + $0x50] sm:$0xff]
        %v783 = vld [vmem:[%s2 + $0x58] sm:$0xff]
        %v784 = vld [vmem:[%s3] sm:$0xff]
        %v785 = vld [vmem:[%s3 + $0x8] sm:$0xff]
        %v786 = vld [vmem:[%s3 + $0x10] sm:$0xff]
        %v787 = vld [vmem:[%s3 + $0x18] sm:$0xff]
        %v788 = vld [vmem:[%s3 + $0x20] sm:$0xff]
        %v789 = vld [vmem:[%s3 + $0x28] sm:$0xff]
        %v790 = vld [vmem:[%s3 + $0x30] sm:$0xff]
        %v791 = vld [vmem:[%s3 + $0x38] sm:$0xff]
        %v792 = vld [vmem:[%s3 + $0x40] sm:$0xff]
        %v793 = vld [vmem:[%s3 + $0x48] sm:$0xff]
        %v794 = vld [vmem:[%s3 + $0x50] sm:$0xff]
        %v795 = vld [vmem:[%s3 + $0x58] sm:$0xff]
        %p796 = scmp.eq.s32.totalorder %s36, 0
        // Predicated region
        $region89: #{tpu_custom_call.1} parent=87 // pred_check
          %p797 = pneg %p796
        $region90: #{tpu_custom_call.1} parent=87 // pred_check_branch
          %799 = sbr.rel (%p797) target = $region92
        $region91: #{tpu_custom_call.1} parent=87 // pred_region
          %v800 = vld [vmem:[%s724] sm:$0xff]
          %vm801 = vcmask 392192
          %802 = vst.msk [vmem:[#allocation2] sm:$0xff] %vm801, %v800
          %v803 = vld [vmem:[%s720] sm:$0xff]
          %vm804 = vcmask 23552
          %v806 = vsel %vm804, %v803, 0
          %808 = vmatprep.subr.mxu0 0.0
          %809 = vmatpush1.xpose.msra.mxu0 %v806
          %810 = vmatprep.subr.mxu0 0.0
          %811 = vmatpush1.xpose.msra.mxu0 0.0
          %812 = vmatprep.subr.mxu0 0.0
          %813 = vmatpush1.xpose.msra.mxu0 0.0
          %814 = vmatprep.subr.mxu0 0.0
          %815 = vmatpush1.xpose.msra.mxu0 0.0
          %816 = vmatprep.subr.mxu0 0.0
          %817 = vmatpush1.xpose.msra.mxu0 0.0
          %818 = vmatprep.subr.mxu0 0.0
          %819 = vmatpush1.xpose.msra.mxu0 0.0
          %820 = vmatprep.subr.mxu0 0.0
          %821 = vmatpush1.xpose.msra.mxu0 0.0
          %822 = vmatprep.subr.mxu0 0.0
          %823 = vmatpush1.xpose.msra.mxu0 0.0
          %824 = vmatprep.subr.mxu0 0.0
          %825 = vmatpush1.xpose.msra.mxu0 0.0
          %826 = vmatprep.subr.mxu0 0.0
          %827 = vmatpush1.xpose.msra.mxu0 0.0
          %828 = vmatprep.subr.mxu0 0.0
          %829 = vmatpush1.xpose.msra.mxu0 0.0
          %830 = vmatprep.subr.mxu0 0.0
          %831 = vmatpush1.xpose.msra.mxu0 0.0
          %832 = vmatprep.subr.mxu0 0.0
          %833 = vmatpush1.xpose.msra.mxu0 0.0
          %834 = vmatprep.subr.mxu0 0.0
          %835 = vmatpush1.xpose.msra.mxu0 0.0
          %836 = vmatprep.subr.mxu0 0.0
          %837 = vmatpush1.xpose.msra.mxu0 0.0
          %838 = vmatprep.subr.mxu0 0.0
          %839 = vmatpush1.xpose.msra.mxu0 0.0
          %840 = vmatprep.subr.mxu0 0.0
          %841 = vmatpush1.xpose.msra.mxu0 0.0
          %842 = vmatprep.subr.mxu0 0.0
          %843 = vmatpush1.xpose.msra.mxu0 0.0
          %844 = vmatprep.subr.mxu0 0.0
          %845 = vmatpush1.xpose.msra.mxu0 0.0
          %846 = vmatprep.subr.mxu0 0.0
          %847 = vmatpush1.xpose.msra.mxu0 0.0
          %848 = vmatprep.subr.mxu0 0.0
          %849 = vmatpush1.xpose.msra.mxu0 0.0
          %850 = vmatprep.subr.mxu0 0.0
          %851 = vmatpush1.xpose.msra.mxu0 0.0
          %852 = vmatprep.subr.mxu0 0.0
          %853 = vmatpush1.xpose.msra.mxu0 0.0
          %854 = vmatprep.subr.mxu0 0.0
          %855 = vmatpush1.xpose.msra.mxu0 0.0
          %856 = vmatprep.subr.mxu0 0.0
          %857 = vmatpush1.xpose.msra.mxu0 0.0
          %858 = vmatprep.subr.mxu0 0.0
          %859 = vmatpush1.xpose.msra.mxu0 0.0
          %860 = vmatprep.subr.mxu0 0.0
          %861 = vmatpush1.xpose.msra.mxu0 0.0
          %862 = vmatprep.subr.mxu0 0.0
          %863 = vmatpush1.xpose.msra.mxu0 0.0
          %864 = vmatprep.subr.mxu0 0.0
          %865 = vmatpush1.xpose.msra.mxu0 0.0
          %866 = vmatprep.subr.mxu0 0.0
          %867 = vmatpush1.xpose.msra.mxu0 0.0
          %868 = vmatprep.subr.mxu0 0.0
          %869 = vmatpush1.xpose.msra.mxu0 0.0
          %870 = vmatprep.subr.mxu0 0.0
          %871 = vmatpush1.xpose.msra.mxu0 0.0
          %872 = vmatprep.mubr.f32.mxu0 0.0
          %873 = vmatmul.mubr.f32.gmra.mrb[0].mxu0 %v806
          %v874 = vpop.f32.mrb[0].mxu0
          %v875 = vadd.f32 0.0, %v874
          %v876 = vpop.f32.mrb[0].mxu0
          %877 = vdwg.mxu0
          %878 = vrot.lane.b32.xlu0 %v803, 125
          %v879 = vpop.permute.xlu0 %878
          %v880 = vsel %vm804, %v879, 0
          %882 = vmatprep.subr.mxu0 0.0
          %883 = vmatpush1.xpose.msra.mxu0 %v880
          %884 = vmatprep.subr.mxu0 0.0
          %885 = vmatpush1.xpose.msra.mxu0 0.0
          %886 = vmatprep.subr.mxu0 0.0
          %887 = vmatpush1.xpose.msra.mxu0 0.0
          %888 = vmatprep.subr.mxu0 0.0
          %889 = vmatpush1.xpose.msra.mxu0 0.0
          %890 = vmatprep.subr.mxu0 0.0
          %891 = vmatpush1.xpose.msra.mxu0 0.0
          %892 = vmatprep.subr.mxu0 0.0
          %893 = vmatpush1.xpose.msra.mxu0 0.0
          %894 = vmatprep.subr.mxu0 0.0
          %895 = vmatpush1.xpose.msra.mxu0 0.0
          %896 = vmatprep.subr.mxu0 0.0
          %897 = vmatpush1.xpose.msra.mxu0 0.0
          %898 = vmatprep.subr.mxu0 0.0
          %899 = vmatpush1.xpose.msra.mxu0 0.0
          %900 = vmatprep.subr.mxu0 0.0
          %901 = vmatpush1.xpose.msra.mxu0 0.0
          %902 = vmatprep.subr.mxu0 0.0
          %903 = vmatpush1.xpose.msra.mxu0 0.0
          %904 = vmatprep.subr.mxu0 0.0
          %905 = vmatpush1.xpose.msra.mxu0 0.0
          %906 = vmatprep.subr.mxu0 0.0
          %907 = vmatpush1.xpose.msra.mxu0 0.0
          %908 = vmatprep.subr.mxu0 0.0
          %909 = vmatpush1.xpose.msra.mxu0 0.0
          %910 = vmatprep.subr.mxu0 0.0
          %911 = vmatpush1.xpose.msra.mxu0 0.0
          %912 = vmatprep.subr.mxu0 0.0
          %913 = vmatpush1.xpose.msra.mxu0 0.0
          %914 = vmatprep.subr.mxu0 0.0
          %915 = vmatpush1.xpose.msra.mxu0 0.0
          %916 = vmatprep.subr.mxu0 0.0
          %917 = vmatpush1.xpose.msra.mxu0 0.0
          %918 = vmatprep.subr.mxu0 0.0
          %919 = vmatpush1.xpose.msra.mxu0 0.0
          %920 = vmatprep.subr.mxu0 0.0
          %921 = vmatpush1.xpose.msra.mxu0 0.0
          %922 = vmatprep.subr.mxu0 0.0
          %923 = vmatpush1.xpose.msra.mxu0 0.0
          %924 = vmatprep.subr.mxu0 0.0
          %925 = vmatpush1.xpose.msra.mxu0 0.0
          %926 = vmatprep.subr.mxu0 0.0
          %927 = vmatpush1.xpose.msra.mxu0 0.0
          %928 = vmatprep.subr.mxu0 0.0
          %929 = vmatpush1.xpose.msra.mxu0 0.0
          %930 = vmatprep.subr.mxu0 0.0
          %931 = vmatpush1.xpose.msra.mxu0 0.0
          %932 = vmatprep.subr.mxu0 0.0
          %933 = vmatpush1.xpose.msra.mxu0 0.0
          %934 = vmatprep.subr.mxu0 0.0
          %935 = vmatpush1.xpose.msra.mxu0 0.0
          %936 = vmatprep.subr.mxu0 0.0
          %937 = vmatpush1.xpose.msra.mxu0 0.0
          %938 = vmatprep.subr.mxu0 0.0
          %939 = vmatpush1.xpose.msra.mxu0 0.0
          %940 = vmatprep.subr.mxu0 0.0
          %941 = vmatpush1.xpose.msra.mxu0 0.0
          %942 = vmatprep.subr.mxu0 0.0
          %943 = vmatpush1.xpose.msra.mxu0 0.0
          %944 = vmatprep.subr.mxu0 0.0
          %945 = vmatpush1.xpose.msra.mxu0 0.0
          %946 = vmatprep.mubr.f32.mxu0 0.0
          %947 = vmatmul.mubr.f32.gmra.mrb[0].mxu0 %v806
          %v948 = vpop.f32.mrb[0].mxu0
          %v949 = vadd.f32 0.0, %v948
          %v950 = vpop.f32.mrb[0].mxu0
          %951 = vdwg.mxu0
          %952 = vmatprep.subr.mxu0 0.0
          %953 = vmatpush1.xpose.msra.mxu0 %v806
          %954 = vmatprep.subr.mxu0 0.0
          %955 = vmatpush1.xpose.msra.mxu0 0.0
          %956 = vmatprep.subr.mxu0 0.0
          %957 = vmatpush1.xpose.msra.mxu0 0.0
          %958 = vmatprep.subr.mxu0 0.0
          %959 = vmatpush1.xpose.msra.mxu0 0.0
          %960 = vmatprep.subr.mxu0 0.0
          %961 = vmatpush1.xpose.msra.mxu0 0.0
          %962 = vmatprep.subr.mxu0 0.0
          %963 = vmatpush1.xpose.msra.mxu0 0.0
          %964 = vmatprep.subr.mxu0 0.0
          %965 = vmatpush1.xpose.msra.mxu0 0.0
          %966 = vmatprep.subr.mxu0 0.0
          %967 = vmatpush1.xpose.msra.mxu0 0.0
          %968 = vmatprep.subr.mxu0 0.0
          %969 = vmatpush1.xpose.msra.mxu0 0.0
          %970 = vmatprep.subr.mxu0 0.0
          %971 = vmatpush1.xpose.msra.mxu0 0.0
          %972 = vmatprep.subr.mxu0 0.0
          %973 = vmatpush1.xpose.msra.mxu0 0.0
          %974 = vmatprep.subr.mxu0 0.0
          %975 = vmatpush1.xpose.msra.mxu0 0.0
          %976 = vmatprep.subr.mxu0 0.0
          %977 = vmatpush1.xpose.msra.mxu0 0.0
          %978 = vmatprep.subr.mxu0 0.0
          %979 = vmatpush1.xpose.msra.mxu0 0.0
          %980 = vmatprep.subr.mxu0 0.0
          %981 = vmatpush1.xpose.msra.mxu0 0.0
          %982 = vmatprep.subr.mxu0 0.0
          %983 = vmatpush1.xpose.msra.mxu0 0.0
          %984 = vmatprep.subr.mxu0 0.0
          %985 = vmatpush1.xpose.msra.mxu0 0.0
          %986 = vmatprep.subr.mxu0 0.0
          %987 = vmatpush1.xpose.msra.mxu0 0.0
          %988 = vmatprep.subr.mxu0 0.0
          %989 = vmatpush1.xpose.msra.mxu0 0.0
          %990 = vmatprep.subr.mxu0 0.0
          %991 = vmatpush1.xpose.msra.mxu0 0.0
          %992 = vmatprep.subr.mxu0 0.0
          %993 = vmatpush1.xpose.msra.mxu0 0.0
          %994 = vmatprep.subr.mxu0 0.0
          %995 = vmatpush1.xpose.msra.mxu0 0.0
          %996 = vmatprep.subr.mxu0 0.0
          %997 = vmatpush1.xpose.msra.mxu0 0.0
          %998 = vmatprep.subr.mxu0 0.0
          %999 = vmatpush1.xpose.msra.mxu0 0.0
          %1000 = vmatprep.subr.mxu0 0.0
          %1001 = vmatpush1.xpose.msra.mxu0 0.0
          %1002 = vmatprep.subr.mxu0 0.0
          %1003 = vmatpush1.xpose.msra.mxu0 0.0
          %1004 = vmatprep.subr.mxu0 0.0
          %1005 = vmatpush1.xpose.msra.mxu0 0.0
          %1006 = vmatprep.subr.mxu0 0.0
          %1007 = vmatpush1.xpose.msra.mxu0 0.0
          %1008 = vmatprep.subr.mxu0 0.0
          %1009 = vmatpush1.xpose.msra.mxu0 0.0
          %1010 = vmatprep.subr.mxu0 0.0
          %1011 = vmatpush1.xpose.msra.mxu0 0.0
          %1012 = vmatprep.subr.mxu0 0.0
          %1013 = vmatpush1.xpose.msra.mxu0 0.0
          %1014 = vmatprep.subr.mxu0 0.0
          %1015 = vmatpush1.xpose.msra.mxu0 0.0
          %1016 = vmatprep.mubr.f32.mxu0 0.0
          %1017 = vmatmul.mubr.f32.gmra.mrb[0].mxu0 %v880
          %v1018 = vpop.f32.mrb[0].mxu0
          %v1019 = vadd.f32 0.0, %v1018
          %v1020 = vpop.f32.mrb[0].mxu0
          %1021 = vdwg.mxu0
          %1022 = vmatprep.subr.mxu0 0.0
          %1023 = vmatpush1.xpose.msra.mxu0 %v880
          %1024 = vmatprep.subr.mxu0 0.0
          %1025 = vmatpush1.xpose.msra.mxu0 0.0
          %1026 = vmatprep.subr.mxu0 0.0
          %1027 = vmatpush1.xpose.msra.mxu0 0.0
          %1028 = vmatprep.subr.mxu0 0.0
          %1029 = vmatpush1.xpose.msra.mxu0 0.0
          %1030 = vmatprep.subr.mxu0 0.0
          %1031 = vmatpush1.xpose.msra.mxu0 0.0
          %1032 = vmatprep.subr.mxu0 0.0
          %1033 = vmatpush1.xpose.msra.mxu0 0.0
          %1034 = vmatprep.subr.mxu0 0.0
          %1035 = vmatpush1.xpose.msra.mxu0 0.0
          %1036 = vmatprep.subr.mxu0 0.0
          %1037 = vmatpush1.xpose.msra.mxu0 0.0
          %1038 = vmatprep.subr.mxu0 0.0
          %1039 = vmatpush1.xpose.msra.mxu0 0.0
          %1040 = vmatprep.subr.mxu0 0.0
          %1041 = vmatpush1.xpose.msra.mxu0 0.0
          %1042 = vmatprep.subr.mxu0 0.0
          %1043 = vmatpush1.xpose.msra.mxu0 0.0
          %1044 = vmatprep.subr.mxu0 0.0
          %1045 = vmatpush1.xpose.msra.mxu0 0.0
          %1046 = vmatprep.subr.mxu0 0.0
          %1047 = vmatpush1.xpose.msra.mxu0 0.0
          %1048 = vmatprep.subr.mxu0 0.0
          %1049 = vmatpush1.xpose.msra.mxu0 0.0
          %1050 = vmatprep.subr.mxu0 0.0
          %1051 = vmatpush1.xpose.msra.mxu0 0.0
          %1052 = vmatprep.subr.mxu0 0.0
          %1053 = vmatpush1.xpose.msra.mxu0 0.0
          %1054 = vmatprep.subr.mxu0 0.0
          %1055 = vmatpush1.xpose.msra.mxu0 0.0
          %1056 = vmatprep.subr.mxu0 0.0
          %1057 = vmatpush1.xpose.msra.mxu0 0.0
          %1058 = vmatprep.subr.mxu0 0.0
          %1059 = vmatpush1.xpose.msra.mxu0 0.0
          %1060 = vmatprep.subr.mxu0 0.0
          %1061 = vmatpush1.xpose.msra.mxu0 0.0
          %1062 = vmatprep.subr.mxu0 0.0
          %1063 = vmatpush1.xpose.msra.mxu0 0.0
          %1064 = vmatprep.subr.mxu0 0.0
          %1065 = vmatpush1.xpose.msra.mxu0 0.0
          %1066 = vmatprep.subr.mxu0 0.0
          %1067 = vmatpush1.xpose.msra.mxu0 0.0
          %1068 = vmatprep.subr.mxu0 0.0
          %1069 = vmatpush1.xpose.msra.mxu0 0.0
          %1070 = vmatprep.subr.mxu0 0.0
          %1071 = vmatpush1.xpose.msra.mxu0 0.0
          %1072 = vmatprep.subr.mxu0 0.0
          %1073 = vmatpush1.xpose.msra.mxu0 0.0
          %1074 = vmatprep.subr.mxu0 0.0
          %1075 = vmatpush1.xpose.msra.mxu0 0.0
          %1076 = vmatprep.subr.mxu0 0.0
          %1077 = vmatpush1.xpose.msra.mxu0 0.0
          %1078 = vmatprep.subr.mxu0 0.0
          %1079 = vmatpush1.xpose.msra.mxu0 0.0
          %1080 = vmatprep.subr.mxu0 0.0
          %1081 = vmatpush1.xpose.msra.mxu0 0.0
          %1082 = vmatprep.subr.mxu0 0.0
          %1083 = vmatpush1.xpose.msra.mxu0 0.0
          %1084 = vmatprep.subr.mxu0 0.0
          %1085 = vmatpush1.xpose.msra.mxu0 0.0
          %1086 = vmatprep.mubr.f32.mxu0 0.0
          %1087 = vmatmul.mubr.f32.gmra.mrb[0].mxu0 %v880
          %v1088 = vpop.f32.mrb[0].mxu0
          %v1089 = vadd.f32 0.0, %v1088
          %v1090 = vpop.f32.mrb[0].mxu0
          %1091 = vdwg.mxu0
          %v1092 = vmul.f32 %v803, %v803
          %v1093 = vsel %vm804, %v1092, 0.0
          %1094 = vadd.xlane.f32.xlu0 %v1093
          %v1095 = vpop.xlane.xlu0 %1094
          %1097 = vrot.lane.b32.xlu0 %v1092, 125
          %v1098 = vpop.permute.xlu0 %1097
          %v1100 = vsel %vm804, %v1098, 0.0
          %1101 = vadd.xlane.f32.xlu0 %v1100
          %v1102 = vpop.xlane.xlu0 %1101
          %v1104 = vmul.f32 %v803, %v879
          %v1105 = vsel %vm804, %v1104, 0.0
          %1106 = vadd.xlane.f32.xlu0 %v1105
          %v1107 = vpop.xlane.xlu0 %1106
          %vm1108 = vcmask 7168
          %v1110 = vsel %vm1108, %v1095, 0
          %1112 = vmatprep.subr.mxu0 0.0
          %1113 = vmatpush1.xpose.msra.mxu0 %v1110
          %1114 = vmatprep.subr.mxu0 0.0
          %1115 = vmatpush1.xpose.msra.mxu0 0.0
          %1116 = vmatprep.subr.mxu0 0.0
          %1117 = vmatpush1.xpose.msra.mxu0 0.0
          %1118 = vmatprep.subr.mxu0 0.0
          %1119 = vmatpush1.xpose.msra.mxu0 0.0
          %1120 = vmatprep.subr.mxu0 0.0
          %1121 = vmatpush1.xpose.msra.mxu0 0.0
          %1122 = vmatprep.subr.mxu0 0.0
          %1123 = vmatpush1.xpose.msra.mxu0 0.0
          %1124 = vmatprep.subr.mxu0 0.0
          %1125 = vmatpush1.xpose.msra.mxu0 0.0
          %1126 = vmatprep.subr.mxu0 0.0
          %1127 = vmatpush1.xpose.msra.mxu0 0.0
          %1128 = vmatprep.subr.mxu0 0.0
          %1129 = vmatpush1.xpose.msra.mxu0 0.0
          %1130 = vmatprep.subr.mxu0 0.0
          %1131 = vmatpush1.xpose.msra.mxu0 0.0
          %1132 = vmatprep.subr.mxu0 0.0
          %1133 = vmatpush1.xpose.msra.mxu0 0.0
          %1134 = vmatprep.subr.mxu0 0.0
          %1135 = vmatpush1.xpose.msra.mxu0 0.0
          %1136 = vmatprep.subr.mxu0 0.0
          %1137 = vmatpush1.xpose.msra.mxu0 0.0
          %1138 = vmatprep.subr.mxu0 0.0
          %1139 = vmatpush1.xpose.msra.mxu0 0.0
          %1140 = vmatprep.subr.mxu0 0.0
          %1141 = vmatpush1.xpose.msra.mxu0 0.0
          %1142 = vmatprep.subr.mxu0 0.0
          %1143 = vmatpush1.xpose.msra.mxu0 0.0
          %1144 = vmatprep.subr.mxu0 0.0
          %1145 = vmatpush1.xpose.msra.mxu0 0.0
          %1146 = vmatprep.subr.mxu0 0.0
          %1147 = vmatpush1.xpose.msra.mxu0 0.0
          %1148 = vmatprep.subr.mxu0 0.0
          %1149 = vmatpush1.xpose.msra.mxu0 0.0
          %1150 = vmatprep.subr.mxu0 0.0
          %1151 = vmatpush1.xpose.msra.mxu0 0.0
          %1152 = vmatprep.subr.mxu0 0.0
          %1153 = vmatpush1.xpose.msra.mxu0 0.0
          %1154 = vmatprep.subr.mxu0 0.0
          %1155 = vmatpush1.xpose.msra.mxu0 0.0
          %1156 = vmatprep.subr.mxu0 0.0
          %1157 = vmatpush1.xpose.msra.mxu0 0.0
          %1158 = vmatprep.subr.mxu0 0.0
          %1159 = vmatpush1.xpose.msra.mxu0 0.0
          %1160 = vmatprep.subr.mxu0 0.0
          %1161 = vmatpush1.xpose.msra.mxu0 0.0
          %1162 = vmatprep.subr.mxu0 0.0
          %1163 = vmatpush1.xpose.msra.mxu0 0.0
          %1164 = vmatprep.subr.mxu0 0.0
          %1165 = vmatpush1.xpose.msra.mxu0 0.0
          %1166 = vmatprep.subr.mxu0 0.0
          %1167 = vmatpush1.xpose.msra.mxu0 0.0
          %1168 = vmatprep.subr.mxu0 0.0
          %1169 = vmatpush1.xpose.msra.mxu0 0.0
          %1170 = vmatprep.subr.mxu0 0.0
          %1171 = vmatpush1.xpose.msra.mxu0 0.0
          %1172 = vmatprep.subr.mxu0 0.0
          %1173 = vmatpush1.xpose.msra.mxu0 0.0
          %1174 = vmatprep.subr.mxu0 0.0
          %1175 = vmatpush1.xpose.msra.mxu0 0.0
          %1176 = vmatprep.mubr.f32.mxu0 0.0
          %1177 = vmatmul.mubr.f32.gmra.mrb[0].mxu0 %v1110
          %v1178 = vpop.f32.mrb[0].mxu0
          %v1179 = vadd.f32 0.0, %v1178
          %v1180 = vpop.f32.mrb[0].mxu0
          %1181 = vdwg.mxu0
          %v1182 = vmul.f32 %v875, %v875
          %v1183 = vsub.f32 %v1179, %v1182
          %v1184 = vmax.f32 %v1183, 0.0
          %v1185 = vrsqrt.pop %v1184
          %v1186 = vmul.f32 %v1184, %v1185
          %vm1187 = vcmp.eq.f32.partialorder %v1184, inf
          %v1188 = vsel %vm1187, %v1184, %v1186
          %vm1189 = vcmp.eq.f32.partialorder %v1184, 0.0
          %v1190 = vand.u32 %v1184, 2147483648
          %v1191 = vsel %vm1189, %v1190, %v1188
          %v1192 = vadd.f32 %v949, %v1019
          %v1193 = vand.u32 2147483647, %v1192
          %v1194 = vadd.f32 %v1191, 1e-06
          %v1195 = vrcp.pop %v1194
          %v1196 = vmul.f32 %v1193, %v1195
          %v1198 = vsel %vm1108, 1.0, 0
          %v1201 = vsel %vm1108, %v1102, 0
          %1203 = vmatprep.subr.mxu0 0.0
          %1204 = vmatpush1.xpose.msra.mxu0 %v1201
          %1205 = vmatprep.subr.mxu0 0.0
          %1206 = vmatpush1.xpose.msra.mxu0 0.0
          %1207 = vmatprep.subr.mxu0 0.0
          %1208 = vmatpush1.xpose.msra.mxu0 0.0
          %1209 = vmatprep.subr.mxu0 0.0
          %1210 = vmatpush1.xpose.msra.mxu0 0.0
          %1211 = vmatprep.subr.mxu0 0.0
          %1212 = vmatpush1.xpose.msra.mxu0 0.0
          %1213 = vmatprep.subr.mxu0 0.0
          %1214 = vmatpush1.xpose.msra.mxu0 0.0
          %1215 = vmatprep.subr.mxu0 0.0
          %1216 = vmatpush1.xpose.msra.mxu0 0.0
          %1217 = vmatprep.subr.mxu0 0.0
          %1218 = vmatpush1.xpose.msra.mxu0 0.0
          %1219 = vmatprep.subr.mxu0 0.0
          %1220 = vmatpush1.xpose.msra.mxu0 0.0
          %1221 = vmatprep.subr.mxu0 0.0
          %1222 = vmatpush1.xpose.msra.mxu0 0.0
          %1223 = vmatprep.subr.mxu0 0.0
          %1224 = vmatpush1.xpose.msra.mxu0 0.0
          %1225 = vmatprep.subr.mxu0 0.0
          %1226 = vmatpush1.xpose.msra.mxu0 0.0
          %1227 = vmatprep.subr.mxu0 0.0
          %1228 = vmatpush1.xpose.msra.mxu0 0.0
          %1229 = vmatprep.subr.mxu0 0.0
          %1230 = vmatpush1.xpose.msra.mxu0 0.0
          %1231 = vmatprep.subr.mxu0 0.0
          %1232 = vmatpush1.xpose.msra.mxu0 0.0
          %1233 = vmatprep.subr.mxu0 0.0
          %1234 = vmatpush1.xpose.msra.mxu0 0.0
          %1235 = vmatprep.subr.mxu0 0.0
          %1236 = vmatpush1.xpose.msra.mxu0 0.0
          %1237 = vmatprep.subr.mxu0 0.0
          %1238 = vmatpush1.xpose.msra.mxu0 0.0
          %1239 = vmatprep.subr.mxu0 0.0
          %1240 = vmatpush1.xpose.msra.mxu0 0.0
          %1241 = vmatprep.subr.mxu0 0.0
          %1242 = vmatpush1.xpose.msra.mxu0 0.0
          %1243 = vmatprep.subr.mxu0 0.0
          %1244 = vmatpush1.xpose.msra.mxu0 0.0
          %1245 = vmatprep.subr.mxu0 0.0
          %1246 = vmatpush1.xpose.msra.mxu0 0.0
          %1247 = vmatprep.subr.mxu0 0.0
          %1248 = vmatpush1.xpose.msra.mxu0 0.0
          %1249 = vmatprep.subr.mxu0 0.0
          %1250 = vmatpush1.xpose.msra.mxu0 0.0
          %1251 = vmatprep.subr.mxu0 0.0
          %1252 = vmatpush1.xpose.msra.mxu0 0.0
          %1253 = vmatprep.subr.mxu0 0.0
          %1254 = vmatpush1.xpose.msra.mxu0 0.0
          %1255 = vmatprep.subr.mxu0 0.0
          %1256 = vmatpush1.xpose.msra.mxu0 0.0
          %1257 = vmatprep.subr.mxu0 0.0
          %1258 = vmatpush1.xpose.msra.mxu0 0.0
          %1259 = vmatprep.subr.mxu0 0.0
          %1260 = vmatpush1.xpose.msra.mxu0 0.0
          %1261 = vmatprep.subr.mxu0 0.0
          %1262 = vmatpush1.xpose.msra.mxu0 0.0
          %1263 = vmatprep.subr.mxu0 0.0
          %1264 = vmatpush1.xpose.msra.mxu0 0.0
          %1265 = vmatprep.subr.mxu0 0.0
          %1266 = vmatpush1.xpose.msra.mxu0 0.0
          %1267 = vmatprep.mubr.f32.mxu0 0.0
          %1268 = vmatmul.mubr.f32.gmra.mrb[0].mxu0 %v1198
          %v1269 = vpop.f32.mrb[0].mxu0
          %v1270 = vadd.f32 0.0, %v1269
          %v1271 = vpop.f32.mrb[0].mxu0
          %1272 = vdwg.mxu0
          %v1273 = vadd.f32 %v1102, %v1270
          %v1274 = vmul.f32 %v1089, 2.0
          %v1275 = vsub.f32 %v1273, %v1274
          %v1276 = vsub.f32 %v1107, %v949
          %v1277 = vmul.f32 %v1095, %v1275
          %v1278 = vmul.f32 %v1276, %v1276
          %v1279 = vsub.f32 %v1277, %v1278
          %v1280 = vmax.f32 %v1279, 0.0
          %v1281 = vrsqrt.pop %v1280
          %v1282 = vmul.f32 %v1280, %v1281
          %vm1283 = vcmp.eq.f32.partialorder %v1280, inf
          %v1284 = vsel %vm1283, %v1280, %v1282
          %vm1285 = vcmp.eq.f32.partialorder %v1280, 0.0
          %v1286 = vand.u32 %v1280, 2147483648
          %v1287 = vsel %vm1285, %v1286, %v1284
          %v1288 = vadd.f32 %v1095, 1e-06
          %v1289 = vrcp.pop %v1288
          %v1290 = vmul.f32 %v1287, %v1289
          %vm1291 = vcmp.lt.f32.partialorder %v1191, 1e-06
          %v1292 = vsel %vm1291, %v1290, %v1196
          %v1293 = vmul.f32 %v1292, -0.25
          %vm1294 = vcmask 64512
          %v1296 = vsel %vm1294, %v772, 0
          %v1299 = vsel %vm1294, %v773, 0
          %v1302 = vsel %vm1294, %v774, 0
          %v1305 = vsel %vm1294, %v775, 0
          %v1308 = vsel %vm1294, %v776, 0
          %v1311 = vsel %vm1294, %v777, 0
          %v1314 = vsel %vm1294, %v778, 0
          %v1317 = vsel %vm1294, %v779, 0
          %v1320 = vsel %vm1294, %v780, 0
          %v1323 = vsel %vm1294, %v781, 0
          %v1326 = vsel %vm1294, %v782, 0
          %v1329 = vsel %vm1294, %v783, 0
          %1331 = vmatprep.subr.mxu0 0.0
          %1332 = vmatpush1.msra.mxu0 %v1293
          %1333 = vmatprep.subr.mxu0 0.0
          %1334 = vmatpush1.msra.mxu0 0.0
          %1335 = vmatprep.subr.mxu0 0.0
          %1336 = vmatpush1.msra.mxu0 0.0
          %1337 = vmatprep.subr.mxu0 0.0
          %1338 = vmatpush1.msra.mxu0 0.0
          %1339 = vmatprep.subr.mxu0 0.0
          %1340 = vmatpush1.msra.mxu0 0.0
          %1341 = vmatprep.subr.mxu0 0.0
          %1342 = vmatpush1.msra.mxu0 0.0
          %1343 = vmatprep.subr.mxu0 0.0
          %1344 = vmatpush1.msra.mxu0 0.0
          %1345 = vmatprep.subr.mxu0 0.0
          %1346 = vmatpush1.msra.mxu0 0.0
          %1347 = vmatprep.subr.mxu0 0.0
          %1348 = vmatpush1.msra.mxu0 0.0
          %1349 = vmatprep.subr.mxu0 0.0
          %1350 = vmatpush1.msra.mxu0 0.0
          %1351 = vmatprep.subr.mxu0 0.0
          %1352 = vmatpush1.msra.mxu0 0.0
          %1353 = vmatprep.subr.mxu0 0.0
          %1354 = vmatpush1.msra.mxu0 0.0
          %1355 = vmatprep.subr.mxu0 0.0
          %1356 = vmatpush1.msra.mxu0 0.0
          %1357 = vmatprep.subr.mxu0 0.0
          %1358 = vmatpush1.msra.mxu0 0.0
          %1359 = vmatprep.subr.mxu0 0.0
          %1360 = vmatpush1.msra.mxu0 0.0
          %1361 = vmatprep.subr.mxu0 0.0
          %1362 = vmatpush1.msra.mxu0 0.0
          %1363 = vmatprep.subr.mxu0 0.0
          %1364 = vmatpush1.msra.mxu0 0.0
          %1365 = vmatprep.subr.mxu0 0.0
          %1366 = vmatpush1.msra.mxu0 0.0
          %1367 = vmatprep.subr.mxu0 0.0
          %1368 = vmatpush1.msra.mxu0 0.0
          %1369 = vmatprep.subr.mxu0 0.0
          %1370 = vmatpush1.msra.mxu0 0.0
          %1371 = vmatprep.subr.mxu0 0.0
          %1372 = vmatpush1.msra.mxu0 0.0
          %1373 = vmatprep.subr.mxu0 0.0
          %1374 = vmatpush1.msra.mxu0 0.0
          %1375 = vmatprep.subr.mxu0 0.0
          %1376 = vmatpush1.msra.mxu0 0.0
          %1377 = vmatprep.subr.mxu0 0.0
          %1378 = vmatpush1.msra.mxu0 0.0
          %1379 = vmatprep.subr.mxu0 0.0
          %1380 = vmatpush1.msra.mxu0 0.0
          %1381 = vmatprep.subr.mxu0 0.0
          %1382 = vmatpush1.msra.mxu0 0.0
          %1383 = vmatprep.subr.mxu0 0.0
          %1384 = vmatpush1.msra.mxu0 0.0
          %1385 = vmatprep.subr.mxu0 0.0
          %1386 = vmatpush1.msra.mxu0 0.0
          %1387 = vmatprep.subr.mxu0 0.0
          %1388 = vmatpush1.msra.mxu0 0.0
          %1389 = vmatprep.subr.mxu0 0.0
          %1390 = vmatpush1.msra.mxu0 0.0
          %1391 = vmatprep.subr.mxu0 0.0
          %1392 = vmatpush1.msra.mxu0 0.0
          %1393 = vmatprep.subr.mxu0 0.0
          %1394 = vmatpush1.msra.mxu0 0.0
          %1395 = vmatprep.mubr.f32.mxu0 0.0
          %1396 = vmatmul.mubr.f32.gmra.mrb[0].mxu0 %v1296
          %v1397 = vpop.f32.mrb[0].mxu0
          %v1398 = vadd.f32 0.0, %v1397
          %v1399 = vpop.f32.mrb[0].mxu0
          %1400 = vmatprep.mubr.f32.mxu0 0.0
          %1401 = vmatmul.mubr.f32.gmra.mrb[0].mxu0 %v1299
          %v1402 = vpop.f32.mrb[0].mxu0
          %v1403 = vadd.f32 0.0, %v1402
          %v1404 = vpop.f32.mrb[0].mxu0
          %1405 = vmatprep.mubr.f32.mxu0 0.0
          %1406 = vmatmul.mubr.f32.gmra.mrb[0].mxu0 %v1302
          %v1407 = vpop.f32.mrb[0].mxu0
          %v1408 = vadd.f32 0.0, %v1407
          %v1409 = vpop.f32.mrb[0].mxu0
          %1410 = vmatprep.mubr.f32.mxu0 0.0
          %1411 = vmatmul.mubr.f32.gmra.mrb[0].mxu0 %v1305
          %v1412 = vpop.f32.mrb[0].mxu0
          %v1413 = vadd.f32 0.0, %v1412
          %v1414 = vpop.f32.mrb[0].mxu0
          %1415 = vmatprep.mubr.f32.mxu0 0.0
          %1416 = vmatmul.mubr.f32.gmra.mrb[0].mxu0 %v1308
          %v1417 = vpop.f32.mrb[0].mxu0
          %v1418 = vadd.f32 0.0, %v1417
          %v1419 = vpop.f32.mrb[0].mxu0
          %1420 = vmatprep.mubr.f32.mxu0 0.0
          %1421 = vmatmul.mubr.f32.gmra.mrb[0].mxu0 %v1311
          %v1422 = vpop.f32.mrb[0].mxu0
          %v1423 = vadd.f32 0.0, %v1422
          %v1424 = vpop.f32.mrb[0].mxu0
          %1425 = vmatprep.mubr.f32.mxu0 0.0
          %1426 = vmatmul.mubr.f32.gmra.mrb[0].mxu0 %v1314
          %v1427 = vpop.f32.mrb[0].mxu0
          %v1428 = vadd.f32 0.0, %v1427
          %v1429 = vpop.f32.mrb[0].mxu0
          %1430 = vmatprep.mubr.f32.mxu0 0.0
          %1431 = vmatmul.mubr.f32.gmra.mrb[0].mxu0 %v1317
          %v1432 = vpop.f32.mrb[0].mxu0
          %v1433 = vadd.f32 0.0, %v1432
          %v1434 = vpop.f32.mrb[0].mxu0
          %1435 = vmatprep.mubr.f32.mxu0 0.0
          %1436 = vmatmul.mubr.f32.gmra.mrb[0].mxu0 %v1320
          %v1437 = vpop.f32.mrb[0].mxu0
          %v1438 = vadd.f32 0.0, %v1437
          %v1439 = vpop.f32.mrb[0].mxu0
          %1440 = vmatprep.mubr.f32.mxu0 0.0
          %1441 = vmatmul.mubr.f32.gmra.mrb[0].mxu0 %v1323
          %v1442 = vpop.f32.mrb[0].mxu0
          %v1443 = vadd.f32 0.0, %v1442
          %v1444 = vpop.f32.mrb[0].mxu0
          %1445 = vmatprep.mubr.f32.mxu0 0.0
          %1446 = vmatmul.mubr.f32.gmra.mrb[0].mxu0 %v1326
          %v1447 = vpop.f32.mrb[0].mxu0
          %v1448 = vadd.f32 0.0, %v1447
          %v1449 = vpop.f32.mrb[0].mxu0
          %1450 = vmatprep.mubr.f32.mxu0 0.0
          %1451 = vmatmul.mubr.f32.gmra.mrb[0].mxu0 %v1329
          %v1452 = vpop.f32.mrb[0].mxu0
          %v1453 = vadd.f32 0.0, %v1452
          %v1454 = vpop.f32.mrb[0].mxu0
          %1455 = vdwg.mxu0
          %v1457 = vsel %vm1294, %v1398, 0
          %v1460 = vsel %vm1294, %v1403, 0
          %v1463 = vsel %vm1294, %v1408, 0
          %v1466 = vsel %vm1294, %v1413, 0
          %v1469 = vsel %vm1294, %v1418, 0
          %v1472 = vsel %vm1294, %v1423, 0
          %v1475 = vsel %vm1294, %v1428, 0
          %v1478 = vsel %vm1294, %v1433, 0
          %v1481 = vsel %vm1294, %v1438, 0
          %v1484 = vsel %vm1294, %v1443, 0
          %v1487 = vsel %vm1294, %v1448, 0
          %v1490 = vsel %vm1294, %v1453, 0
          %1492 = vmatprep.subr.mxu0 0.0
          %1493 = vmatpush1.xpose.msra.mxu0 %v1296
          %1494 = vmatprep.subr.mxu0 0.0
          %1495 = vmatpush1.xpose.msra.mxu0 %v1299
          %1496 = vmatprep.subr.mxu0 0.0
          %1497 = vmatpush1.xpose.msra.mxu0 %v1302
          %1498 = vmatprep.subr.mxu0 0.0
          %1499 = vmatpush1.xpose.msra.mxu0 %v1305
          %1500 = vmatprep.subr.mxu0 0.0
          %1501 = vmatpush1.xpose.msra.mxu0 %v1308
          %1502 = vmatprep.subr.mxu0 0.0
          %1503 = vmatpush1.xpose.msra.mxu0 %v1311
          %1504 = vmatprep.subr.mxu0 0.0
          %1505 = vmatpush1.xpose.msra.mxu0 %v1314
          %1506 = vmatprep.subr.mxu0 0.0
          %1507 = vmatpush1.xpose.msra.mxu0 %v1317
          %1508 = vmatprep.subr.mxu0 0.0
          %1509 = vmatpush1.xpose.msra.mxu0 %v1320
          %1510 = vmatprep.subr.mxu0 0.0
          %1511 = vmatpush1.xpose.msra.mxu0 %v1323
          %1512 = vmatprep.subr.mxu0 0.0
          %1513 = vmatpush1.xpose.msra.mxu0 %v1326
          %1514 = vmatprep.subr.mxu0 0.0
          %1515 = vmatpush1.xpose.msra.mxu0 %v1329
          %1516 = vmatprep.subr.mxu0 0.0
          %1517 = vmatpush1.xpose.msra.mxu0 0.0
          %1518 = vmatprep.subr.mxu0 0.0
          %1519 = vmatpush1.xpose.msra.mxu0 0.0
          %1520 = vmatprep.subr.mxu0 0.0
          %1521 = vmatpush1.xpose.msra.mxu0 0.0
          %1522 = vmatprep.subr.mxu0 0.0
          %1523 = vmatpush1.xpose.msra.mxu0 0.0
          %1524 = vmatprep.subr.mxu0 0.0
          %1525 = vmatpush1.xpose.msra.mxu0 0.0
          %1526 = vmatprep.subr.mxu0 0.0
          %1527 = vmatpush1.xpose.msra.mxu0 0.0
          %1528 = vmatprep.subr.mxu0 0.0
          %1529 = vmatpush1.xpose.msra.mxu0 0.0
          %1530 = vmatprep.subr.mxu0 0.0
          %1531 = vmatpush1.xpose.msra.mxu0 0.0
          %1532 = vmatprep.subr.mxu0 0.0
          %1533 = vmatpush1.xpose.msra.mxu0 0.0
          %1534 = vmatprep.subr.mxu0 0.0
          %1535 = vmatpush1.xpose.msra.mxu0 0.0
          %1536 = vmatprep.subr.mxu0 0.0
          %1537 = vmatpush1.xpose.msra.mxu0 0.0
          %1538 = vmatprep.subr.mxu0 0.0
          %1539 = vmatpush1.xpose.msra.mxu0 0.0
          %1540 = vmatprep.subr.mxu0 0.0
          %1541 = vmatpush1.xpose.msra.mxu0 0.0
          %1542 = vmatprep.subr.mxu0 0.0
          %1543 = vmatpush1.xpose.msra.mxu0 0.0
          %1544 = vmatprep.subr.mxu0 0.0
          %1545 = vmatpush1.xpose.msra.mxu0 0.0
          %1546 = vmatprep.subr.mxu0 0.0
          %1547 = vmatpush1.xpose.msra.mxu0 0.0
          %1548 = vmatprep.subr.mxu0 0.0
          %1549 = vmatpush1.xpose.msra.mxu0 0.0
          %1550 = vmatprep.subr.mxu0 0.0
          %1551 = vmatpush1.xpose.msra.mxu0 0.0
          %1552 = vmatprep.subr.mxu0 0.0
          %1553 = vmatpush1.xpose.msra.mxu0 0.0
          %1554 = vmatprep.subr.mxu0 0.0
          %1555 = vmatpush1.xpose.msra.mxu0 0.0
          %1556 = vmatprep.mubr.f32.mxu0 0.0
          %1557 = vmatmul.mubr.f32.gmra.mrb[0].mxu0 %v1457
          %v1558 = vpop.f32.mrb[0].mxu0
          %v1559 = vadd.f32 0.0, %v1558
          %v1560 = vpop.f32.mrb[0].mxu0
          %1561 = vmatprep.mubr.f32.mxu0 0.0
          %1562 = vmatmul.mubr.f32.gmra.mrb[0].mxu0 %v1460
          %v1563 = vpop.f32.mrb[0].mxu0
          %v1564 = vadd.f32 0.0, %v1563
          %v1565 = vpop.f32.mrb[0].mxu0
          %1566 = vmatprep.mubr.f32.mxu0 0.0
          %1567 = vmatmul.mubr.f32.gmra.mrb[0].mxu0 %v1463
          %v1568 = vpop.f32.mrb[0].mxu0
          %v1569 = vadd.f32 0.0, %v1568
          %v1570 = vpop.f32.mrb[0].mxu0
          %1571 = vmatprep.mubr.f32.mxu0 0.0
          %1572 = vmatmul.mubr.f32.gmra.mrb[0].mxu0 %v1466
          %v1573 = vpop.f32.mrb[0].mxu0
          %v1574 = vadd.f32 0.0, %v1573
          %v1575 = vpop.f32.mrb[0].mxu0
          %1576 = vmatprep.mubr.f32.mxu0 0.0
          %1577 = vmatmul.mubr.f32.gmra.mrb[0].mxu0 %v1469
          %v1578 = vpop.f32.mrb[0].mxu0
          %v1579 = vadd.f32 0.0, %v1578
          %v1580 = vpop.f32.mrb[0].mxu0
          %1581 = vmatprep.mubr.f32.mxu0 0.0
          %1582 = vmatmul.mubr.f32.gmra.mrb[0].mxu0 %v1472
          %v1583 = vpop.f32.mrb[0].mxu0
          %v1584 = vadd.f32 0.0, %v1583
          %v1585 = vpop.f32.mrb[0].mxu0
          %1586 = vmatprep.mubr.f32.mxu0 0.0
          %1587 = vmatmul.mubr.f32.gmra.mrb[0].mxu0 %v1475
          %v1588 = vpop.f32.mrb[0].mxu0
          %v1589 = vadd.f32 0.0, %v1588
          %v1590 = vpop.f32.mrb[0].mxu0
          %1591 = vmatprep.mubr.f32.mxu0 0.0
          %1592 = vmatmul.mubr.f32.gmra.mrb[0].mxu0 %v1478
          %v1593 = vpop.f32.mrb[0].mxu0
          %v1594 = vadd.f32 0.0, %v1593
          %v1595 = vpop.f32.mrb[0].mxu0
          %1596 = vmatprep.mubr.f32.mxu0 0.0
          %1597 = vmatmul.mubr.f32.gmra.mrb[0].mxu0 %v1481
          %v1598 = vpop.f32.mrb[0].mxu0
          %v1599 = vadd.f32 0.0, %v1598
          %v1600 = vpop.f32.mrb[0].mxu0
          %1601 = vmatprep.mubr.f32.mxu0 0.0
          %1602 = vmatmul.mubr.f32.gmra.mrb[0].mxu0 %v1484
          %v1603 = vpop.f32.mrb[0].mxu0
          %v1604 = vadd.f32 0.0, %v1603
          %v1605 = vpop.f32.mrb[0].mxu0
          %1606 = vmatprep.mubr.f32.mxu0 0.0
          %1607 = vmatmul.mubr.f32.gmra.mrb[0].mxu0 %v1487
          %v1608 = vpop.f32.mrb[0].mxu0
          %v1609 = vadd.f32 0.0, %v1608
          %v1610 = vpop.f32.mrb[0].mxu0
          %1611 = vmatprep.mubr.f32.mxu0 0.0
          %1612 = vmatmul.mubr.f32.gmra.mrb[0].mxu0 %v1490
          %v1613 = vpop.f32.mrb[0].mxu0
          %v1614 = vadd.f32 0.0, %v1613
          %v1615 = vpop.f32.mrb[0].mxu0
          %1616 = vdwg.mxu0
          %v1617 = vld [vmem:[%s4] sm:$0xff]
          %v1618 = vld [vmem:[%s4 + $0x8] sm:$0xff]
          %v1619 = vld [vmem:[%s4 + $0x10] sm:$0xff]
          %v1620 = vld [vmem:[%s4 + $0x18] sm:$0xff]
          %v1621 = vld [vmem:[%s4 + $0x20] sm:$0xff]
          %v1622 = vld [vmem:[%s4 + $0x28] sm:$0xff]
          %v1623 = vld [vmem:[%s4 + $0x30] sm:$0xff]
          %v1624 = vld [vmem:[%s4 + $0x38] sm:$0xff]
          %v1625 = vld [vmem:[%s4 + $0x40] sm:$0xff]
          %v1626 = vld [vmem:[%s4 + $0x48] sm:$0xff]
          %v1627 = vld [vmem:[%s4 + $0x50] sm:$0xff]
          %v1628 = vld [vmem:[%s4 + $0x58] sm:$0xff]
          %v1629 = vadd.f32 %v1617, %v1559
          %v1630 = vadd.f32 %v1618, %v1564
          %v1631 = vadd.f32 %v1619, %v1569
          %v1632 = vadd.f32 %v1620, %v1574
          %v1633 = vadd.f32 %v1621, %v1579
          %v1634 = vadd.f32 %v1622, %v1584
          %v1635 = vadd.f32 %v1623, %v1589
          %v1636 = vadd.f32 %v1624, %v1594
          %v1637 = vadd.f32 %v1625, %v1599
          %v1638 = vadd.f32 %v1626, %v1604
          %v1639 = vadd.f32 %v1627, %v1609
          %v1640 = vadd.f32 %v1628, %v1614
          %v1641 = vpack.c.bf16 %v1630, %v1629
          %v1642 = vpack.c.bf16 %v1632, %v1631
          %v1643 = vpack.c.bf16 %v1634, %v1633
          %v1644 = vpack.c.bf16 %v1636, %v1635
          %v1645 = vpack.c.bf16 %v1638, %v1637
          %v1646 = vpack.c.bf16 %v1640, %v1639
          %vm1647 = vcmask 785408
          %1648 = vst.msk [vmem:[#allocation3] sm:$0xff] %vm1647, %v1641
          %1649 = vst.msk [vmem:[#allocation3 + $0x8] sm:$0xff] %vm1647, %v1642
          %1650 = vst.msk [vmem:[#allocation3 + $0x10] sm:$0xff] %vm1647, %v1643
          %1651 = vst.msk [vmem:[#allocation3 + $0x18] sm:$0xff] %vm1647, %v1644
          %1652 = vst.msk [vmem:[#allocation3 + $0x20] sm:$0xff] %vm1647, %v1645
          %1653 = vst.msk [vmem:[#allocation3 + $0x28] sm:$0xff] %vm1647, %v1646
        $region92: #{tpu_custom_call.1} parent=87 // pred_fallthru
          _
        %v1654 = vld [vmem:[#allocation2] sm:$0xff]
        %v1655 = vpack.c.bf16 %v1654, %v1654
        %v1656 = vld [vmem:[%s729] sm:$0xff]
        %v1657 = vld [vmem:[%s729 + $0x8] sm:$0xff]
        %v1658 = vld [vmem:[%s729 + $0x10] sm:$0xff]
        %v1659 = vld [vmem:[%s729 + $0x18] sm:$0xff]
        %v1660 = vld [vmem:[%s729 + $0x20] sm:$0xff]
        %v1661 = vld [vmem:[%s729 + $0x28] sm:$0xff]
        %v1662 = vld [vmem:[%s748] sm:$0x3]
        %v1664 = vlaneseq
        %v1665 = vshrl.u32 %v1664, 7
        %v1666 = vsub.s32 0, %v1665
        %v1667 = vrot.slane %v1662, %v1666
        %v1668 = vlaneseq
        %v1669 = vshrl.u32 %v1668, 7
        %v1670 = vsub.s32 1, %v1669
        %v1671 = vrot.slane %v1662, %v1670
        %v1680 = vunpack.c.l.b16 %v1656
        %v1681 = vunpack.c.h.b16 %v1656
        %v1682 = vunpack.c.l.b16 %v1657
        %v1683 = vunpack.c.h.b16 %v1657
        %v1684 = vunpack.c.l.b16 %v1658
        %v1685 = vunpack.c.h.b16 %v1658
        %v1686 = vunpack.c.l.b16 %v1659
        %v1687 = vunpack.c.h.b16 %v1659
        %v1688 = vunpack.c.l.b16 %v1660
        %v1689 = vunpack.c.h.b16 %v1660
        %v1690 = vunpack.c.l.b16 %v1661
        %v1691 = vunpack.c.h.b16 %v1661
        %v1692 = vpack.c.b16 %v1682, %v1680
        %v1693 = vpack.c.b16 %v1683, %v1681
        %v1694 = vpack.c.b16 %v1686, %v1684
        %v1695 = vpack.c.b16 %v1687, %v1685
        %v1696 = vpack.c.b16 %v1690, %v1688
        %v1697 = vpack.c.b16 %v1691, %v1689
        %vm1704 = vcmask 392192
        %v1706 = vsel %vm1704, %v1655, 0
        %1708 = vmatprep.subr.bf16.mxu0 %v1693
        %1709 = vmatpush1.bf16.msra.mxu0 %v1692
        %1710 = vmatprep.subr.bf16.mxu0 %v1695
        %1711 = vmatpush1.bf16.msra.mxu0 %v1694
        %1712 = vmatprep.subr.bf16.mxu0 %v1697
        %1713 = vmatpush1.bf16.msra.mxu0 %v1696
        %1714 = vmatprep.subr.bf16.mxu0 0
        %1715 = vmatpush1.bf16.msra.mxu0 0
        %1716 = vmatprep.subr.bf16.mxu0 0
        %1717 = vmatpush1.bf16.msra.mxu0 0
        %1718 = vmatprep.subr.bf16.mxu0 0
        %1719 = vmatpush1.bf16.msra.mxu0 0
        %1720 = vmatprep.subr.bf16.mxu0 0
        %1721 = vmatpush1.bf16.msra.mxu0 0
        %1722 = vmatprep.subr.bf16.mxu0 0
        %1723 = vmatpush1.bf16.msra.mxu0 0
        %1724 = vmatprep.subr.bf16.mxu0 0
        %1725 = vmatpush1.bf16.msra.mxu0 0
        %1726 = vmatprep.subr.bf16.mxu0 0
        %1727 = vmatpush1.bf16.msra.mxu0 0
        %1728 = vmatprep.subr.bf16.mxu0 0
        %1729 = vmatpush1.bf16.msra.mxu0 0
        %1730 = vmatprep.subr.bf16.mxu0 0
        %1731 = vmatpush1.bf16.msra.mxu0 0
        %1732 = vmatprep.subr.bf16.mxu0 0
        %1733 = vmatpush1.bf16.msra.mxu0 0
        %1734 = vmatprep.subr.bf16.mxu0 0
        %1735 = vmatpush1.bf16.msra.mxu0 0
        %1736 = vmatprep.subr.bf16.mxu0 0
        %1737 = vmatpush1.bf16.msra.mxu0 0
        %1738 = vmatprep.subr.bf16.mxu0 0
        %1739 = vmatpush1.bf16.msra.mxu0 0
        %1740 = vmatprep.mubr.bf16.mxu0 0
        %1741 = vmatmul.mubr.bf16.gmra.mrb[0].mxu0 %v1706
        %v1742 = vpop.f32.mrb[0].mxu0
        %v1743 = vadd.f32 %v1667, %v1742
        %v1744 = vpop.f32.mrb[0].mxu0
        %v1745 = vadd.f32 %v1671, %v1744
        %v1746 = vpop.f32.mrb[0].mxu0
        %v1747 = vpop.f32.mrb[0].mxu0
        %1748 = vdwg.mxu0
        %v1749 = vmul.f32 %v1743, 0.5
        %vm1750 = vcmask 64512
        %v1752 = vsel %vm1750, %v772, 0
        %v1755 = vsel %vm1750, %v773, 0
        %v1758 = vsel %vm1750, %v774, 0
        %v1761 = vsel %vm1750, %v775, 0
        %v1764 = vsel %vm1750, %v776, 0
        %v1767 = vsel %vm1750, %v777, 0
        %v1770 = vsel %vm1750, %v778, 0
        %v1773 = vsel %vm1750, %v779, 0
        %v1776 = vsel %vm1750, %v780, 0
        %v1779 = vsel %vm1750, %v781, 0
        %v1782 = vsel %vm1750, %v782, 0
        %v1785 = vsel %vm1750, %v783, 0
        %1787 = vmatprep.subr.mxu0 0.0
        %1788 = vmatpush1.msra.mxu0 %v1749
        %1789 = vmatprep.subr.mxu0 0.0
        %1790 = vmatpush1.msra.mxu0 0.0
        %1791 = vmatprep.subr.mxu0 0.0
        %1792 = vmatpush1.msra.mxu0 0.0
        %1793 = vmatprep.subr.mxu0 0.0
        %1794 = vmatpush1.msra.mxu0 0.0
        %1795 = vmatprep.subr.mxu0 0.0
        %1796 = vmatpush1.msra.mxu0 0.0
        %1797 = vmatprep.subr.mxu0 0.0
        %1798 = vmatpush1.msra.mxu0 0.0
        %1799 = vmatprep.subr.mxu0 0.0
        %1800 = vmatpush1.msra.mxu0 0.0
        %1801 = vmatprep.subr.mxu0 0.0
        %1802 = vmatpush1.msra.mxu0 0.0
        %1803 = vmatprep.subr.mxu0 0.0
        %1804 = vmatpush1.msra.mxu0 0.0
        %1805 = vmatprep.subr.mxu0 0.0
        %1806 = vmatpush1.msra.mxu0 0.0
        %1807 = vmatprep.subr.mxu0 0.0
        %1808 = vmatpush1.msra.mxu0 0.0
        %1809 = vmatprep.subr.mxu0 0.0
        %1810 = vmatpush1.msra.mxu0 0.0
        %1811 = vmatprep.subr.mxu0 0.0
        %1812 = vmatpush1.msra.mxu0 0.0
        %1813 = vmatprep.subr.mxu0 0.0
        %1814 = vmatpush1.msra.mxu0 0.0
        %1815 = vmatprep.subr.mxu0 0.0
        %1816 = vmatpush1.msra.mxu0 0.0
        %1817 = vmatprep.subr.mxu0 0.0
        %1818 = vmatpush1.msra.mxu0 0.0
        %1819 = vmatprep.subr.mxu0 0.0
        %1820 = vmatpush1.msra.mxu0 0.0
        %1821 = vmatprep.subr.mxu0 0.0
        %1822 = vmatpush1.msra.mxu0 0.0
        %1823 = vmatprep.subr.mxu0 0.0
        %1824 = vmatpush1.msra.mxu0 0.0
        %1825 = vmatprep.subr.mxu0 0.0
        %1826 = vmatpush1.msra.mxu0 0.0
        %1827 = vmatprep.subr.mxu0 0.0
        %1828 = vmatpush1.msra.mxu0 0.0
        %1829 = vmatprep.subr.mxu0 0.0
        %1830 = vmatpush1.msra.mxu0 0.0
        %1831 = vmatprep.subr.mxu0 0.0
        %1832 = vmatpush1.msra.mxu0 0.0
        %1833 = vmatprep.subr.mxu0 0.0
        %1834 = vmatpush1.msra.mxu0 0.0
        %1835 = vmatprep.subr.mxu0 0.0
        %1836 = vmatpush1.msra.mxu0 0.0
        %1837 = vmatprep.subr.mxu0 0.0
        %1838 = vmatpush1.msra.mxu0 0.0
        %1839 = vmatprep.subr.mxu0 0.0
        %1840 = vmatpush1.msra.mxu0 0.0
        %1841 = vmatprep.subr.mxu0 0.0
        %1842 = vmatpush1.msra.mxu0 0.0
        %1843 = vmatprep.subr.mxu0 0.0
        %1844 = vmatpush1.msra.mxu0 0.0
        %1845 = vmatprep.subr.mxu0 0.0
        %1846 = vmatpush1.msra.mxu0 0.0
        %1847 = vmatprep.subr.mxu0 0.0
        %1848 = vmatpush1.msra.mxu0 0.0
        %1849 = vmatprep.subr.mxu0 0.0
        %1850 = vmatpush1.msra.mxu0 0.0
        %1851 = vmatprep.mubr.f32.mxu0 0.0
        %1852 = vmatmul.mubr.f32.gmra.mrb[0].mxu0 %v1752
        %v1853 = vpop.f32.mrb[0].mxu0
        %v1854 = vadd.f32 0.0, %v1853
        %v1855 = vpop.f32.mrb[0].mxu0
        %1856 = vmatprep.mubr.f32.mxu0 0.0
        %1857 = vmatmul.mubr.f32.gmra.mrb[0].mxu0 %v1755
        %v1858 = vpop.f32.mrb[0].mxu0
        %v1859 = vadd.f32 0.0, %v1858
        %v1860 = vpop.f32.mrb[0].mxu0
        %1861 = vmatprep.mubr.f32.mxu0 0.0
        %1862 = vmatmul.mubr.f32.gmra.mrb[0].mxu0 %v1758
        %v1863 = vpop.f32.mrb[0].mxu0
        %v1864 = vadd.f32 0.0, %v1863
        %v1865 = vpop.f32.mrb[0].mxu0
        %1866 = vmatprep.mubr.f32.mxu0 0.0
        %1867 = vmatmul.mubr.f32.gmra.mrb[0].mxu0 %v1761
        %v1868 = vpop.f32.mrb[0].mxu0
        %v1869 = vadd.f32 0.0, %v1868
        %v1870 = vpop.f32.mrb[0].mxu0
        %1871 = vmatprep.mubr.f32.mxu0 0.0
        %1872 = vmatmul.mubr.f32.gmra.mrb[0].mxu0 %v1764
        %v1873 = vpop.f32.mrb[0].mxu0
        %v1874 = vadd.f32 0.0, %v1873
        %v1875 = vpop.f32.mrb[0].mxu0
        %1876 = vmatprep.mubr.f32.mxu0 0.0
        %1877 = vmatmul.mubr.f32.gmra.mrb[0].mxu0 %v1767
        %v1878 = vpop.f32.mrb[0].mxu0
        %v1879 = vadd.f32 0.0, %v1878
        %v1880 = vpop.f32.mrb[0].mxu0
        %1881 = vmatprep.mubr.f32.mxu0 0.0
        %1882 = vmatmul.mubr.f32.gmra.mrb[0].mxu0 %v1770
        %v1883 = vpop.f32.mrb[0].mxu0
        %v1884 = vadd.f32 0.0, %v1883
        %v1885 = vpop.f32.mrb[0].mxu0
        %1886 = vmatprep.mubr.f32.mxu0 0.0
        %1887 = vmatmul.mubr.f32.gmra.mrb[0].mxu0 %v1773
        %v1888 = vpop.f32.mrb[0].mxu0
        %v1889 = vadd.f32 0.0, %v1888
        %v1890 = vpop.f32.mrb[0].mxu0
        %1891 = vmatprep.mubr.f32.mxu0 0.0
        %1892 = vmatmul.mubr.f32.gmra.mrb[0].mxu0 %v1776
        %v1893 = vpop.f32.mrb[0].mxu0
        %v1894 = vadd.f32 0.0, %v1893
        %v1895 = vpop.f32.mrb[0].mxu0
        %1896 = vmatprep.mubr.f32.mxu0 0.0
        %1897 = vmatmul.mubr.f32.gmra.mrb[0].mxu0 %v1779
        %v1898 = vpop.f32.mrb[0].mxu0
        %v1899 = vadd.f32 0.0, %v1898
        %v1900 = vpop.f32.mrb[0].mxu0
        %1901 = vmatprep.mubr.f32.mxu0 0.0
        %1902 = vmatmul.mubr.f32.gmra.mrb[0].mxu0 %v1782
        %v1903 = vpop.f32.mrb[0].mxu0
        %v1904 = vadd.f32 0.0, %v1903
        %v1905 = vpop.f32.mrb[0].mxu0
        %1906 = vmatprep.mubr.f32.mxu0 0.0
        %1907 = vmatmul.mubr.f32.gmra.mrb[0].mxu0 %v1785
        %v1908 = vpop.f32.mrb[0].mxu0
        %v1909 = vadd.f32 0.0, %v1908
        %v1910 = vpop.f32.mrb[0].mxu0
        %1911 = vdwg.mxu0
        %v1912 = vmul.f32 %v1854, %v784
        %v1913 = vmul.f32 %v1859, %v785
        %v1914 = vmul.f32 %v1864, %v786
        %v1915 = vmul.f32 %v1869, %v787
        %v1916 = vmul.f32 %v1874, %v788
        %v1917 = vmul.f32 %v1879, %v789
        %v1918 = vmul.f32 %v1884, %v790
        %v1919 = vmul.f32 %v1889, %v791
        %v1920 = vmul.f32 %v1894, %v792
        %v1921 = vmul.f32 %v1899, %v793
        %v1922 = vmul.f32 %v1904, %v794
        %v1923 = vmul.f32 %v1909, %v795
        %1925 = vrot.lane.b32.xlu0 %v1743, 80
        %v1926 = vpop.permute.xlu0 %1925
        %1928 = vmatprep.subr.mxu0 0.0
        %1929 = vmatpush1.msra.mxu0 %v1926
        %1930 = vmatprep.subr.mxu0 0.0
        %1931 = vmatpush1.msra.mxu0 0.0
        %1932 = vmatprep.subr.mxu0 0.0
        %1933 = vmatpush1.msra.mxu0 0.0
        %1934 = vmatprep.subr.mxu0 0.0
        %1935 = vmatpush1.msra.mxu0 0.0
        %1936 = vmatprep.subr.mxu0 0.0
        %1937 = vmatpush1.msra.mxu0 0.0
        %1938 = vmatprep.subr.mxu0 0.0
        %1939 = vmatpush1.msra.mxu0 0.0
        %1940 = vmatprep.subr.mxu0 0.0
        %1941 = vmatpush1.msra.mxu0 0.0
        %1942 = vmatprep.subr.mxu0 0.0
        %1943 = vmatpush1.msra.mxu0 0.0
        %1944 = vmatprep.subr.mxu0 0.0
        %1945 = vmatpush1.msra.mxu0 0.0
        %1946 = vmatprep.subr.mxu0 0.0
        %1947 = vmatpush1.msra.mxu0 0.0
        %1948 = vmatprep.subr.mxu0 0.0
        %1949 = vmatpush1.msra.mxu0 0.0
        %1950 = vmatprep.subr.mxu0 0.0
        %1951 = vmatpush1.msra.mxu0 0.0
        %1952 = vmatprep.subr.mxu0 0.0
        %1953 = vmatpush1.msra.mxu0 0.0
        %1954 = vmatprep.subr.mxu0 0.0
        %1955 = vmatpush1.msra.mxu0 0.0
        %1956 = vmatprep.subr.mxu0 0.0
        %1957 = vmatpush1.msra.mxu0 0.0
        %1958 = vmatprep.subr.mxu0 0.0
        %1959 = vmatpush1.msra.mxu0 0.0
        %1960 = vmatprep.subr.mxu0 0.0
        %1961 = vmatpush1.msra.mxu0 0.0
        %1962 = vmatprep.subr.mxu0 0.0
        %1963 = vmatpush1.msra.mxu0 0.0
        %1964 = vmatprep.subr.mxu0 0.0
        %1965 = vmatpush1.msra.mxu0 0.0
        %1966 = vmatprep.subr.mxu0 0.0
        %1967 = vmatpush1.msra.mxu0 0.0
        %1968 = vmatprep.subr.mxu0 0.0
        %1969 = vmatpush1.msra.mxu0 0.0
        %1970 = vmatprep.subr.mxu0 0.0
        %1971 = vmatpush1.msra.mxu0 0.0
        %1972 = vmatprep.subr.mxu0 0.0
        %1973 = vmatpush1.msra.mxu0 0.0
        %1974 = vmatprep.subr.mxu0 0.0
        %1975 = vmatpush1.msra.mxu0 0.0
        %1976 = vmatprep.subr.mxu0 0.0
        %1977 = vmatpush1.msra.mxu0 0.0
        %1978 = vmatprep.subr.mxu0 0.0
        %1979 = vmatpush1.msra.mxu0 0.0
        %1980 = vmatprep.subr.mxu0 0.0
        %1981 = vmatpush1.msra.mxu0 0.0
        %1982 = vmatprep.subr.mxu0 0.0
        %1983 = vmatpush1.msra.mxu0 0.0
        %1984 = vmatprep.subr.mxu0 0.0
        %1985 = vmatpush1.msra.mxu0 0.0
        %1986 = vmatprep.subr.mxu0 0.0
        %1987 = vmatpush1.msra.mxu0 0.0
        %1988 = vmatprep.subr.mxu0 0.0
        %1989 = vmatpush1.msra.mxu0 0.0
        %1990 = vmatprep.subr.mxu0 0.0
        %1991 = vmatpush1.msra.mxu0 0.0
        %1992 = vmatprep.mubr.f32.mxu0 0.0
        %1993 = vmatmul.mubr.f32.gmra.mrb[0].mxu0 %v1752
        %v1994 = vpop.f32.mrb[0].mxu0
        %v1995 = vadd.f32 0.0, %v1994
        %v1996 = vpop.f32.mrb[0].mxu0
        %1997 = vmatprep.mubr.f32.mxu0 0.0
        %1998 = vmatmul.mubr.f32.gmra.mrb[0].mxu0 %v1755
        %v1999 = vpop.f32.mrb[0].mxu0
        %v2000 = vadd.f32 0.0, %v1999
        %v2001 = vpop.f32.mrb[0].mxu0
        %2002 = vmatprep.mubr.f32.mxu0 0.0
        %2003 = vmatmul.mubr.f32.gmra.mrb[0].mxu0 %v1758
        %v2004 = vpop.f32.mrb[0].mxu0
        %v2005 = vadd.f32 0.0, %v2004
        %v2006 = vpop.f32.mrb[0].mxu0
        %2007 = vmatprep.mubr.f32.mxu0 0.0
        %2008 = vmatmul.mubr.f32.gmra.mrb[0].mxu0 %v1761
        %v2009 = vpop.f32.mrb[0].mxu0
        %v2010 = vadd.f32 0.0, %v2009
        %v2011 = vpop.f32.mrb[0].mxu0
        %2012 = vmatprep.mubr.f32.mxu0 0.0
        %2013 = vmatmul.mubr.f32.gmra.mrb[0].mxu0 %v1764
        %v2014 = vpop.f32.mrb[0].mxu0
        %v2015 = vadd.f32 0.0, %v2014
        %v2016 = vpop.f32.mrb[0].mxu0
        %2017 = vmatprep.mubr.f32.mxu0 0.0
        %2018 = vmatmul.mubr.f32.gmra.mrb[0].mxu0 %v1767
        %v2019 = vpop.f32.mrb[0].mxu0
        %v2020 = vadd.f32 0.0, %v2019
        %v2021 = vpop.f32.mrb[0].mxu0
        %2022 = vmatprep.mubr.f32.mxu0 0.0
        %2023 = vmatmul.mubr.f32.gmra.mrb[0].mxu0 %v1770
        %v2024 = vpop.f32.mrb[0].mxu0
        %v2025 = vadd.f32 0.0, %v2024
        %v2026 = vpop.f32.mrb[0].mxu0
        %2027 = vmatprep.mubr.f32.mxu0 0.0
        %2028 = vmatmul.mubr.f32.gmra.mrb[0].mxu0 %v1773
        %v2029 = vpop.f32.mrb[0].mxu0
        %v2030 = vadd.f32 0.0, %v2029
        %v2031 = vpop.f32.mrb[0].mxu0
        %2032 = vmatprep.mubr.f32.mxu0 0.0
        %2033 = vmatmul.mubr.f32.gmra.mrb[0].mxu0 %v1776
        %v2034 = vpop.f32.mrb[0].mxu0
        %v2035 = vadd.f32 0.0, %v2034
        %v2036 = vpop.f32.mrb[0].mxu0
        %2037 = vmatprep.mubr.f32.mxu0 0.0
        %2038 = vmatmul.mubr.f32.gmra.mrb[0].mxu0 %v1779
        %v2039 = vpop.f32.mrb[0].mxu0
        %v2040 = vadd.f32 0.0, %v2039
        %v2041 = vpop.f32.mrb[0].mxu0
        %2042 = vmatprep.mubr.f32.mxu0 0.0
        %2043 = vmatmul.mubr.f32.gmra.mrb[0].mxu0 %v1782
        %v2044 = vpop.f32.mrb[0].mxu0
        %v2045 = vadd.f32 0.0, %v2044
        %v2046 = vpop.f32.mrb[0].mxu0
        %2047 = vmatprep.mubr.f32.mxu0 0.0
        %2048 = vmatmul.mubr.f32.gmra.mrb[0].mxu0 %v1785
        %v2049 = vpop.f32.mrb[0].mxu0
        %v2050 = vadd.f32 0.0, %v2049
        %v2051 = vpop.f32.mrb[0].mxu0
        %2052 = vdwg.mxu0
        %2054 = vrot.lane.b32.xlu0 %v1743, 32
        %v2055 = vpop.permute.xlu0 %2054
        %2056 = vrot.lane.b32.xlu0 %v1745, 32
        %v2057 = vpop.permute.xlu0 %2056
        %vm2058 = vcmask 261120
        %v2059 = vsel %vm2058, %v2055, %v2057
        %2061 = vmatprep.subr.mxu0 0.0
        %2062 = vmatpush1.msra.mxu0 %v2059
        %2063 = vmatprep.subr.mxu0 0.0
        %2064 = vmatpush1.msra.mxu0 0.0
        %2065 = vmatprep.subr.mxu0 0.0
        %2066 = vmatpush1.msra.mxu0 0.0
        %2067 = vmatprep.subr.mxu0 0.0
        %2068 = vmatpush1.msra.mxu0 0.0
        %2069 = vmatprep.subr.mxu0 0.0
        %2070 = vmatpush1.msra.mxu0 0.0
        %2071 = vmatprep.subr.mxu0 0.0
        %2072 = vmatpush1.msra.mxu0 0.0
        %2073 = vmatprep.subr.mxu0 0.0
        %2074 = vmatpush1.msra.mxu0 0.0
        %2075 = vmatprep.subr.mxu0 0.0
        %2076 = vmatpush1.msra.mxu0 0.0
        %2077 = vmatprep.subr.mxu0 0.0
        %2078 = vmatpush1.msra.mxu0 0.0
        %2079 = vmatprep.subr.mxu0 0.0
        %2080 = vmatpush1.msra.mxu0 0.0
        %2081 = vmatprep.subr.mxu0 0.0
        %2082 = vmatpush1.msra.mxu0 0.0
        %2083 = vmatprep.subr.mxu0 0.0
        %2084 = vmatpush1.msra.mxu0 0.0
        %2085 = vmatprep.subr.mxu0 0.0
        %2086 = vmatpush1.msra.mxu0 0.0
        %2087 = vmatprep.subr.mxu0 0.0
        %2088 = vmatpush1.msra.mxu0 0.0
        %2089 = vmatprep.subr.mxu0 0.0
        %2090 = vmatpush1.msra.mxu0 0.0
        %2091 = vmatprep.subr.mxu0 0.0
        %2092 = vmatpush1.msra.mxu0 0.0
        %2093 = vmatprep.subr.mxu0 0.0
        %2094 = vmatpush1.msra.mxu0 0.0
        %2095 = vmatprep.subr.mxu0 0.0
        %2096 = vmatpush1.msra.mxu0 0.0
        %2097 = vmatprep.subr.mxu0 0.0
        %2098 = vmatpush1.msra.mxu0 0.0
        %2099 = vmatprep.subr.mxu0 0.0
        %2100 = vmatpush1.msra.mxu0 0.0
        %2101 = vmatprep.subr.mxu0 0.0
        %2102 = vmatpush1.msra.mxu0 0.0
        %2103 = vmatprep.subr.mxu0 0.0
        %2104 = vmatpush1.msra.mxu0 0.0
        %2105 = vmatprep.subr.mxu0 0.0
        %2106 = vmatpush1.msra.mxu0 0.0
        %2107 = vmatprep.subr.mxu0 0.0
        %2108 = vmatpush1.msra.mxu0 0.0
        %2109 = vmatprep.subr.mxu0 0.0
        %2110 = vmatpush1.msra.mxu0 0.0
        %2111 = vmatprep.subr.mxu0 0.0
        %2112 = vmatpush1.msra.mxu0 0.0
        %2113 = vmatprep.subr.mxu0 0.0
        %2114 = vmatpush1.msra.mxu0 0.0
        %2115 = vmatprep.subr.mxu0 0.0
        %2116 = vmatpush1.msra.mxu0 0.0
        %2117 = vmatprep.subr.mxu0 0.0
        %2118 = vmatpush1.msra.mxu0 0.0
        %2119 = vmatprep.subr.mxu0 0.0
        %2120 = vmatpush1.msra.mxu0 0.0
        %2121 = vmatprep.subr.mxu0 0.0
        %2122 = vmatpush1.msra.mxu0 0.0
        %2123 = vmatprep.subr.mxu0 0.0
        %2124 = vmatpush1.msra.mxu0 0.0
        %2125 = vmatprep.mubr.f32.mxu0 0.0
        %2126 = vmatmul.mubr.f32.gmra.mrb[0].mxu0 %v1752
        %v2127 = vpop.f32.mrb[0].mxu0
        %v2128 = vadd.f32 0.0, %v2127
        %v2129 = vpop.f32.mrb[0].mxu0
        %2130 = vmatprep.mubr.f32.mxu0 0.0
        %2131 = vmatmul.mubr.f32.gmra.mrb[0].mxu0 %v1755
        %v2132 = vpop.f32.mrb[0].mxu0
        %v2133 = vadd.f32 0.0, %v2132
        %v2134 = vpop.f32.mrb[0].mxu0
        %2135 = vmatprep.mubr.f32.mxu0 0.0
        %2136 = vmatmul.mubr.f32.gmra.mrb[0].mxu0 %v1758
        %v2137 = vpop.f32.mrb[0].mxu0
        %v2138 = vadd.f32 0.0, %v2137
        %v2139 = vpop.f32.mrb[0].mxu0
        %2140 = vmatprep.mubr.f32.mxu0 0.0
        %2141 = vmatmul.mubr.f32.gmra.mrb[0].mxu0 %v1761
        %v2142 = vpop.f32.mrb[0].mxu0
        %v2143 = vadd.f32 0.0, %v2142
        %v2144 = vpop.f32.mrb[0].mxu0
        %2145 = vmatprep.mubr.f32.mxu0 0.0
        %2146 = vmatmul.mubr.f32.gmra.mrb[0].mxu0 %v1764
        %v2147 = vpop.f32.mrb[0].mxu0
        %v2148 = vadd.f32 0.0, %v2147
        %v2149 = vpop.f32.mrb[0].mxu0
        %2150 = vmatprep.mubr.f32.mxu0 0.0
        %2151 = vmatmul.mubr.f32.gmra.mrb[0].mxu0 %v1767
        %v2152 = vpop.f32.mrb[0].mxu0
        %v2153 = vadd.f32 0.0, %v2152
        %v2154 = vpop.f32.mrb[0].mxu0
        %2155 = vmatprep.mubr.f32.mxu0 0.0
        %2156 = vmatmul.mubr.f32.gmra.mrb[0].mxu0 %v1770
        %v2157 = vpop.f32.mrb[0].mxu0
        %v2158 = vadd.f32 0.0, %v2157
        %v2159 = vpop.f32.mrb[0].mxu0
        %2160 = vmatprep.mubr.f32.mxu0 0.0
        %2161 = vmatmul.mubr.f32.gmra.mrb[0].mxu0 %v1773
        %v2162 = vpop.f32.mrb[0].mxu0
        %v2163 = vadd.f32 0.0, %v2162
        %v2164 = vpop.f32.mrb[0].mxu0
        %2165 = vmatprep.mubr.f32.mxu0 0.0
        %2166 = vmatmul.mubr.f32.gmra.mrb[0].mxu0 %v1776
        %v2167 = vpop.f32.mrb[0].mxu0
        %v2168 = vadd.f32 0.0, %v2167
        %v2169 = vpop.f32.mrb[0].mxu0
        %2170 = vmatprep.mubr.f32.mxu0 0.0
        %2171 = vmatmul.mubr.f32.gmra.mrb[0].mxu0 %v1779
        %v2172 = vpop.f32.mrb[0].mxu0
        %v2173 = vadd.f32 0.0, %v2172
        %v2174 = vpop.f32.mrb[0].mxu0
        %2175 = vmatprep.mubr.f32.mxu0 0.0
        %2176 = vmatmul.mubr.f32.gmra.mrb[0].mxu0 %v1782
        %v2177 = vpop.f32.mrb[0].mxu0
        %v2178 = vadd.f32 0.0, %v2177
        %v2179 = vpop.f32.mrb[0].mxu0
        %2180 = vmatprep.mubr.f32.mxu0 0.0
        %2181 = vmatmul.mubr.f32.gmra.mrb[0].mxu0 %v1785
        %v2182 = vpop.f32.mrb[0].mxu0
        %v2183 = vadd.f32 0.0, %v2182
        %v2184 = vpop.f32.mrb[0].mxu0
        %2185 = vdwg.mxu0
        %v2186 = vmul.f32 %v2128, %v784
        %v2187 = vmul.f32 %v2133, %v785
        %v2188 = vmul.f32 %v2138, %v786
        %v2189 = vmul.f32 %v2143, %v787
        %v2190 = vmul.f32 %v2148, %v788
        %v2191 = vmul.f32 %v2153, %v789
        %v2192 = vmul.f32 %v2158, %v790
        %v2193 = vmul.f32 %v2163, %v791
        %v2194 = vmul.f32 %v2168, %v792
        %v2195 = vmul.f32 %v2173, %v793
        %v2196 = vmul.f32 %v2178, %v794
        %v2197 = vmul.f32 %v2183, %v795
        %v2198 = vpack.c.bf16 %v1913, %v1912
        %v2199 = vpack.c.bf16 %v1915, %v1914
        %v2200 = vpack.c.bf16 %v1917, %v1916
        %v2201 = vpack.c.bf16 %v1919, %v1918
        %v2202 = vpack.c.bf16 %v1921, %v1920
        %v2203 = vpack.c.bf16 %v1923, %v1922
        %v2204 = vpack.c.bf16 %v2000, %v1995
        %v2205 = vpack.c.bf16 %v2010, %v2005
        %v2206 = vpack.c.bf16 %v2020, %v2015
        %v2207 = vpack.c.bf16 %v2030, %v2025
        %v2208 = vpack.c.bf16 %v2040, %v2035
        %v2209 = vpack.c.bf16 %v2050, %v2045
        %v2210 = vld [vmem:[#allocation3] sm:$0xff]
        %v2211 = vld [vmem:[#allocation3 + $0x8] sm:$0xff]
        %v2212 = vld [vmem:[#allocation3 + $0x10] sm:$0xff]
        %v2213 = vld [vmem:[#allocation3 + $0x18] sm:$0xff]
        %v2214 = vld [vmem:[#allocation3 + $0x20] sm:$0xff]
        %v2215 = vld [vmem:[#allocation3 + $0x28] sm:$0xff]
        %v2216 = vunpack.c.l.bf16 %v2210
        %v2217 = vunpack.c.h.bf16 %v2210
        %v2218 = vunpack.c.l.bf16 %v2211
        %v2219 = vunpack.c.h.bf16 %v2211
        %v2220 = vunpack.c.l.bf16 %v2212
        %v2221 = vunpack.c.h.bf16 %v2212
        %v2222 = vunpack.c.l.bf16 %v2213
        %v2223 = vunpack.c.h.bf16 %v2213
        %v2224 = vunpack.c.l.bf16 %v2214
        %v2225 = vunpack.c.h.bf16 %v2214
        %v2226 = vunpack.c.l.bf16 %v2215
        %v2227 = vunpack.c.h.bf16 %v2215
        %v2229 = vsel %vm1704, %v2198, 0
        %v2232 = vsel %vm1704, %v2199, 0
        %v2235 = vsel %vm1704, %v2200, 0
        %v2238 = vsel %vm1704, %v2201, 0
        %v2241 = vsel %vm1704, %v2202, 0
        %v2244 = vsel %vm1704, %v2203, 0
        %v2247 = vsel %vm1704, %v2204, 0
        %v2250 = vsel %vm1704, %v2205, 0
        %v2253 = vsel %vm1704, %v2206, 0
        %v2256 = vsel %vm1704, %v2207, 0
        %v2259 = vsel %vm1704, %v2208, 0
        %v2262 = vsel %vm1704, %v2209, 0
        %2264 = vmatprep.subr.bf16.mxu0 0
        %2265 = vmatpush1.bf16.xpose.msra.mxu0 %v2247
        %2266 = vmatprep.subr.bf16.mxu0 0
        %2267 = vmatpush1.bf16.xpose.msra.mxu0 %v2250
        %2268 = vmatprep.subr.bf16.mxu0 0
        %2269 = vmatpush1.bf16.xpose.msra.mxu0 %v2253
        %2270 = vmatprep.subr.bf16.mxu0 0
        %2271 = vmatpush1.bf16.xpose.msra.mxu0 %v2256
        %2272 = vmatprep.subr.bf16.mxu0 0
        %2273 = vmatpush1.bf16.xpose.msra.mxu0 %v2259
        %2274 = vmatprep.subr.bf16.mxu0 0
        %2275 = vmatpush1.bf16.xpose.msra.mxu0 %v2262
        %2276 = vmatprep.subr.bf16.mxu0 0
        %2277 = vmatpush1.bf16.xpose.msra.mxu0 0
        %2278 = vmatprep.subr.bf16.mxu0 0
        %2279 = vmatpush1.bf16.xpose.msra.mxu0 0
        %2280 = vmatprep.subr.bf16.mxu0 0
        %2281 = vmatpush1.bf16.xpose.msra.mxu0 0
        %2282 = vmatprep.subr.bf16.mxu0 0
        %2283 = vmatpush1.bf16.xpose.msra.mxu0 0
        %2284 = vmatprep.subr.bf16.mxu0 0
        %2285 = vmatpush1.bf16.xpose.msra.mxu0 0
        %2286 = vmatprep.subr.bf16.mxu0 0
        %2287 = vmatpush1.bf16.xpose.msra.mxu0 0
        %2288 = vmatprep.subr.bf16.mxu0 0
        %2289 = vmatpush1.bf16.xpose.msra.mxu0 0
        %2290 = vmatprep.subr.bf16.mxu0 0
        %2291 = vmatpush1.bf16.xpose.msra.mxu0 0
        %2292 = vmatprep.subr.bf16.mxu0 0
        %2293 = vmatpush1.bf16.xpose.msra.mxu0 0
        %2294 = vmatprep.subr.bf16.mxu0 0
        %2295 = vmatpush1.bf16.xpose.msra.mxu0 0
        %2296 = vmatprep.mubr.bf16.mxu0 0
        %2297 = vmatmul.mubr.bf16.gmra.mrb[0].mxu0 %v2229
        %v2298 = vpop.f32.mrb[0].mxu0
        %v2299 = vadd.f32 %v2216, %v2298
        %v2300 = vpop.f32.mrb[0].mxu0
        %v2301 = vpop.f32.mrb[0].mxu0
        %v2302 = vadd.f32 %v2217, %v2301
        %v2303 = vpop.f32.mrb[0].mxu0
        %2304 = vmatprep.mubr.bf16.mxu0 0
        %2305 = vmatmul.mubr.bf16.gmra.mrb[0].mxu0 %v2232
        %v2306 = vpop.f32.mrb[0].mxu0
        %v2307 = vadd.f32 %v2218, %v2306
        %v2308 = vpop.f32.mrb[0].mxu0
        %v2309 = vpop.f32.mrb[0].mxu0
        %v2310 = vadd.f32 %v2219, %v2309
        %v2311 = vpop.f32.mrb[0].mxu0
        %2312 = vmatprep.mubr.bf16.mxu0 0
        %2313 = vmatmul.mubr.bf16.gmra.mrb[0].mxu0 %v2235
        %v2314 = vpop.f32.mrb[0].mxu0
        %v2315 = vadd.f32 %v2220, %v2314
        %v2316 = vpop.f32.mrb[0].mxu0
        %v2317 = vpop.f32.mrb[0].mxu0
        %v2318 = vadd.f32 %v2221, %v2317
        %v2319 = vpop.f32.mrb[0].mxu0
        %2320 = vmatprep.mubr.bf16.mxu0 0
        %2321 = vmatmul.mubr.bf16.gmra.mrb[0].mxu0 %v2238
        %v2322 = vpop.f32.mrb[0].mxu0
        %v2323 = vadd.f32 %v2222, %v2322
        %v2324 = vpop.f32.mrb[0].mxu0
        %v2325 = vpop.f32.mrb[0].mxu0
        %v2326 = vadd.f32 %v2223, %v2325
        %v2327 = vpop.f32.mrb[0].mxu0
        %2328 = vmatprep.mubr.bf16.mxu0 0
        %2329 = vmatmul.mubr.bf16.gmra.mrb[0].mxu0 %v2241
        %v2330 = vpop.f32.mrb[0].mxu0
        %v2331 = vadd.f32 %v2224, %v2330
        %v2332 = vpop.f32.mrb[0].mxu0
        %v2333 = vpop.f32.mrb[0].mxu0
        %v2334 = vadd.f32 %v2225, %v2333
        %v2335 = vpop.f32.mrb[0].mxu0
        %2336 = vmatprep.mubr.bf16.mxu0 0
        %2337 = vmatmul.mubr.bf16.gmra.mrb[0].mxu0 %v2244
        %v2338 = vpop.f32.mrb[0].mxu0
        %v2339 = vadd.f32 %v2226, %v2338
        %v2340 = vpop.f32.mrb[0].mxu0
        %v2341 = vpop.f32.mrb[0].mxu0
        %v2342 = vadd.f32 %v2227, %v2341
        %v2343 = vpop.f32.mrb[0].mxu0
        %2344 = vdwg.mxu0
        %vm2345 = vcmask 785408
        %v2346 = vsel %vm2345, %v2299, -inf
        %2347 = vmax.xlane.f32.xlu0 %v2346
        %v2348 = vpop.xlane.xlu0 %2347
        %v2349 = vsel %vm2345, %v2302, -inf
        %2350 = vmax.xlane.f32.xlu0 %v2349
        %v2351 = vpop.xlane.xlu0 %2350
        %v2352 = vsel %vm2345, %v2307, -inf
        %2353 = vmax.xlane.f32.xlu0 %v2352
        %v2354 = vpop.xlane.xlu0 %2353
        %v2355 = vsel %vm2345, %v2310, -inf
        %2356 = vmax.xlane.f32.xlu0 %v2355
        %v2357 = vpop.xlane.xlu0 %2356
        %v2358 = vsel %vm2345, %v2315, -inf
        %2359 = vmax.xlane.f32.xlu0 %v2358
        %v2360 = vpop.xlane.xlu0 %2359
        %v2361 = vsel %vm2345, %v2318, -inf
        %2362 = vmax.xlane.f32.xlu0 %v2361
        %v2363 = vpop.xlane.xlu0 %2362
        %v2364 = vsel %vm2345, %v2323, -inf
        %2365 = vmax.xlane.f32.xlu0 %v2364
        %v2366 = vpop.xlane.xlu0 %2365
        %v2367 = vsel %vm2345, %v2326, -inf
        %2368 = vmax.xlane.f32.xlu0 %v2367
        %v2369 = vpop.xlane.xlu0 %2368
        %v2370 = vsel %vm2345, %v2331, -inf
        %2371 = vmax.xlane.f32.xlu0 %v2370
        %v2372 = vpop.xlane.xlu0 %2371
        %v2373 = vsel %vm2345, %v2334, -inf
        %2374 = vmax.xlane.f32.xlu0 %v2373
        %v2375 = vpop.xlane.xlu0 %2374
        %v2376 = vsel %vm2345, %v2339, -inf
        %2377 = vmax.xlane.f32.xlu0 %v2376
        %v2378 = vpop.xlane.xlu0 %2377
        %v2379 = vsel %vm2345, %v2342, -inf
        %2380 = vmax.xlane.f32.xlu0 %v2379
        %v2381 = vpop.xlane.xlu0 %2380
        %v2382 = vsub.f32 %v2299, %v2348
        %v2383 = vsub.f32 %v2302, %v2351
        %v2384 = vsub.f32 %v2307, %v2354
        %v2385 = vsub.f32 %v2310, %v2357
        %v2386 = vsub.f32 %v2315, %v2360
        %v2387 = vsub.f32 %v2318, %v2363
        %v2388 = vsub.f32 %v2323, %v2366
        %v2389 = vsub.f32 %v2326, %v2369
        %v2390 = vsub.f32 %v2331, %v2372
        %v2391 = vsub.f32 %v2334, %v2375
        %v2392 = vsub.f32 %v2339, %v2378
        %v2393 = vsub.f32 %v2342, %v2381
        %v2394 = vmul.f32 %v2382, 1.442695
        %v2395 = vpow.pop %v2394
        %v2396 = vmul.f32 %v2383, 1.442695
        %v2397 = vpow.pop %v2396
        %v2398 = vmul.f32 %v2384, 1.442695
        %v2399 = vpow.pop %v2398
        %v2400 = vmul.f32 %v2385, 1.442695
        %v2401 = vpow.pop %v2400
        %v2402 = vmul.f32 %v2386, 1.442695
        %v2403 = vpow.pop %v2402
        %v2404 = vmul.f32 %v2387, 1.442695
        %v2405 = vpow.pop %v2404
        %v2406 = vmul.f32 %v2388, 1.442695
        %v2407 = vpow.pop %v2406
        %v2408 = vmul.f32 %v2389, 1.442695
        %v2409 = vpow.pop %v2408
        %v2410 = vmul.f32 %v2390, 1.442695
        %v2411 = vpow.pop %v2410
        %v2412 = vmul.f32 %v2391, 1.442695
        %v2413 = vpow.pop %v2412
        %v2414 = vmul.f32 %v2392, 1.442695
        %v2415 = vpow.pop %v2414
        %v2416 = vmul.f32 %v2393, 1.442695
        %v2417 = vpow.pop %v2416
        %v2418 = vsel %vm2345, %v2395, 0.0
        %2419 = vadd.xlane.f32.xlu0 %v2418
        %v2420 = vpop.xlane.xlu0 %2419
        %v2421 = vsel %vm2345, %v2397, 0.0
        %2422 = vadd.xlane.f32.xlu0 %v2421
        %v2423 = vpop.xlane.xlu0 %2422
        %v2424 = vsel %vm2345, %v2399, 0.0
        %2425 = vadd.xlane.f32.xlu0 %v2424
        %v2426 = vpop.xlane.xlu0 %2425
        %v2427 = vsel %vm2345, %v2401, 0.0
        %2428 = vadd.xlane.f32.xlu0 %v2427
        %v2429 = vpop.xlane.xlu0 %2428
        %v2430 = vsel %vm2345, %v2403, 0.0
        %2431 = vadd.xlane.f32.xlu0 %v2430
        %v2432 = vpop.xlane.xlu0 %2431
        %v2433 = vsel %vm2345, %v2405, 0.0
        %2434 = vadd.xlane.f32.xlu0 %v2433
        %v2435 = vpop.xlane.xlu0 %2434
        %v2436 = vsel %vm2345, %v2407, 0.0
        %2437 = vadd.xlane.f32.xlu0 %v2436
        %v2438 = vpop.xlane.xlu0 %2437
        %v2439 = vsel %vm2345, %v2409, 0.0
        %2440 = vadd.xlane.f32.xlu0 %v2439
        %v2441 = vpop.xlane.xlu0 %2440
        %v2442 = vsel %vm2345, %v2411, 0.0
        %2443 = vadd.xlane.f32.xlu0 %v2442
        %v2444 = vpop.xlane.xlu0 %2443
        %v2445 = vsel %vm2345, %v2413, 0.0
        %2446 = vadd.xlane.f32.xlu0 %v2445
        %v2447 = vpop.xlane.xlu0 %2446
        %v2448 = vsel %vm2345, %v2415, 0.0
        %2449 = vadd.xlane.f32.xlu0 %v2448
        %v2450 = vpop.xlane.xlu0 %2449
        %v2451 = vsel %vm2345, %v2417, 0.0
        %2452 = vadd.xlane.f32.xlu0 %v2451
        %v2453 = vpop.xlane.xlu0 %2452
        %v2454 = vrcp.pop %v2420
        %v2455 = vrcp.pop %v2423
        %v2456 = vrcp.pop %v2426
        %v2457 = vrcp.pop %v2429
        %v2458 = vrcp.pop %v2432
        %v2459 = vrcp.pop %v2435
        %v2460 = vrcp.pop %v2438
        %v2461 = vrcp.pop %v2441
        %v2462 = vrcp.pop %v2444
        %v2463 = vrcp.pop %v2447
        %v2464 = vrcp.pop %v2450
        %v2465 = vrcp.pop %v2453
        %v2466 = vmul.f32 %v2395, %v2454
        %v2467 = vmul.f32 %v2397, %v2455
        %v2468 = vmul.f32 %v2399, %v2456
        %v2469 = vmul.f32 %v2401, %v2457
        %v2470 = vmul.f32 %v2403, %v2458
        %v2471 = vmul.f32 %v2405, %v2459
        %v2472 = vmul.f32 %v2407, %v2460
        %v2473 = vmul.f32 %v2409, %v2461
        %v2474 = vmul.f32 %v2411, %v2462
        %v2475 = vmul.f32 %v2413, %v2463
        %v2476 = vmul.f32 %v2415, %v2464
        %v2477 = vmul.f32 %v2417, %v2465
        %v2478 = vpack.c.bf16 %v2467, %v2466
        %v2479 = vpack.c.bf16 %v2469, %v2468
        %v2480 = vpack.c.bf16 %v2471, %v2470
        %v2481 = vpack.c.bf16 %v2473, %v2472
        %v2482 = vpack.c.bf16 %v2475, %v2474
        %v2483 = vpack.c.bf16 %v2477, %v2476
        %v2484 = vpack.c.bf16 %v2187, %v2186
        %v2485 = vpack.c.bf16 %v2189, %v2188
        %v2486 = vpack.c.bf16 %v2191, %v2190
        %v2487 = vpack.c.bf16 %v2193, %v2192
        %v2488 = vpack.c.bf16 %v2195, %v2194
        %v2489 = vpack.c.bf16 %v2197, %v2196
        %v2491 = vsel %vm2345, %v2478, 0
        %v2494 = vsel %vm2345, %v2479, 0
        %v2497 = vsel %vm2345, %v2480, 0
        %v2500 = vsel %vm2345, %v2481, 0
        %v2503 = vsel %vm2345, %v2482, 0
        %v2506 = vsel %vm2345, %v2483, 0
        %2508 = vmatprep.subr.bf16.mxu0 0
        %2509 = vmatpush1.bf16.msra.mxu0 %v2484
        %2510 = vmatprep.subr.bf16.mxu0 0
        %2511 = vmatpush1.bf16.msra.mxu0 %v2485
        %2512 = vmatprep.subr.bf16.mxu0 0
        %2513 = vmatpush1.bf16.msra.mxu0 %v2486
        %2514 = vmatprep.subr.bf16.mxu0 0
        %2515 = vmatpush1.bf16.msra.mxu0 %v2487
        %2516 = vmatprep.subr.bf16.mxu0 0
        %2517 = vmatpush1.bf16.msra.mxu0 %v2488
        %2518 = vmatprep.subr.bf16.mxu0 0
        %2519 = vmatpush1.bf16.msra.mxu0 %v2489
        %2520 = vmatprep.subr.bf16.mxu0 0
        %2521 = vmatpush1.bf16.msra.mxu0 0
        %2522 = vmatprep.subr.bf16.mxu0 0
        %2523 = vmatpush1.bf16.msra.mxu0 0
        %2524 = vmatprep.subr.bf16.mxu0 0
        %2525 = vmatpush1.bf16.msra.mxu0 0
        %2526 = vmatprep.subr.bf16.mxu0 0
        %2527 = vmatpush1.bf16.msra.mxu0 0
        %2528 = vmatprep.subr.bf16.mxu0 0
        %2529 = vmatpush1.bf16.msra.mxu0 0
        %2530 = vmatprep.subr.bf16.mxu0 0
        %2531 = vmatpush1.bf16.msra.mxu0 0
        %2532 = vmatprep.subr.bf16.mxu0 0
        %2533 = vmatpush1.bf16.msra.mxu0 0
        %2534 = vmatprep.subr.bf16.mxu0 0
        %2535 = vmatpush1.bf16.msra.mxu0 0
        %2536 = vmatprep.subr.bf16.mxu0 0
        %2537 = vmatpush1.bf16.msra.mxu0 0
        %2538 = vmatprep.subr.bf16.mxu0 0
        %2539 = vmatpush1.bf16.msra.mxu0 0
        %2540 = vmatprep.mubr.bf16.mxu0 0
        %2541 = vmatmul.mubr.bf16.gmra.mrb[0].mxu0 %v2491
        %v2542 = vpop.f32.mrb[0].mxu0
        %v2543 = vadd.f32 0.0, %v2542
        %v2544 = vpop.f32.mrb[0].mxu0
        %v2545 = vpop.f32.mrb[0].mxu0
        %v2546 = vadd.f32 0.0, %v2545
        %v2547 = vpop.f32.mrb[0].mxu0
        %2548 = vmatprep.mubr.bf16.mxu0 0
        %2549 = vmatmul.mubr.bf16.gmra.mrb[0].mxu0 %v2494
        %v2550 = vpop.f32.mrb[0].mxu0
        %v2551 = vadd.f32 0.0, %v2550
        %v2552 = vpop.f32.mrb[0].mxu0
        %v2553 = vpop.f32.mrb[0].mxu0
        %v2554 = vadd.f32 0.0, %v2553
        %v2555 = vpop.f32.mrb[0].mxu0
        %2556 = vmatprep.mubr.bf16.mxu0 0
        %2557 = vmatmul.mubr.bf16.gmra.mrb[0].mxu0 %v2497
        %v2558 = vpop.f32.mrb[0].mxu0
        %v2559 = vadd.f32 0.0, %v2558
        %v2560 = vpop.f32.mrb[0].mxu0
        %v2561 = vpop.f32.mrb[0].mxu0
        %v2562 = vadd.f32 0.0, %v2561
        %v2563 = vpop.f32.mrb[0].mxu0
        %2564 = vmatprep.mubr.bf16.mxu0 0
        %2565 = vmatmul.mubr.bf16.gmra.mrb[0].mxu0 %v2500
        %v2566 = vpop.f32.mrb[0].mxu0
        %v2567 = vadd.f32 0.0, %v2566
        %v2568 = vpop.f32.mrb[0].mxu0
        %v2569 = vpop.f32.mrb[0].mxu0
        %v2570 = vadd.f32 0.0, %v2569
        %v2571 = vpop.f32.mrb[0].mxu0
        %2572 = vmatprep.mubr.bf16.mxu0 0
        %2573 = vmatmul.mubr.bf16.gmra.mrb[0].mxu0 %v2503
        %v2574 = vpop.f32.mrb[0].mxu0
        %v2575 = vadd.f32 0.0, %v2574
        %v2576 = vpop.f32.mrb[0].mxu0
        %v2577 = vpop.f32.mrb[0].mxu0
        %v2578 = vadd.f32 0.0, %v2577
        %v2579 = vpop.f32.mrb[0].mxu0
        %2580 = vmatprep.mubr.bf16.mxu0 0
        %2581 = vmatmul.mubr.bf16.gmra.mrb[0].mxu0 %v2506
        %v2582 = vpop.f32.mrb[0].mxu0
        %v2583 = vadd.f32 0.0, %v2582
        %v2584 = vpop.f32.mrb[0].mxu0
        %v2585 = vpop.f32.mrb[0].mxu0
        %v2586 = vadd.f32 0.0, %v2585
        %v2587 = vpop.f32.mrb[0].mxu0
        %2588 = vdwg.mxu0
        %2589 = vxpose.xlu0.b32.start [1/16] %v772, 128
        %2590 = vxpose.xlu0.b32.cont [2/16] %v773, 128
        %2591 = vxpose.xlu0.b32.cont [3/16] %v774, 128
        %2592 = vxpose.xlu0.b32.cont [4/16] %v775, 128
        %2593 = vxpose.xlu0.b32.cont [5/16] %v776, 128
        %2594 = vxpose.xlu0.b32.cont [6/16] %v777, 128
        %2595 = vxpose.xlu0.b32.cont [7/16] %v778, 128
        %2596 = vxpose.xlu0.b32.cont [8/16] %v779, 128
        %2597 = vxpose.xlu0.b32.cont [9/16] %v780, 128
        %2598 = vxpose.xlu0.b32.cont [10/16] %v781, 128
        %2599 = vxpose.xlu0.b32.cont [11/16] %v782, 128
        %2600 = vxpose.xlu0.b32.cont [12/16] %v783, 128
        %2601 = vxpose.xlu0.b32.cont [13/16] 0.0, 128
        %2602 = vxpose.xlu0.b32.cont [14/16] 0.0, 128
        %2603 = vxpose.xlu0.b32.cont [15/16] 0.0, 128
        %2604 = vxpose.xlu0.b32.end [16/16] 0.0, 128
        %v2605 = vpop.trf.xlu0
        %v2606 = vpop.trf.xlu0
        %v2607 = vpop.trf.xlu0
        %v2608 = vpop.trf.xlu0
        %v2609 = vpop.trf.xlu0
        %v2610 = vpop.trf.xlu0
        %v2611 = vpop.trf.xlu0
        %v2612 = vpop.trf.xlu0
        %v2613 = vpop.trf.xlu0
        %v2614 = vpop.trf.xlu0
        %v2615 = vpop.trf.xlu0
        %v2616 = vpop.trf.xlu0
        %v2617 = vpop.trf.xlu0
        %v2618 = vpop.trf.xlu0
        %v2619 = vpop.trf.xlu0
        %v2620 = vpop.trf.xlu0
        %v2622 = vsel %vm2345, %v2605, 0
        %2624 = vmatprep.subr.mxu0 0.0
        %2625 = vmatpush1.msra.mxu0 %v2543
        %2626 = vmatprep.subr.mxu0 0.0
        %2627 = vmatpush1.msra.mxu0 %v2546
        %2628 = vmatprep.subr.mxu0 0.0
        %2629 = vmatpush1.msra.mxu0 %v2551
        %2630 = vmatprep.subr.mxu0 0.0
        %2631 = vmatpush1.msra.mxu0 %v2554
        %2632 = vmatprep.subr.mxu0 0.0
        %2633 = vmatpush1.msra.mxu0 %v2559
        %2634 = vmatprep.subr.mxu0 0.0
        %2635 = vmatpush1.msra.mxu0 %v2562
        %2636 = vmatprep.subr.mxu0 0.0
        %2637 = vmatpush1.msra.mxu0 %v2567
        %2638 = vmatprep.subr.mxu0 0.0
        %2639 = vmatpush1.msra.mxu0 %v2570
        %2640 = vmatprep.subr.mxu0 0.0
        %2641 = vmatpush1.msra.mxu0 %v2575
        %2642 = vmatprep.subr.mxu0 0.0
        %2643 = vmatpush1.msra.mxu0 %v2578
        %2644 = vmatprep.subr.mxu0 0.0
        %2645 = vmatpush1.msra.mxu0 %v2583
        %2646 = vmatprep.subr.mxu0 0.0
        %2647 = vmatpush1.msra.mxu0 %v2586
        %2648 = vmatprep.subr.mxu0 0.0
        %2649 = vmatpush1.msra.mxu0 0.0
        %2650 = vmatprep.subr.mxu0 0.0
        %2651 = vmatpush1.msra.mxu0 0.0
        %2652 = vmatprep.subr.mxu0 0.0
        %2653 = vmatpush1.msra.mxu0 0.0
        %2654 = vmatprep.subr.mxu0 0.0
        %2655 = vmatpush1.msra.mxu0 0.0
        %2656 = vmatprep.subr.mxu0 0.0
        %2657 = vmatpush1.msra.mxu0 0.0
        %2658 = vmatprep.subr.mxu0 0.0
        %2659 = vmatpush1.msra.mxu0 0.0
        %2660 = vmatprep.subr.mxu0 0.0
        %2661 = vmatpush1.msra.mxu0 0.0
        %2662 = vmatprep.subr.mxu0 0.0
        %2663 = vmatpush1.msra.mxu0 0.0
        %2664 = vmatprep.subr.mxu0 0.0
        %2665 = vmatpush1.msra.mxu0 0.0
        %2666 = vmatprep.subr.mxu0 0.0
        %2667 = vmatpush1.msra.mxu0 0.0
        %2668 = vmatprep.subr.mxu0 0.0
        %2669 = vmatpush1.msra.mxu0 0.0
        %2670 = vmatprep.subr.mxu0 0.0
        %2671 = vmatpush1.msra.mxu0 0.0
        %2672 = vmatprep.subr.mxu0 0.0
        %2673 = vmatpush1.msra.mxu0 0.0
        %2674 = vmatprep.subr.mxu0 0.0
        %2675 = vmatpush1.msra.mxu0 0.0
        %2676 = vmatprep.subr.mxu0 0.0
        %2677 = vmatpush1.msra.mxu0 0.0
        %2678 = vmatprep.subr.mxu0 0.0
        %2679 = vmatpush1.msra.mxu0 0.0
        %2680 = vmatprep.subr.mxu0 0.0
        %2681 = vmatpush1.msra.mxu0 0.0
        %2682 = vmatprep.subr.mxu0 0.0
        %2683 = vmatpush1.msra.mxu0 0.0
        %2684 = vmatprep.subr.mxu0 0.0
        %2685 = vmatpush1.msra.mxu0 0.0
        %2686 = vmatprep.subr.mxu0 0.0
        %2687 = vmatpush1.msra.mxu0 0.0
        %2688 = vmatprep.mubr.f32.mxu0 0.0
        %2689 = vmatmul.mubr.f32.gmra.mrb[0].mxu0 %v2622
        %v2690 = vpop.f32.mrb[0].mxu0
        %v2691 = vadd.f32 0.0, %v2690
        %v2692 = vpop.f32.mrb[0].mxu0
        %2693 = vdwg.mxu0
        %v2694 = vpack.c.bf16 %v2691, %v2691
        %v2695 = vld [vmem:[%s734] sm:$0xf]
        %v2696 = vld [vmem:[%s734 + $0x4] sm:$0xf]
        %v2697 = vld [vmem:[%s734 + $0x8] sm:$0xf]
        %v2698 = vld [vmem:[%s734 + $0xc] sm:$0xf]
        %v2699 = vld [vmem:[%s734 + $0x10] sm:$0xf]
        %v2700 = vld [vmem:[%s734 + $0x14] sm:$0xf]
        %v2701 = vld [vmem:[%s751] sm:$0x1]
        %v2703 = vlaneseq
        %v2704 = vshrl.u32 %v2703, 7
        %v2705 = vsub.s32 0, %v2704
        %v2706 = vrot.slane %v2701, %v2705
        %v2714 = vunpack.c.l.b16 %v2695
        %v2715 = vunpack.c.l.b16 %v2696
        %v2716 = vunpack.c.l.b16 %v2697
        %v2717 = vunpack.c.l.b16 %v2698
        %v2718 = vunpack.c.l.b16 %v2699
        %v2719 = vunpack.c.l.b16 %v2700
        %v2720 = vpack.c.b16 %v2715, %v2714
        %v2721 = vpack.c.b16 %v2717, %v2716
        %v2722 = vpack.c.b16 %v2719, %v2718
        %v2727 = vsel %vm1704, %v2694, 0
        %2729 = vmatprep.subr.bf16.mxu0 0
        %2730 = vmatpush1.bf16.msra.mxu0 %v2720
        %2731 = vmatprep.subr.bf16.mxu0 0
        %2732 = vmatpush1.bf16.msra.mxu0 %v2721
        %2733 = vmatprep.subr.bf16.mxu0 0
        %2734 = vmatpush1.bf16.msra.mxu0 %v2722
        %2735 = vmatprep.subr.bf16.mxu0 0
        %2736 = vmatpush1.bf16.msra.mxu0 0
        %2737 = vmatprep.subr.bf16.mxu0 0
        %2738 = vmatpush1.bf16.msra.mxu0 0
        %2739 = vmatprep.subr.bf16.mxu0 0
        %2740 = vmatpush1.bf16.msra.mxu0 0
        %2741 = vmatprep.subr.bf16.mxu0 0
        %2742 = vmatpush1.bf16.msra.mxu0 0
        %2743 = vmatprep.subr.bf16.mxu0 0
        %2744 = vmatpush1.bf16.msra.mxu0 0
        %2745 = vmatprep.subr.bf16.mxu0 0
        %2746 = vmatpush1.bf16.msra.mxu0 0
        %2747 = vmatprep.subr.bf16.mxu0 0
        %2748 = vmatpush1.bf16.msra.mxu0 0
        %2749 = vmatprep.subr.bf16.mxu0 0
        %2750 = vmatpush1.bf16.msra.mxu0 0
        %2751 = vmatprep.subr.bf16.mxu0 0
        %2752 = vmatpush1.bf16.msra.mxu0 0
        %2753 = vmatprep.subr.bf16.mxu0 0
        %2754 = vmatpush1.bf16.msra.mxu0 0
        %2755 = vmatprep.subr.bf16.mxu0 0
        %2756 = vmatpush1.bf16.msra.mxu0 0
        %2757 = vmatprep.subr.bf16.mxu0 0
        %2758 = vmatpush1.bf16.msra.mxu0 0
        %2759 = vmatprep.subr.bf16.mxu0 0
        %2760 = vmatpush1.bf16.msra.mxu0 0
        %2761 = vmatprep.mubr.bf16.mxu0 0
        %2762 = vmatmul.mubr.bf16.gmra.mrb[0].mxu0 %v2727
        %v2763 = vpop.f32.mrb[0].mxu0
        %v2764 = vadd.f32 %v2706, %v2763
        %v2765 = vpop.f32.mrb[0].mxu0
        %v2766 = vpop.f32.mrb[0].mxu0
        %v2767 = vpop.f32.mrb[0].mxu0
        %2768 = vdwg.mxu0
        %v2769 = vadd.f32 %v1654, %v2764
        %v2770 = vld [vmem:[%s761] sm:$0x1]
        %v2771 = vld [vmem:[%s764] sm:$0x1]
        %v2772 = vsel %vm1704, %v2769, 0.0
        %2773 = vadd.xlane.f32.xlu0 %v2772
        %v2774 = vpop.xlane.xlu0 %2773
        %v2775 = vrcp.pop 48.0
        %v2776 = vmul.f32 %v2774, %v2775
        %v2777 = vsub.f32 %v2769, %v2776
        %v2778 = vmul.f32 %v2777, %v2777
        %v2779 = vsel %vm1704, %v2778, 0.0
        %2780 = vadd.xlane.f32.xlu0 %v2779
        %v2781 = vpop.xlane.xlu0 %2780
        %v2782 = vmul.f32 %v2781, %v2775
        %v2783 = vadd.f32 %v2782, 1e-05
        %v2784 = vrsqrt.pop %v2783
        %v2785 = vmul.f32 %v2777, %v2784
        %v2787 = vlaneseq
        %v2788 = vshrl.u32 %v2787, 7
        %v2789 = vsub.s32 0, %v2788
        %v2790 = vrot.slane %v2770, %v2789
        %v2792 = vmul.f32 %v2785, %v2790
        %v2794 = vlaneseq
        %v2795 = vshrl.u32 %v2794, 7
        %v2796 = vsub.s32 0, %v2795
        %v2797 = vrot.slane %v2771, %v2796
        %v2799 = vadd.f32 %v2792, %v2797
        %v2800 = vpack.c.bf16 %v2799, %v2799
        %v2801 = vld [vmem:[%s739] sm:$0xff]
        %v2802 = vld [vmem:[%s739 + $0x8] sm:$0xff]
        %v2803 = vld [vmem:[%s739 + $0x10] sm:$0xff]
        %v2804 = vld [vmem:[%s739 + $0x18] sm:$0xff]
        %v2805 = vld [vmem:[%s739 + $0x20] sm:$0xff]
        %v2806 = vld [vmem:[%s739 + $0x28] sm:$0xff]
        %v2807 = vld [vmem:[%s739 + $0x30] sm:$0xff]
        %v2808 = vld [vmem:[%s739 + $0x38] sm:$0xff]
        %v2809 = vld [vmem:[%s739 + $0x40] sm:$0xff]
        %v2810 = vld [vmem:[%s739 + $0x48] sm:$0xff]
        %v2811 = vld [vmem:[%s739 + $0x50] sm:$0xff]
        %v2812 = vld [vmem:[%s739 + $0x58] sm:$0xff]
        %v2813 = vld [vmem:[%s739 + $0x60] sm:$0xff]
        %v2814 = vld [vmem:[%s739 + $0x68] sm:$0xff]
        %v2815 = vld [vmem:[%s739 + $0x70] sm:$0xff]
        %v2816 = vld [vmem:[%s739 + $0x78] sm:$0xff]
        %v2817 = vld [vmem:[%s739 + $0x80] sm:$0xff]
        %v2818 = vld [vmem:[%s739 + $0x88] sm:$0xff]
        %v2819 = vld [vmem:[%s739 + $0x90] sm:$0xff]
        %v2820 = vld [vmem:[%s739 + $0x98] sm:$0xff]
        %v2821 = vld [vmem:[%s739 + $0xa0] sm:$0xff]
        %v2822 = vld [vmem:[%s739 + $0xa8] sm:$0xff]
        %v2823 = vld [vmem:[%s739 + $0xb0] sm:$0xff]
        %v2824 = vld [vmem:[%s739 + $0xb8] sm:$0xff]
        %v2825 = vld [vmem:[%s739 + $0xc0] sm:$0xff]
        %v2826 = vld [vmem:[%s739 + $0xc8] sm:$0xff]
        %v2827 = vld [vmem:[%s739 + $0xd0] sm:$0xff]
        %v2828 = vld [vmem:[%s739 + $0xd8] sm:$0xff]
        %v2829 = vld [vmem:[%s739 + $0xe0] sm:$0xff]
        %v2830 = vld [vmem:[%s739 + $0xe8] sm:$0xff]
        %v2831 = vld [vmem:[%s739 + $0xf0] sm:$0xff]
        %v2832 = vld [vmem:[%s739 + $0xf8] sm:$0xff]
        %v2833 = vld [vmem:[%s739 + $0x100] sm:$0xff]
        %v2834 = vld [vmem:[%s739 + $0x108] sm:$0xff]
        %v2835 = vld [vmem:[%s739 + $0x110] sm:$0xff]
        %v2836 = vld [vmem:[%s739 + $0x118] sm:$0xff]
        %v2837 = vld [vmem:[%s739 + $0x120] sm:$0xff]
        %v2838 = vld [vmem:[%s739 + $0x128] sm:$0xff]
        %v2839 = vld [vmem:[%s739 + $0x130] sm:$0xff]
        %v2840 = vld [vmem:[%s739 + $0x138] sm:$0xff]
        %v2841 = vld [vmem:[%s739 + $0x140] sm:$0xff]
        %v2842 = vld [vmem:[%s739 + $0x148] sm:$0xff]
        %v2843 = vld [vmem:[%s739 + $0x150] sm:$0xff]
        %v2844 = vld [vmem:[%s739 + $0x158] sm:$0xff]
        %v2845 = vld [vmem:[%s739 + $0x160] sm:$0xff]
        %v2846 = vld [vmem:[%s739 + $0x168] sm:$0xff]
        %v2847 = vld [vmem:[%s739 + $0x170] sm:$0xff]
        %v2848 = vld [vmem:[%s739 + $0x178] sm:$0xff]
        %v2849 = vld [vmem:[%s755] sm:$0xff]
        %v2850 = vld [vmem:[%s755 + $0x8] sm:$0xff]
        %v2853 = vlaneseq
        %v2854 = vshrl.u32 %v2853, 7
        %v2855 = vsub.s32 0, %v2854
        %v2856 = vrot.slane %v2849, %v2855
        %v2857 = vlaneseq
        %v2858 = vshrl.u32 %v2857, 7
        %v2859 = vsub.s32 1, %v2858
        %v2860 = vrot.slane %v2849, %v2859
        %v2861 = vlaneseq
        %v2862 = vshrl.u32 %v2861, 7
        %v2863 = vsub.s32 2, %v2862
        %v2864 = vrot.slane %v2849, %v2863
        %v2865 = vlaneseq
        %v2866 = vshrl.u32 %v2865, 7
        %v2867 = vsub.s32 3, %v2866
        %v2868 = vrot.slane %v2849, %v2867
        %v2869 = vlaneseq
        %v2870 = vshrl.u32 %v2869, 7
        %v2871 = vsub.s32 4, %v2870
        %v2872 = vrot.slane %v2849, %v2871
        %v2873 = vlaneseq
        %v2874 = vshrl.u32 %v2873, 7
        %v2875 = vsub.s32 5, %v2874
        %v2876 = vrot.slane %v2849, %v2875
        %v2877 = vlaneseq
        %v2878 = vshrl.u32 %v2877, 7
        %v2879 = vsub.s32 6, %v2878
        %v2880 = vrot.slane %v2849, %v2879
        %v2881 = vlaneseq
        %v2882 = vshrl.u32 %v2881, 7
        %v2883 = vsub.s32 7, %v2882
        %v2884 = vrot.slane %v2849, %v2883
        %v2885 = vlaneseq
        %v2886 = vshrl.u32 %v2885, 7
        %v2887 = vsub.s32 0, %v2886
        %v2888 = vrot.slane %v2850, %v2887
        %v2889 = vlaneseq
        %v2890 = vshrl.u32 %v2889, 7
        %v2891 = vsub.s32 1, %v2890
        %v2892 = vrot.slane %v2850, %v2891
        %v2893 = vlaneseq
        %v2894 = vshrl.u32 %v2893, 7
        %v2895 = vsub.s32 2, %v2894
        %v2896 = vrot.slane %v2850, %v2895
        %v2897 = vlaneseq
        %v2898 = vshrl.u32 %v2897, 7
        %v2899 = vsub.s32 3, %v2898
        %v2900 = vrot.slane %v2850, %v2899
        %v2901 = vlaneseq
        %v2902 = vshrl.u32 %v2901, 7
        %v2903 = vsub.s32 4, %v2902
        %v2904 = vrot.slane %v2850, %v2903
        %v2905 = vlaneseq
        %v2906 = vshrl.u32 %v2905, 7
        %v2907 = vsub.s32 5, %v2906
        %v2908 = vrot.slane %v2850, %v2907
        %v2909 = vlaneseq
        %v2910 = vshrl.u32 %v2909, 7
        %v2911 = vsub.s32 6, %v2910
        %v2912 = vrot.slane %v2850, %v2911
        %v2913 = vlaneseq
        %v2914 = vshrl.u32 %v2913, 7
        %v2915 = vsub.s32 7, %v2914
        %v2916 = vrot.slane %v2850, %v2915
        %v2981 = vunpack.c.l.b16 %v2801
        %v2982 = vunpack.c.h.b16 %v2801
        %v2983 = vunpack.c.l.b16 %v2802
        %v2984 = vunpack.c.h.b16 %v2802
        %v2985 = vunpack.c.l.b16 %v2803
        %v2986 = vunpack.c.h.b16 %v2803
        %v2987 = vunpack.c.l.b16 %v2804
        %v2988 = vunpack.c.h.b16 %v2804
        %v2989 = vunpack.c.l.b16 %v2805
        %v2990 = vunpack.c.h.b16 %v2805
        %v2991 = vunpack.c.l.b16 %v2806
        %v2992 = vunpack.c.h.b16 %v2806
        %v2993 = vunpack.c.l.b16 %v2807
        %v2994 = vunpack.c.h.b16 %v2807
        %v2995 = vunpack.c.l.b16 %v2808
        %v2996 = vunpack.c.h.b16 %v2808
        %v2997 = vunpack.c.l.b16 %v2809
        %v2998 = vunpack.c.h.b16 %v2809
        %v2999 = vunpack.c.l.b16 %v2810
        %v3000 = vunpack.c.h.b16 %v2810
        %v3001 = vunpack.c.l.b16 %v2811
        %v3002 = vunpack.c.h.b16 %v2811
        %v3003 = vunpack.c.l.b16 %v2812
        %v3004 = vunpack.c.h.b16 %v2812
        %v3005 = vunpack.c.l.b16 %v2813
        %v3006 = vunpack.c.h.b16 %v2813
        %v3007 = vunpack.c.l.b16 %v2814
        %v3008 = vunpack.c.h.b16 %v2814
        %v3009 = vunpack.c.l.b16 %v2815
        %v3010 = vunpack.c.h.b16 %v2815
        %v3011 = vunpack.c.l.b16 %v2816
        %v3012 = vunpack.c.h.b16 %v2816
        %v3013 = vunpack.c.l.b16 %v2817
        %v3014 = vunpack.c.h.b16 %v2817
        %v3015 = vunpack.c.l.b16 %v2818
        %v3016 = vunpack.c.h.b16 %v2818
        %v3017 = vunpack.c.l.b16 %v2819
        %v3018 = vunpack.c.h.b16 %v2819
        %v3019 = vunpack.c.l.b16 %v2820
        %v3020 = vunpack.c.h.b16 %v2820
        %v3021 = vunpack.c.l.b16 %v2821
        %v3022 = vunpack.c.h.b16 %v2821
        %v3023 = vunpack.c.l.b16 %v2822
        %v3024 = vunpack.c.h.b16 %v2822
        %v3025 = vunpack.c.l.b16 %v2823
        %v3026 = vunpack.c.h.b16 %v2823
        %v3027 = vunpack.c.l.b16 %v2824
        %v3028 = vunpack.c.h.b16 %v2824
        %v3029 = vunpack.c.l.b16 %v2825
        %v3030 = vunpack.c.h.b16 %v2825
        %v3031 = vunpack.c.l.b16 %v2826
        %v3032 = vunpack.c.h.b16 %v2826
        %v3033 = vunpack.c.l.b16 %v2827
        %v3034 = vunpack.c.h.b16 %v2827
        %v3035 = vunpack.c.l.b16 %v2828
        %v3036 = vunpack.c.h.b16 %v2828
        %v3037 = vunpack.c.l.b16 %v2829
        %v3038 = vunpack.c.h.b16 %v2829
        %v3039 = vunpack.c.l.b16 %v2830
        %v3040 = vunpack.c.h.b16 %v2830
        %v3041 = vunpack.c.l.b16 %v2831
        %v3042 = vunpack.c.h.b16 %v2831
        %v3043 = vunpack.c.l.b16 %v2832
        %v3044 = vunpack.c.h.b16 %v2832
        %v3045 = vunpack.c.l.b16 %v2833
        %v3046 = vunpack.c.h.b16 %v2833
        %v3047 = vunpack.c.l.b16 %v2834
        %v3048 = vunpack.c.h.b16 %v2834
        %v3049 = vunpack.c.l.b16 %v2835
        %v3050 = vunpack.c.h.b16 %v2835
        %v3051 = vunpack.c.l.b16 %v2836
        %v3052 = vunpack.c.h.b16 %v2836
        %v3053 = vunpack.c.l.b16 %v2837
        %v3054 = vunpack.c.h.b16 %v2837
        %v3055 = vunpack.c.l.b16 %v2838
        %v3056 = vunpack.c.h.b16 %v2838
        %v3057 = vunpack.c.l.b16 %v2839
        %v3058 = vunpack.c.h.b16 %v2839
        %v3059 = vunpack.c.l.b16 %v2840
        %v3060 = vunpack.c.h.b16 %v2840
        %v3061 = vunpack.c.l.b16 %v2841
        %v3062 = vunpack.c.h.b16 %v2841
        %v3063 = vunpack.c.l.b16 %v2842
        %v3064 = vunpack.c.h.b16 %v2842
        %v3065 = vunpack.c.l.b16 %v2843
        %v3066 = vunpack.c.h.b16 %v2843
        %v3067 = vunpack.c.l.b16 %v2844
        %v3068 = vunpack.c.h.b16 %v2844
        %v3069 = vunpack.c.l.b16 %v2845
        %v3070 = vunpack.c.h.b16 %v2845
        %v3071 = vunpack.c.l.b16 %v2846
        %v3072 = vunpack.c.h.b16 %v2846
        %v3073 = vunpack.c.l.b16 %v2847
        %v3074 = vunpack.c.h.b16 %v2847
        %v3075 = vunpack.c.l.b16 %v2848
        %v3076 = vunpack.c.h.b16 %v2848
        %v3077 = vpack.c.b16 %v2997, %v2981
        %v3078 = vpack.c.b16 %v2998, %v2982
        %v3079 = vpack.c.b16 %v2999, %v2983
        %v3080 = vpack.c.b16 %v3000, %v2984
        %v3081 = vpack.c.b16 %v3001, %v2985
        %v3082 = vpack.c.b16 %v3002, %v2986
        %v3083 = vpack.c.b16 %v3003, %v2987
        %v3084 = vpack.c.b16 %v3004, %v2988
        %v3085 = vpack.c.b16 %v3005, %v2989
        %v3086 = vpack.c.b16 %v3006, %v2990
        %v3087 = vpack.c.b16 %v3007, %v2991
        %v3088 = vpack.c.b16 %v3008, %v2992
        %v3089 = vpack.c.b16 %v3009, %v2993
        %v3090 = vpack.c.b16 %v3010, %v2994
        %v3091 = vpack.c.b16 %v3011, %v2995
        %v3092 = vpack.c.b16 %v3012, %v2996
        %v3093 = vpack.c.b16 %v3029, %v3013
        %v3094 = vpack.c.b16 %v3030, %v3014
        %v3095 = vpack.c.b16 %v3031, %v3015
        %v3096 = vpack.c.b16 %v3032, %v3016
        %v3097 = vpack.c.b16 %v3033, %v3017
        %v3098 = vpack.c.b16 %v3034, %v3018
        %v3099 = vpack.c.b16 %v3035, %v3019
        %v3100 = vpack.c.b16 %v3036, %v3020
        %v3101 = vpack.c.b16 %v3037, %v3021
        %v3102 = vpack.c.b16 %v3038, %v3022
        %v3103 = vpack.c.b16 %v3039, %v3023
        %v3104 = vpack.c.b16 %v3040, %v3024
        %v3105 = vpack.c.b16 %v3041, %v3025
        %v3106 = vpack.c.b16 %v3042, %v3026
        %v3107 = vpack.c.b16 %v3043, %v3027
        %v3108 = vpack.c.b16 %v3044, %v3028
        %v3109 = vpack.c.b16 %v3061, %v3045
        %v3110 = vpack.c.b16 %v3062, %v3046
        %v3111 = vpack.c.b16 %v3063, %v3047
        %v3112 = vpack.c.b16 %v3064, %v3048
        %v3113 = vpack.c.b16 %v3065, %v3049
        %v3114 = vpack.c.b16 %v3066, %v3050
        %v3115 = vpack.c.b16 %v3067, %v3051
        %v3116 = vpack.c.b16 %v3068, %v3052
        %v3117 = vpack.c.b16 %v3069, %v3053
        %v3118 = vpack.c.b16 %v3070, %v3054
        %v3119 = vpack.c.b16 %v3071, %v3055
        %v3120 = vpack.c.b16 %v3072, %v3056
        %v3121 = vpack.c.b16 %v3073, %v3057
        %v3122 = vpack.c.b16 %v3074, %v3058
        %v3123 = vpack.c.b16 %v3075, %v3059
        %v3124 = vpack.c.b16 %v3076, %v3060
        %v3174 = vsel %vm1704, %v2800, 0
        %3176 = vmatprep.subr.bf16.mxu0 %v3078
        %3177 = vmatpush1.bf16.msra.mxu0 %v3077
        %3178 = vmatprep.subr.bf16.mxu0 %v3094
        %3179 = vmatpush1.bf16.msra.mxu0 %v3093
        %3180 = vmatprep.subr.bf16.mxu0 %v3110
        %3181 = vmatpush1.bf16.msra.mxu0 %v3109
        %3182 = vmatprep.subr.bf16.mxu0 0
        %3183 = vmatpush1.bf16.msra.mxu0 0
        %3184 = vmatprep.subr.bf16.mxu0 0
        %3185 = vmatpush1.bf16.msra.mxu0 0
        %3186 = vmatprep.subr.bf16.mxu0 0
        %3187 = vmatpush1.bf16.msra.mxu0 0
        %3188 = vmatprep.subr.bf16.mxu0 0
        %3189 = vmatpush1.bf16.msra.mxu0 0
        %3190 = vmatprep.subr.bf16.mxu0 0
        %3191 = vmatpush1.bf16.msra.mxu0 0
        %3192 = vmatprep.subr.bf16.mxu0 0
        %3193 = vmatpush1.bf16.msra.mxu0 0
        %3194 = vmatprep.subr.bf16.mxu0 0
        %3195 = vmatpush1.bf16.msra.mxu0 0
        %3196 = vmatprep.subr.bf16.mxu0 0
        %3197 = vmatpush1.bf16.msra.mxu0 0
        %3198 = vmatprep.subr.bf16.mxu0 0
        %3199 = vmatpush1.bf16.msra.mxu0 0
        %3200 = vmatprep.subr.bf16.mxu0 0
        %3201 = vmatpush1.bf16.msra.mxu0 0
        %3202 = vmatprep.subr.bf16.mxu0 0
        %3203 = vmatpush1.bf16.msra.mxu0 0
        %3204 = vmatprep.subr.bf16.mxu0 0
        %3205 = vmatpush1.bf16.msra.mxu0 0
        %3206 = vmatprep.subr.bf16.mxu0 0
        %3207 = vmatpush1.bf16.msra.mxu0 0
        %3208 = vmatprep.mubr.bf16.mxu0 0
        %3209 = vmatmul.mubr.bf16.gmra.mrb[0].mxu0 %v3174
        %v3210 = vpop.f32.mrb[0].mxu0
        %v3211 = vadd.f32 %v2856, %v3210
        %v3212 = vpop.f32.mrb[0].mxu0
        %v3213 = vadd.f32 %v2860, %v3212
        %v3214 = vpop.f32.mrb[0].mxu0
        %v3215 = vpop.f32.mrb[0].mxu0
        %3216 = vdwg.mxu0
        %3217 = vmatprep.subr.bf16.mxu0 %v3080
        %3218 = vmatpush1.bf16.msra.mxu0 %v3079
        %3219 = vmatprep.subr.bf16.mxu0 %v3096
        %3220 = vmatpush1.bf16.msra.mxu0 %v3095
        %3221 = vmatprep.subr.bf16.mxu0 %v3112
        %3222 = vmatpush1.bf16.msra.mxu0 %v3111
        %3223 = vmatprep.subr.bf16.mxu0 0
        %3224 = vmatpush1.bf16.msra.mxu0 0
        %3225 = vmatprep.subr.bf16.mxu0 0
        %3226 = vmatpush1.bf16.msra.mxu0 0
        %3227 = vmatprep.subr.bf16.mxu0 0
        %3228 = vmatpush1.bf16.msra.mxu0 0
        %3229 = vmatprep.subr.bf16.mxu0 0
        %3230 = vmatpush1.bf16.msra.mxu0 0
        %3231 = vmatprep.subr.bf16.mxu0 0
        %3232 = vmatpush1.bf16.msra.mxu0 0
        %3233 = vmatprep.subr.bf16.mxu0 0
        %3234 = vmatpush1.bf16.msra.mxu0 0
        %3235 = vmatprep.subr.bf16.mxu0 0
        %3236 = vmatpush1.bf16.msra.mxu0 0
        %3237 = vmatprep.subr.bf16.mxu0 0
        %3238 = vmatpush1.bf16.msra.mxu0 0
        %3239 = vmatprep.subr.bf16.mxu0 0
        %3240 = vmatpush1.bf16.msra.mxu0 0
        %3241 = vmatprep.subr.bf16.mxu0 0
        %3242 = vmatpush1.bf16.msra.mxu0 0
        %3243 = vmatprep.subr.bf16.mxu0 0
        %3244 = vmatpush1.bf16.msra.mxu0 0
        %3245 = vmatprep.subr.bf16.mxu0 0
        %3246 = vmatpush1.bf16.msra.mxu0 0
        %3247 = vmatprep.subr.bf16.mxu0 0
        %3248 = vmatpush1.bf16.msra.mxu0 0
        %3249 = vmatprep.mubr.bf16.mxu0 0
        %3250 = vmatmul.mubr.bf16.gmra.mrb[0].mxu0 %v3174
        %v3251 = vpop.f32.mrb[0].mxu0
        %v3252 = vadd.f32 %v2864, %v3251
        %v3253 = vpop.f32.mrb[0].mxu0
        %v3254 = vadd.f32 %v2868, %v3253
        %v3255 = vpop.f32.mrb[0].mxu0
        %v3256 = vpop.f32.mrb[0].mxu0
        %3257 = vdwg.mxu0
        %3258 = vmatprep.subr.bf16.mxu0 %v3082
        %3259 = vmatpush1.bf16.msra.mxu0 %v3081
        %3260 = vmatprep.subr.bf16.mxu0 %v3098
        %3261 = vmatpush1.bf16.msra.mxu0 %v3097
        %3262 = vmatprep.subr.bf16.mxu0 %v3114
        %3263 = vmatpush1.bf16.msra.mxu0 %v3113
        %3264 = vmatprep.subr.bf16.mxu0 0
        %3265 = vmatpush1.bf16.msra.mxu0 0
        %3266 = vmatprep.subr.bf16.mxu0 0
        %3267 = vmatpush1.bf16.msra.mxu0 0
        %3268 = vmatprep.subr.bf16.mxu0 0
        %3269 = vmatpush1.bf16.msra.mxu0 0
        %3270 = vmatprep.subr.bf16.mxu0 0
        %3271 = vmatpush1.bf16.msra.mxu0 0
        %3272 = vmatprep.subr.bf16.mxu0 0
        %3273 = vmatpush1.bf16.msra.mxu0 0
        %3274 = vmatprep.subr.bf16.mxu0 0
        %3275 = vmatpush1.bf16.msra.mxu0 0
        %3276 = vmatprep.subr.bf16.mxu0 0
        %3277 = vmatpush1.bf16.msra.mxu0 0
        %3278 = vmatprep.subr.bf16.mxu0 0
        %3279 = vmatpush1.bf16.msra.mxu0 0
        %3280 = vmatprep.subr.bf16.mxu0 0
        %3281 = vmatpush1.bf16.msra.mxu0 0
        %3282 = vmatprep.subr.bf16.mxu0 0
        %3283 = vmatpush1.bf16.msra.mxu0 0
        %3284 = vmatprep.subr.bf16.mxu0 0
        %3285 = vmatpush1.bf16.msra.mxu0 0
        %3286 = vmatprep.subr.bf16.mxu0 0
        %3287 = vmatpush1.bf16.msra.mxu0 0
        %3288 = vmatprep.subr.bf16.mxu0 0
        %3289 = vmatpush1.bf16.msra.mxu0 0
        %3290 = vmatprep.mubr.bf16.mxu0 0
        %3291 = vmatmul.mubr.bf16.gmra.mrb[0].mxu0 %v3174
        %v3292 = vpop.f32.mrb[0].mxu0
        %v3293 = vadd.f32 %v2872, %v3292
        %v3294 = vpop.f32.mrb[0].mxu0
        %v3295 = vadd.f32 %v2876, %v3294
        %v3296 = vpop.f32.mrb[0].mxu0
        %v3297 = vpop.f32.mrb[0].mxu0
        %3298 = vdwg.mxu0
        %3299 = vmatprep.subr.bf16.mxu0 %v3084
        %3300 = vmatpush1.bf16.msra.mxu0 %v3083
        %3301 = vmatprep.subr.bf16.mxu0 %v3100
        %3302 = vmatpush1.bf16.msra.mxu0 %v3099
        %3303 = vmatprep.subr.bf16.mxu0 %v3116
        %3304 = vmatpush1.bf16.msra.mxu0 %v3115
        %3305 = vmatprep.subr.bf16.mxu0 0
        %3306 = vmatpush1.bf16.msra.mxu0 0
        %3307 = vmatprep.subr.bf16.mxu0 0
        %3308 = vmatpush1.bf16.msra.mxu0 0
        %3309 = vmatprep.subr.bf16.mxu0 0
        %3310 = vmatpush1.bf16.msra.mxu0 0
        %3311 = vmatprep.subr.bf16.mxu0 0
        %3312 = vmatpush1.bf16.msra.mxu0 0
        %3313 = vmatprep.subr.bf16.mxu0 0
        %3314 = vmatpush1.bf16.msra.mxu0 0
        %3315 = vmatprep.subr.bf16.mxu0 0
        %3316 = vmatpush1.bf16.msra.mxu0 0
        %3317 = vmatprep.subr.bf16.mxu0 0
        %3318 = vmatpush1.bf16.msra.mxu0 0
        %3319 = vmatprep.subr.bf16.mxu0 0
        %3320 = vmatpush1.bf16.msra.mxu0 0
        %3321 = vmatprep.subr.bf16.mxu0 0
        %3322 = vmatpush1.bf16.msra.mxu0 0
        %3323 = vmatprep.subr.bf16.mxu0 0
        %3324 = vmatpush1.bf16.msra.mxu0 0
        %3325 = vmatprep.subr.bf16.mxu0 0
        %3326 = vmatpush1.bf16.msra.mxu0 0
        %3327 = vmatprep.subr.bf16.mxu0 0
        %3328 = vmatpush1.bf16.msra.mxu0 0
        %3329 = vmatprep.subr.bf16.mxu0 0
        %3330 = vmatpush1.bf16.msra.mxu0 0
        %3331 = vmatprep.mubr.bf16.mxu0 0
        %3332 = vmatmul.mubr.bf16.gmra.mrb[0].mxu0 %v3174
        %v3333 = vpop.f32.mrb[0].mxu0
        %v3334 = vadd.f32 %v2880, %v3333
        %v3335 = vpop.f32.mrb[0].mxu0
        %v3336 = vadd.f32 %v2884, %v3335
        %v3337 = vpop.f32.mrb[0].mxu0
        %v3338 = vpop.f32.mrb[0].mxu0
        %3339 = vdwg.mxu0
        %3340 = vmatprep.subr.bf16.mxu0 %v3086
        %3341 = vmatpush1.bf16.msra.mxu0 %v3085
        %3342 = vmatprep.subr.bf16.mxu0 %v3102
        %3343 = vmatpush1.bf16.msra.mxu0 %v3101
        %3344 = vmatprep.subr.bf16.mxu0 %v3118
        %3345 = vmatpush1.bf16.msra.mxu0 %v3117
        %3346 = vmatprep.subr.bf16.mxu0 0
        %3347 = vmatpush1.bf16.msra.mxu0 0
        %3348 = vmatprep.subr.bf16.mxu0 0
        %3349 = vmatpush1.bf16.msra.mxu0 0
        %3350 = vmatprep.subr.bf16.mxu0 0
        %3351 = vmatpush1.bf16.msra.mxu0 0
        %3352 = vmatprep.subr.bf16.mxu0 0
        %3353 = vmatpush1.bf16.msra.mxu0 0
        %3354 = vmatprep.subr.bf16.mxu0 0
        %3355 = vmatpush1.bf16.msra.mxu0 0
        %3356 = vmatprep.subr.bf16.mxu0 0
        %3357 = vmatpush1.bf16.msra.mxu0 0
        %3358 = vmatprep.subr.bf16.mxu0 0
        %3359 = vmatpush1.bf16.msra.mxu0 0
        %3360 = vmatprep.subr.bf16.mxu0 0
        %3361 = vmatpush1.bf16.msra.mxu0 0
        %3362 = vmatprep.subr.bf16.mxu0 0
        %3363 = vmatpush1.bf16.msra.mxu0 0
        %3364 = vmatprep.subr.bf16.mxu0 0
        %3365 = vmatpush1.bf16.msra.mxu0 0
        %3366 = vmatprep.subr.bf16.mxu0 0
        %3367 = vmatpush1.bf16.msra.mxu0 0
        %3368 = vmatprep.subr.bf16.mxu0 0
        %3369 = vmatpush1.bf16.msra.mxu0 0
        %3370 = vmatprep.subr.bf16.mxu0 0
        %3371 = vmatpush1.bf16.msra.mxu0 0
        %3372 = vmatprep.mubr.bf16.mxu0 0
        %3373 = vmatmul.mubr.bf16.gmra.mrb[0].mxu0 %v3174
        %v3374 = vpop.f32.mrb[0].mxu0
        %v3375 = vadd.f32 %v2888, %v3374
        %v3376 = vpop.f32.mrb[0].mxu0
        %v3377 = vadd.f32 %v2892, %v3376
        %v3378 = vpop.f32.mrb[0].mxu0
        %v3379 = vpop.f32.mrb[0].mxu0
        %3380 = vdwg.mxu0
        %3381 = vmatprep.subr.bf16.mxu0 %v3088
        %3382 = vmatpush1.bf16.msra.mxu0 %v3087
        %3383 = vmatprep.subr.bf16.mxu0 %v3104
        %3384 = vmatpush1.bf16.msra.mxu0 %v3103
        %3385 = vmatprep.subr.bf16.mxu0 %v3120
        %3386 = vmatpush1.bf16.msra.mxu0 %v3119
        %3387 = vmatprep.subr.bf16.mxu0 0
        %3388 = vmatpush1.bf16.msra.mxu0 0
        %3389 = vmatprep.subr.bf16.mxu0 0
        %3390 = vmatpush1.bf16.msra.mxu0 0
        %3391 = vmatprep.subr.bf16.mxu0 0
        %3392 = vmatpush1.bf16.msra.mxu0 0
        %3393 = vmatprep.subr.bf16.mxu0 0
        %3394 = vmatpush1.bf16.msra.mxu0 0
        %3395 = vmatprep.subr.bf16.mxu0 0
        %3396 = vmatpush1.bf16.msra.mxu0 0
        %3397 = vmatprep.subr.bf16.mxu0 0
        %3398 = vmatpush1.bf16.msra.mxu0 0
        %3399 = vmatprep.subr.bf16.mxu0 0
        %3400 = vmatpush1.bf16.msra.mxu0 0
        %3401 = vmatprep.subr.bf16.mxu0 0
        %3402 = vmatpush1.bf16.msra.mxu0 0
        %3403 = vmatprep.subr.bf16.mxu0 0
        %3404 = vmatpush1.bf16.msra.mxu0 0
        %3405 = vmatprep.subr.bf16.mxu0 0
        %3406 = vmatpush1.bf16.msra.mxu0 0
        %3407 = vmatprep.subr.bf16.mxu0 0
        %3408 = vmatpush1.bf16.msra.mxu0 0
        %3409 = vmatprep.subr.bf16.mxu0 0
        %3410 = vmatpush1.bf16.msra.mxu0 0
        %3411 = vmatprep.subr.bf16.mxu0 0
        %3412 = vmatpush1.bf16.msra.mxu0 0
        %3413 = vmatprep.mubr.bf16.mxu0 0
        %3414 = vmatmul.mubr.bf16.gmra.mrb[0].mxu0 %v3174
        %v3415 = vpop.f32.mrb[0].mxu0
        %v3416 = vadd.f32 %v2896, %v3415
        %v3417 = vpop.f32.mrb[0].mxu0
        %v3418 = vadd.f32 %v2900, %v3417
        %v3419 = vpop.f32.mrb[0].mxu0
        %v3420 = vpop.f32.mrb[0].mxu0
        %3421 = vdwg.mxu0
        %3422 = vmatprep.subr.bf16.mxu0 %v3090
        %3423 = vmatpush1.bf16.msra.mxu0 %v3089
        %3424 = vmatprep.subr.bf16.mxu0 %v3106
        %3425 = vmatpush1.bf16.msra.mxu0 %v3105
        %3426 = vmatprep.subr.bf16.mxu0 %v3122
        %3427 = vmatpush1.bf16.msra.mxu0 %v3121
        %3428 = vmatprep.subr.bf16.mxu0 0
        %3429 = vmatpush1.bf16.msra.mxu0 0
        %3430 = vmatprep.subr.bf16.mxu0 0
        %3431 = vmatpush1.bf16.msra.mxu0 0
        %3432 = vmatprep.subr.bf16.mxu0 0
        %3433 = vmatpush1.bf16.msra.mxu0 0
        %3434 = vmatprep.subr.bf16.mxu0 0
        %3435 = vmatpush1.bf16.msra.mxu0 0
        %3436 = vmatprep.subr.bf16.mxu0 0
        %3437 = vmatpush1.bf16.msra.mxu0 0
        %3438 = vmatprep.subr.bf16.mxu0 0
        %3439 = vmatpush1.bf16.msra.mxu0 0
        %3440 = vmatprep.subr.bf16.mxu0 0
        %3441 = vmatpush1.bf16.msra.mxu0 0
        %3442 = vmatprep.subr.bf16.mxu0 0
        %3443 = vmatpush1.bf16.msra.mxu0 0
        %3444 = vmatprep.subr.bf16.mxu0 0
        %3445 = vmatpush1.bf16.msra.mxu0 0
        %3446 = vmatprep.subr.bf16.mxu0 0
        %3447 = vmatpush1.bf16.msra.mxu0 0
        %3448 = vmatprep.subr.bf16.mxu0 0
        %3449 = vmatpush1.bf16.msra.mxu0 0
        %3450 = vmatprep.subr.bf16.mxu0 0
        %3451 = vmatpush1.bf16.msra.mxu0 0
        %3452 = vmatprep.subr.bf16.mxu0 0
        %3453 = vmatpush1.bf16.msra.mxu0 0
        %3454 = vmatprep.mubr.bf16.mxu0 0
        %3455 = vmatmul.mubr.bf16.gmra.mrb[0].mxu0 %v3174
        %v3456 = vpop.f32.mrb[0].mxu0
        %v3457 = vadd.f32 %v2904, %v3456
        %v3458 = vpop.f32.mrb[0].mxu0
        %v3459 = vadd.f32 %v2908, %v3458
        %v3460 = vpop.f32.mrb[0].mxu0
        %v3461 = vpop.f32.mrb[0].mxu0
        %3462 = vdwg.mxu0
        %3463 = vmatprep.subr.bf16.mxu0 %v3092
        %3464 = vmatpush1.bf16.msra.mxu0 %v3091
        %3465 = vmatprep.subr.bf16.mxu0 %v3108
        %3466 = vmatpush1.bf16.msra.mxu0 %v3107
        %3467 = vmatprep.subr.bf16.mxu0 %v3124
        %3468 = vmatpush1.bf16.msra.mxu0 %v3123
        %3469 = vmatprep.subr.bf16.mxu0 0
        %3470 = vmatpush1.bf16.msra.mxu0 0
        %3471 = vmatprep.subr.bf16.mxu0 0
        %3472 = vmatpush1.bf16.msra.mxu0 0
        %3473 = vmatprep.subr.bf16.mxu0 0
        %3474 = vmatpush1.bf16.msra.mxu0 0
        %3475 = vmatprep.subr.bf16.mxu0 0
        %3476 = vmatpush1.bf16.msra.mxu0 0
        %3477 = vmatprep.subr.bf16.mxu0 0
        %3478 = vmatpush1.bf16.msra.mxu0 0
        %3479 = vmatprep.subr.bf16.mxu0 0
        %3480 = vmatpush1.bf16.msra.mxu0 0
        %3481 = vmatprep.subr.bf16.mxu0 0
        %3482 = vmatpush1.bf16.msra.mxu0 0
        %3483 = vmatprep.subr.bf16.mxu0 0
        %3484 = vmatpush1.bf16.msra.mxu0 0
        %3485 = vmatprep.subr.bf16.mxu0 0
        %3486 = vmatpush1.bf16.msra.mxu0 0
        %3487 = vmatprep.subr.bf16.mxu0 0
        %3488 = vmatpush1.bf16.msra.mxu0 0
        %3489 = vmatprep.subr.bf16.mxu0 0
        %3490 = vmatpush1.bf16.msra.mxu0 0
        %3491 = vmatprep.subr.bf16.mxu0 0
        %3492 = vmatpush1.bf16.msra.mxu0 0
        %3493 = vmatprep.subr.bf16.mxu0 0
        %3494 = vmatpush1.bf16.msra.mxu0 0
        %3495 = vmatprep.mubr.bf16.mxu0 0
        %3496 = vmatmul.mubr.bf16.gmra.mrb[0].mxu0 %v3174
        %v3497 = vpop.f32.mrb[0].mxu0
        %v3498 = vadd.f32 %v2912, %v3497
        %v3499 = vpop.f32.mrb[0].mxu0
        %v3500 = vadd.f32 %v2916, %v3499
        %v3501 = vpop.f32.mrb[0].mxu0
        %v3502 = vpop.f32.mrb[0].mxu0
        %3503 = vdwg.mxu0
        %v3504 = vmul.f32 %v3211, 0.5
        %v3505 = vmul.f32 %v3213, 0.5
        %v3506 = vmul.f32 %v3252, 0.5
        %v3507 = vmul.f32 %v3254, 0.5
        %v3508 = vmul.f32 %v3293, 0.5
        %v3509 = vmul.f32 %v3295, 0.5
        %v3510 = vmul.f32 %v3334, 0.5
        %v3511 = vmul.f32 %v3336, 0.5
        %v3512 = vmul.f32 %v3375, 0.5
        %v3513 = vmul.f32 %v3377, 0.5
        %v3514 = vmul.f32 %v3416, 0.5
        %v3515 = vmul.f32 %v3418, 0.5
        %v3516 = vmul.f32 %v3457, 0.5
        %v3517 = vmul.f32 %v3459, 0.5
        %v3518 = vmul.f32 %v3498, 0.5
        %v3519 = vmul.f32 %v3500, 0.5
        %v3520 = vmul.f32 %v3211, 0.70710677
        %v3521 = vmul.f32 %v3213, 0.70710677
        %v3522 = vmul.f32 %v3252, 0.70710677
        %v3523 = vmul.f32 %v3254, 0.70710677
        %v3524 = vmul.f32 %v3293, 0.70710677
        %v3525 = vmul.f32 %v3295, 0.70710677
        %v3526 = vmul.f32 %v3334, 0.70710677
        %v3527 = vmul.f32 %v3336, 0.70710677
        %v3528 = vmul.f32 %v3375, 0.70710677
        %v3529 = vmul.f32 %v3377, 0.70710677
        %v3530 = vmul.f32 %v3416, 0.70710677
        %v3531 = vmul.f32 %v3418, 0.70710677
        %v3532 = vmul.f32 %v3457, 0.70710677
        %v3533 = vmul.f32 %v3459, 0.70710677
        %v3534 = vmul.f32 %v3498, 0.70710677
        %v3535 = vmul.f32 %v3500, 0.70710677
        %v3536 = verf.f32.pop %v3520
        %v3537 = verf.f32.pop %v3521
        %v3538 = verf.f32.pop %v3522
        %v3539 = verf.f32.pop %v3523
        %v3540 = verf.f32.pop %v3524
        %v3541 = verf.f32.pop %v3525
        %v3542 = verf.f32.pop %v3526
        %v3543 = verf.f32.pop %v3527
        %v3544 = verf.f32.pop %v3528
        %v3545 = verf.f32.pop %v3529
        %v3546 = verf.f32.pop %v3530
        %v3547 = verf.f32.pop %v3531
        %v3548 = verf.f32.pop %v3532
        %v3549 = verf.f32.pop %v3533
        %v3550 = verf.f32.pop %v3534
        %v3551 = verf.f32.pop %v3535
        %v3552 = vadd.f32 %v3536, 1.0
        %v3553 = vadd.f32 %v3537, 1.0
        %v3554 = vadd.f32 %v3538, 1.0
        %v3555 = vadd.f32 %v3539, 1.0
        %v3556 = vadd.f32 %v3540, 1.0
        %v3557 = vadd.f32 %v3541, 1.0
        %v3558 = vadd.f32 %v3542, 1.0
        %v3559 = vadd.f32 %v3543, 1.0
        %v3560 = vadd.f32 %v3544, 1.0
        %v3561 = vadd.f32 %v3545, 1.0
        %v3562 = vadd.f32 %v3546, 1.0
        %v3563 = vadd.f32 %v3547, 1.0
        %v3564 = vadd.f32 %v3548, 1.0
        %v3565 = vadd.f32 %v3549, 1.0
        %v3566 = vadd.f32 %v3550, 1.0
        %v3567 = vadd.f32 %v3551, 1.0
        %v3568 = vmul.f32 %v3504, %v3552
        %v3569 = vmul.f32 %v3505, %v3553
        %v3570 = vmul.f32 %v3506, %v3554
        %v3571 = vmul.f32 %v3507, %v3555
        %v3572 = vmul.f32 %v3508, %v3556
        %v3573 = vmul.f32 %v3509, %v3557
        %v3574 = vmul.f32 %v3510, %v3558
        %v3575 = vmul.f32 %v3511, %v3559
        %v3576 = vmul.f32 %v3512, %v3560
        %v3577 = vmul.f32 %v3513, %v3561
        %v3578 = vmul.f32 %v3514, %v3562
        %v3579 = vmul.f32 %v3515, %v3563
        %v3580 = vmul.f32 %v3516, %v3564
        %v3581 = vmul.f32 %v3517, %v3565
        %v3582 = vmul.f32 %v3518, %v3566
        %v3583 = vmul.f32 %v3519, %v3567
        %v3584 = vpack.c.bf16 %v3568, %v3568
        %v3585 = vpack.c.bf16 %v3569, %v3569
        %v3586 = vpack.c.bf16 %v3570, %v3570
        %v3587 = vpack.c.bf16 %v3571, %v3571
        %v3588 = vpack.c.bf16 %v3572, %v3572
        %v3589 = vpack.c.bf16 %v3573, %v3573
        %v3590 = vpack.c.bf16 %v3574, %v3574
        %v3591 = vpack.c.bf16 %v3575, %v3575
        %v3592 = vpack.c.bf16 %v3576, %v3576
        %v3593 = vpack.c.bf16 %v3577, %v3577
        %v3594 = vpack.c.bf16 %v3578, %v3578
        %v3595 = vpack.c.bf16 %v3579, %v3579
        %v3596 = vpack.c.bf16 %v3580, %v3580
        %v3597 = vpack.c.bf16 %v3581, %v3581
        %v3598 = vpack.c.bf16 %v3582, %v3582
        %v3599 = vpack.c.bf16 %v3583, %v3583
        %v3600 = vld [vmem:[%s744] sm:$0xf]
        %v3601 = vld [vmem:[%s744 + $0x4] sm:$0xf]
        %v3602 = vld [vmem:[%s744 + $0x8] sm:$0xf]
        %v3603 = vld [vmem:[%s744 + $0xc] sm:$0xf]
        %v3604 = vld [vmem:[%s744 + $0x10] sm:$0xf]
        %v3605 = vld [vmem:[%s744 + $0x14] sm:$0xf]
        %v3606 = vld [vmem:[%s744 + $0x18] sm:$0xf]
        %v3607 = vld [vmem:[%s744 + $0x1c] sm:$0xf]
        %v3608 = vld [vmem:[%s744 + $0x20] sm:$0xf]
        %v3609 = vld [vmem:[%s744 + $0x24] sm:$0xf]
        %v3610 = vld [vmem:[%s744 + $0x28] sm:$0xf]
        %v3611 = vld [vmem:[%s744 + $0x2c] sm:$0xf]
        %v3612 = vld [vmem:[%s744 + $0x30] sm:$0xf]
        %v3613 = vld [vmem:[%s744 + $0x34] sm:$0xf]
        %v3614 = vld [vmem:[%s744 + $0x38] sm:$0xf]
        %v3615 = vld [vmem:[%s744 + $0x3c] sm:$0xf]
        %v3616 = vld [vmem:[%s744 + $0x40] sm:$0xf]
        %v3617 = vld [vmem:[%s744 + $0x44] sm:$0xf]
        %v3618 = vld [vmem:[%s744 + $0x48] sm:$0xf]
        %v3619 = vld [vmem:[%s744 + $0x4c] sm:$0xf]
        %v3620 = vld [vmem:[%s744 + $0x50] sm:$0xf]
        %v3621 = vld [vmem:[%s744 + $0x54] sm:$0xf]
        %v3622 = vld [vmem:[%s744 + $0x58] sm:$0xf]
        %v3623 = vld [vmem:[%s744 + $0x5c] sm:$0xf]
        %v3624 = vld [vmem:[%s744 + $0x60] sm:$0xf]
        %v3625 = vld [vmem:[%s744 + $0x64] sm:$0xf]
        %v3626 = vld [vmem:[%s744 + $0x68] sm:$0xf]
        %v3627 = vld [vmem:[%s744 + $0x6c] sm:$0xf]
        %v3628 = vld [vmem:[%s744 + $0x70] sm:$0xf]
        %v3629 = vld [vmem:[%s744 + $0x74] sm:$0xf]
        %v3630 = vld [vmem:[%s744 + $0x78] sm:$0xf]
        %v3631 = vld [vmem:[%s744 + $0x7c] sm:$0xf]
        %v3632 = vld [vmem:[%s744 + $0x80] sm:$0xf]
        %v3633 = vld [vmem:[%s744 + $0x84] sm:$0xf]
        %v3634 = vld [vmem:[%s744 + $0x88] sm:$0xf]
        %v3635 = vld [vmem:[%s744 + $0x8c] sm:$0xf]
        %v3636 = vld [vmem:[%s744 + $0x90] sm:$0xf]
        %v3637 = vld [vmem:[%s744 + $0x94] sm:$0xf]
        %v3638 = vld [vmem:[%s744 + $0x98] sm:$0xf]
        %v3639 = vld [vmem:[%s744 + $0x9c] sm:$0xf]
        %v3640 = vld [vmem:[%s744 + $0xa0] sm:$0xf]
        %v3641 = vld [vmem:[%s744 + $0xa4] sm:$0xf]
        %v3642 = vld [vmem:[%s744 + $0xa8] sm:$0xf]
        %v3643 = vld [vmem:[%s744 + $0xac] sm:$0xf]
        %v3644 = vld [vmem:[%s744 + $0xb0] sm:$0xf]
        %v3645 = vld [vmem:[%s744 + $0xb4] sm:$0xf]
        %v3646 = vld [vmem:[%s744 + $0xb8] sm:$0xf]
        %v3647 = vld [vmem:[%s744 + $0xbc] sm:$0xf]
        %v3648 = vld [vmem:[%s744 + $0xc0] sm:$0xf]
        %v3649 = vld [vmem:[%s744 + $0xc4] sm:$0xf]
        %v3650 = vld [vmem:[%s744 + $0xc8] sm:$0xf]
        %v3651 = vld [vmem:[%s744 + $0xcc] sm:$0xf]
        %v3652 = vld [vmem:[%s744 + $0xd0] sm:$0xf]
        %v3653 = vld [vmem:[%s744 + $0xd4] sm:$0xf]
        %v3654 = vld [vmem:[%s744 + $0xd8] sm:$0xf]
        %v3655 = vld [vmem:[%s744 + $0xdc] sm:$0xf]
        %v3656 = vld [vmem:[%s744 + $0xe0] sm:$0xf]
        %v3657 = vld [vmem:[%s744 + $0xe4] sm:$0xf]
        %v3658 = vld [vmem:[%s744 + $0xe8] sm:$0xf]
        %v3659 = vld [vmem:[%s744 + $0xec] sm:$0xf]
        %v3660 = vld [vmem:[%s744 + $0xf0] sm:$0xf]
        %v3661 = vld [vmem:[%s744 + $0xf4] sm:$0xf]
        %v3662 = vld [vmem:[%s744 + $0xf8] sm:$0xf]
        %v3663 = vld [vmem:[%s744 + $0xfc] sm:$0xf]
        %v3664 = vld [vmem:[%s744 + $0x100] sm:$0xf]
        %v3665 = vld [vmem:[%s744 + $0x104] sm:$0xf]
        %v3666 = vld [vmem:[%s744 + $0x108] sm:$0xf]
        %v3667 = vld [vmem:[%s744 + $0x10c] sm:$0xf]
        %v3668 = vld [vmem:[%s744 + $0x110] sm:$0xf]
        %v3669 = vld [vmem:[%s744 + $0x114] sm:$0xf]
        %v3670 = vld [vmem:[%s744 + $0x118] sm:$0xf]
        %v3671 = vld [vmem:[%s744 + $0x11c] sm:$0xf]
        %v3672 = vld [vmem:[%s744 + $0x120] sm:$0xf]
        %v3673 = vld [vmem:[%s744 + $0x124] sm:$0xf]
        %v3674 = vld [vmem:[%s744 + $0x128] sm:$0xf]
        %v3675 = vld [vmem:[%s744 + $0x12c] sm:$0xf]
        %v3676 = vld [vmem:[%s744 + $0x130] sm:$0xf]
        %v3677 = vld [vmem:[%s744 + $0x134] sm:$0xf]
        %v3678 = vld [vmem:[%s744 + $0x138] sm:$0xf]
        %v3679 = vld [vmem:[%s744 + $0x13c] sm:$0xf]
        %v3680 = vld [vmem:[%s744 + $0x140] sm:$0xf]
        %v3681 = vld [vmem:[%s744 + $0x144] sm:$0xf]
        %v3682 = vld [vmem:[%s744 + $0x148] sm:$0xf]
        %v3683 = vld [vmem:[%s744 + $0x14c] sm:$0xf]
        %v3684 = vld [vmem:[%s744 + $0x150] sm:$0xf]
        %v3685 = vld [vmem:[%s744 + $0x154] sm:$0xf]
        %v3686 = vld [vmem:[%s744 + $0x158] sm:$0xf]
        %v3687 = vld [vmem:[%s744 + $0x15c] sm:$0xf]
        %v3688 = vld [vmem:[%s744 + $0x160] sm:$0xf]
        %v3689 = vld [vmem:[%s744 + $0x164] sm:$0xf]
        %v3690 = vld [vmem:[%s744 + $0x168] sm:$0xf]
        %v3691 = vld [vmem:[%s744 + $0x16c] sm:$0xf]
        %v3692 = vld [vmem:[%s744 + $0x170] sm:$0xf]
        %v3693 = vld [vmem:[%s744 + $0x174] sm:$0xf]
        %v3694 = vld [vmem:[%s744 + $0x178] sm:$0xf]
        %v3695 = vld [vmem:[%s744 + $0x17c] sm:$0xf]
        %v3696 = vld [vmem:[%s744 + $0x180] sm:$0xf]
        %v3697 = vld [vmem:[%s744 + $0x184] sm:$0xf]
        %v3698 = vld [vmem:[%s744 + $0x188] sm:$0xf]
        %v3699 = vld [vmem:[%s744 + $0x18c] sm:$0xf]
        %v3700 = vld [vmem:[%s744 + $0x190] sm:$0xf]
        %v3701 = vld [vmem:[%s744 + $0x194] sm:$0xf]
        %v3702 = vld [vmem:[%s744 + $0x198] sm:$0xf]
        %v3703 = vld [vmem:[%s744 + $0x19c] sm:$0xf]
        %v3704 = vld [vmem:[%s744 + $0x1a0] sm:$0xf]
        %v3705 = vld [vmem:[%s744 + $0x1a4] sm:$0xf]
        %v3706 = vld [vmem:[%s744 + $0x1a8] sm:$0xf]
        %v3707 = vld [vmem:[%s744 + $0x1ac] sm:$0xf]
        %v3708 = vld [vmem:[%s744 + $0x1b0] sm:$0xf]
        %v3709 = vld [vmem:[%s744 + $0x1b4] sm:$0xf]
        %v3710 = vld [vmem:[%s744 + $0x1b8] sm:$0xf]
        %v3711 = vld [vmem:[%s744 + $0x1bc] sm:$0xf]
        %v3712 = vld [vmem:[%s744 + $0x1c0] sm:$0xf]
        %v3713 = vld [vmem:[%s744 + $0x1c4] sm:$0xf]
        %v3714 = vld [vmem:[%s744 + $0x1c8] sm:$0xf]
        %v3715 = vld [vmem:[%s744 + $0x1cc] sm:$0xf]
        %v3716 = vld [vmem:[%s744 + $0x1d0] sm:$0xf]
        %v3717 = vld [vmem:[%s744 + $0x1d4] sm:$0xf]
        %v3718 = vld [vmem:[%s744 + $0x1d8] sm:$0xf]
        %v3719 = vld [vmem:[%s744 + $0x1dc] sm:$0xf]
        %v3720 = vld [vmem:[%s744 + $0x1e0] sm:$0xf]
        %v3721 = vld [vmem:[%s744 + $0x1e4] sm:$0xf]
        %v3722 = vld [vmem:[%s744 + $0x1e8] sm:$0xf]
        %v3723 = vld [vmem:[%s744 + $0x1ec] sm:$0xf]
        %v3724 = vld [vmem:[%s744 + $0x1f0] sm:$0xf]
        %v3725 = vld [vmem:[%s744 + $0x1f4] sm:$0xf]
        %v3726 = vld [vmem:[%s744 + $0x1f8] sm:$0xf]
        %v3727 = vld [vmem:[%s744 + $0x1fc] sm:$0xf]
        %v3728 = vld [vmem:[%s744 + $0x200] sm:$0xf]
        %v3729 = vld [vmem:[%s744 + $0x204] sm:$0xf]
        %v3730 = vld [vmem:[%s744 + $0x208] sm:$0xf]
        %v3731 = vld [vmem:[%s744 + $0x20c] sm:$0xf]
        %v3732 = vld [vmem:[%s744 + $0x210] sm:$0xf]
        %v3733 = vld [vmem:[%s744 + $0x214] sm:$0xf]
        %v3734 = vld [vmem:[%s744 + $0x218] sm:$0xf]
        %v3735 = vld [vmem:[%s744 + $0x21c] sm:$0xf]
        %v3736 = vld [vmem:[%s744 + $0x220] sm:$0xf]
        %v3737 = vld [vmem:[%s744 + $0x224] sm:$0xf]
        %v3738 = vld [vmem:[%s744 + $0x228] sm:$0xf]
        %v3739 = vld [vmem:[%s744 + $0x22c] sm:$0xf]
        %v3740 = vld [vmem:[%s744 + $0x230] sm:$0xf]
        %v3741 = vld [vmem:[%s744 + $0x234] sm:$0xf]
        %v3742 = vld [vmem:[%s744 + $0x238] sm:$0xf]
        %v3743 = vld [vmem:[%s744 + $0x23c] sm:$0xf]
        %v3744 = vld [vmem:[%s744 + $0x240] sm:$0xf]
        %v3745 = vld [vmem:[%s744 + $0x244] sm:$0xf]
        %v3746 = vld [vmem:[%s744 + $0x248] sm:$0xf]
        %v3747 = vld [vmem:[%s744 + $0x24c] sm:$0xf]
        %v3748 = vld [vmem:[%s744 + $0x250] sm:$0xf]
        %v3749 = vld [vmem:[%s744 + $0x254] sm:$0xf]
        %v3750 = vld [vmem:[%s744 + $0x258] sm:$0xf]
        %v3751 = vld [vmem:[%s744 + $0x25c] sm:$0xf]
        %v3752 = vld [vmem:[%s744 + $0x260] sm:$0xf]
        %v3753 = vld [vmem:[%s744 + $0x264] sm:$0xf]
        %v3754 = vld [vmem:[%s744 + $0x268] sm:$0xf]
        %v3755 = vld [vmem:[%s744 + $0x26c] sm:$0xf]
        %v3756 = vld [vmem:[%s744 + $0x270] sm:$0xf]
        %v3757 = vld [vmem:[%s744 + $0x274] sm:$0xf]
        %v3758 = vld [vmem:[%s744 + $0x278] sm:$0xf]
        %v3759 = vld [vmem:[%s744 + $0x27c] sm:$0xf]
        %v3760 = vld [vmem:[%s744 + $0x280] sm:$0xf]
        %v3761 = vld [vmem:[%s744 + $0x284] sm:$0xf]
        %v3762 = vld [vmem:[%s744 + $0x288] sm:$0xf]
        %v3763 = vld [vmem:[%s744 + $0x28c] sm:$0xf]
        %v3764 = vld [vmem:[%s744 + $0x290] sm:$0xf]
        %v3765 = vld [vmem:[%s744 + $0x294] sm:$0xf]
        %v3766 = vld [vmem:[%s744 + $0x298] sm:$0xf]
        %v3767 = vld [vmem:[%s744 + $0x29c] sm:$0xf]
        %v3768 = vld [vmem:[%s744 + $0x2a0] sm:$0xf]
        %v3769 = vld [vmem:[%s744 + $0x2a4] sm:$0xf]
        %v3770 = vld [vmem:[%s744 + $0x2a8] sm:$0xf]
        %v3771 = vld [vmem:[%s744 + $0x2ac] sm:$0xf]
        %v3772 = vld [vmem:[%s744 + $0x2b0] sm:$0xf]
        %v3773 = vld [vmem:[%s744 + $0x2b4] sm:$0xf]
        %v3774 = vld [vmem:[%s744 + $0x2b8] sm:$0xf]
        %v3775 = vld [vmem:[%s744 + $0x2bc] sm:$0xf]
        %v3776 = vld [vmem:[%s744 + $0x2c0] sm:$0xf]
        %v3777 = vld [vmem:[%s744 + $0x2c4] sm:$0xf]
        %v3778 = vld [vmem:[%s744 + $0x2c8] sm:$0xf]
        %v3779 = vld [vmem:[%s744 + $0x2cc] sm:$0xf]
        %v3780 = vld [vmem:[%s744 + $0x2d0] sm:$0xf]
        %v3781 = vld [vmem:[%s744 + $0x2d4] sm:$0xf]
        %v3782 = vld [vmem:[%s744 + $0x2d8] sm:$0xf]
        %v3783 = vld [vmem:[%s744 + $0x2dc] sm:$0xf]
        %v3784 = vld [vmem:[%s744 + $0x2e0] sm:$0xf]
        %v3785 = vld [vmem:[%s744 + $0x2e4] sm:$0xf]
        %v3786 = vld [vmem:[%s744 + $0x2e8] sm:$0xf]
        %v3787 = vld [vmem:[%s744 + $0x2ec] sm:$0xf]
        %v3788 = vld [vmem:[%s744 + $0x2f0] sm:$0xf]
        %v3789 = vld [vmem:[%s744 + $0x2f4] sm:$0xf]
        %v3790 = vld [vmem:[%s744 + $0x2f8] sm:$0xf]
        %v3791 = vld [vmem:[%s744 + $0x2fc] sm:$0xf]
        %v3792 = vld [vmem:[%s744 + $0x300] sm:$0xf]
        %v3793 = vld [vmem:[%s744 + $0x304] sm:$0xf]
        %v3794 = vld [vmem:[%s744 + $0x308] sm:$0xf]
        %v3795 = vld [vmem:[%s744 + $0x30c] sm:$0xf]
        %v3796 = vld [vmem:[%s744 + $0x310] sm:$0xf]
        %v3797 = vld [vmem:[%s744 + $0x314] sm:$0xf]
        %v3798 = vld [vmem:[%s744 + $0x318] sm:$0xf]
        %v3799 = vld [vmem:[%s744 + $0x31c] sm:$0xf]
        %v3800 = vld [vmem:[%s744 + $0x320] sm:$0xf]
        %v3801 = vld [vmem:[%s744 + $0x324] sm:$0xf]
        %v3802 = vld [vmem:[%s744 + $0x328] sm:$0xf]
        %v3803 = vld [vmem:[%s744 + $0x32c] sm:$0xf]
        %v3804 = vld [vmem:[%s744 + $0x330] sm:$0xf]
        %v3805 = vld [vmem:[%s744 + $0x334] sm:$0xf]
        %v3806 = vld [vmem:[%s744 + $0x338] sm:$0xf]
        %v3807 = vld [vmem:[%s744 + $0x33c] sm:$0xf]
        %v3808 = vld [vmem:[%s744 + $0x340] sm:$0xf]
        %v3809 = vld [vmem:[%s744 + $0x344] sm:$0xf]
        %v3810 = vld [vmem:[%s744 + $0x348] sm:$0xf]
        %v3811 = vld [vmem:[%s744 + $0x34c] sm:$0xf]
        %v3812 = vld [vmem:[%s744 + $0x350] sm:$0xf]
        %v3813 = vld [vmem:[%s744 + $0x354] sm:$0xf]
        %v3814 = vld [vmem:[%s744 + $0x358] sm:$0xf]
        %v3815 = vld [vmem:[%s744 + $0x35c] sm:$0xf]
        %v3816 = vld [vmem:[%s744 + $0x360] sm:$0xf]
        %v3817 = vld [vmem:[%s744 + $0x364] sm:$0xf]
        %v3818 = vld [vmem:[%s744 + $0x368] sm:$0xf]
        %v3819 = vld [vmem:[%s744 + $0x36c] sm:$0xf]
        %v3820 = vld [vmem:[%s744 + $0x370] sm:$0xf]
        %v3821 = vld [vmem:[%s744 + $0x374] sm:$0xf]
        %v3822 = vld [vmem:[%s744 + $0x378] sm:$0xf]
        %v3823 = vld [vmem:[%s744 + $0x37c] sm:$0xf]
        %v3824 = vld [vmem:[%s744 + $0x380] sm:$0xf]
        %v3825 = vld [vmem:[%s744 + $0x384] sm:$0xf]
        %v3826 = vld [vmem:[%s744 + $0x388] sm:$0xf]
        %v3827 = vld [vmem:[%s744 + $0x38c] sm:$0xf]
        %v3828 = vld [vmem:[%s744 + $0x390] sm:$0xf]
        %v3829 = vld [vmem:[%s744 + $0x394] sm:$0xf]
        %v3830 = vld [vmem:[%s744 + $0x398] sm:$0xf]
        %v3831 = vld [vmem:[%s744 + $0x39c] sm:$0xf]
        %v3832 = vld [vmem:[%s744 + $0x3a0] sm:$0xf]
        %v3833 = vld [vmem:[%s744 + $0x3a4] sm:$0xf]
        %v3834 = vld [vmem:[%s744 + $0x3a8] sm:$0xf]
        %v3835 = vld [vmem:[%s744 + $0x3ac] sm:$0xf]
        %v3836 = vld [vmem:[%s744 + $0x3b0] sm:$0xf]
        %v3837 = vld [vmem:[%s744 + $0x3b4] sm:$0xf]
        %v3838 = vld [vmem:[%s744 + $0x3b8] sm:$0xf]
        %v3839 = vld [vmem:[%s744 + $0x3bc] sm:$0xf]
        %v3840 = vld [vmem:[%s744 + $0x3c0] sm:$0xf]
        %v3841 = vld [vmem:[%s744 + $0x3c4] sm:$0xf]
        %v3842 = vld [vmem:[%s744 + $0x3c8] sm:$0xf]
        %v3843 = vld [vmem:[%s744 + $0x3cc] sm:$0xf]
        %v3844 = vld [vmem:[%s744 + $0x3d0] sm:$0xf]
        %v3845 = vld [vmem:[%s744 + $0x3d4] sm:$0xf]
        %v3846 = vld [vmem:[%s744 + $0x3d8] sm:$0xf]
        %v3847 = vld [vmem:[%s744 + $0x3dc] sm:$0xf]
        %v3848 = vld [vmem:[%s744 + $0x3e0] sm:$0xf]
        %v3849 = vld [vmem:[%s744 + $0x3e4] sm:$0xf]
        %v3850 = vld [vmem:[%s744 + $0x3e8] sm:$0xf]
        %v3851 = vld [vmem:[%s744 + $0x3ec] sm:$0xf]
        %v3852 = vld [vmem:[%s744 + $0x3f0] sm:$0xf]
        %v3853 = vld [vmem:[%s744 + $0x3f4] sm:$0xf]
        %v3854 = vld [vmem:[%s744 + $0x3f8] sm:$0xf]
        %v3855 = vld [vmem:[%s744 + $0x3fc] sm:$0xf]
        %v3856 = vld [vmem:[%s758] sm:$0x1]
        %v3858 = vlaneseq
        %v3859 = vshrl.u32 %v3858, 7
        %v3860 = vsub.s32 0, %v3859
        %v3861 = vrot.slane %v3856, %v3860
        %v4119 = vunpack.c.l.b16 %v3600
        %v4120 = vunpack.c.l.b16 %v3601
        %v4121 = vunpack.c.l.b16 %v3602
        %v4122 = vunpack.c.l.b16 %v3603
        %v4123 = vunpack.c.l.b16 %v3604
        %v4124 = vunpack.c.l.b16 %v3605
        %v4125 = vunpack.c.l.b16 %v3606
        %v4126 = vunpack.c.l.b16 %v3607
        %v4127 = vunpack.c.l.b16 %v3608
        %v4128 = vunpack.c.l.b16 %v3609
        %v4129 = vunpack.c.l.b16 %v3610
        %v4130 = vunpack.c.l.b16 %v3611
        %v4131 = vunpack.c.l.b16 %v3612
        %v4132 = vunpack.c.l.b16 %v3613
        %v4133 = vunpack.c.l.b16 %v3614
        %v4134 = vunpack.c.l.b16 %v3615
        %v4135 = vunpack.c.l.b16 %v3616
        %v4136 = vunpack.c.l.b16 %v3617
        %v4137 = vunpack.c.l.b16 %v3618
        %v4138 = vunpack.c.l.b16 %v3619
        %v4139 = vunpack.c.l.b16 %v3620
        %v4140 = vunpack.c.l.b16 %v3621
        %v4141 = vunpack.c.l.b16 %v3622
        %v4142 = vunpack.c.l.b16 %v3623
        %v4143 = vunpack.c.l.b16 %v3624
        %v4144 = vunpack.c.l.b16 %v3625
        %v4145 = vunpack.c.l.b16 %v3626
        %v4146 = vunpack.c.l.b16 %v3627
        %v4147 = vunpack.c.l.b16 %v3628
        %v4148 = vunpack.c.l.b16 %v3629
        %v4149 = vunpack.c.l.b16 %v3630
        %v4150 = vunpack.c.l.b16 %v3631
        %v4151 = vunpack.c.l.b16 %v3632
        %v4152 = vunpack.c.l.b16 %v3633
        %v4153 = vunpack.c.l.b16 %v3634
        %v4154 = vunpack.c.l.b16 %v3635
        %v4155 = vunpack.c.l.b16 %v3636
        %v4156 = vunpack.c.l.b16 %v3637
        %v4157 = vunpack.c.l.b16 %v3638
        %v4158 = vunpack.c.l.b16 %v3639
        %v4159 = vunpack.c.l.b16 %v3640
        %v4160 = vunpack.c.l.b16 %v3641
        %v4161 = vunpack.c.l.b16 %v3642
        %v4162 = vunpack.c.l.b16 %v3643
        %v4163 = vunpack.c.l.b16 %v3644
        %v4164 = vunpack.c.l.b16 %v3645
        %v4165 = vunpack.c.l.b16 %v3646
        %v4166 = vunpack.c.l.b16 %v3647
        %v4167 = vunpack.c.l.b16 %v3648
        %v4168 = vunpack.c.l.b16 %v3649
        %v4169 = vunpack.c.l.b16 %v3650
        %v4170 = vunpack.c.l.b16 %v3651
        %v4171 = vunpack.c.l.b16 %v3652
        %v4172 = vunpack.c.l.b16 %v3653
        %v4173 = vunpack.c.l.b16 %v3654
        %v4174 = vunpack.c.l.b16 %v3655
        %v4175 = vunpack.c.l.b16 %v3656
        %v4176 = vunpack.c.l.b16 %v3657
        %v4177 = vunpack.c.l.b16 %v3658
        %v4178 = vunpack.c.l.b16 %v3659
        %v4179 = vunpack.c.l.b16 %v3660
        %v4180 = vunpack.c.l.b16 %v3661
        %v4181 = vunpack.c.l.b16 %v3662
        %v4182 = vunpack.c.l.b16 %v3663
        %v4183 = vunpack.c.l.b16 %v3664
        %v4184 = vunpack.c.l.b16 %v3665
        %v4185 = vunpack.c.l.b16 %v3666
        %v4186 = vunpack.c.l.b16 %v3667
        %v4187 = vunpack.c.l.b16 %v3668
        %v4188 = vunpack.c.l.b16 %v3669
        %v4189 = vunpack.c.l.b16 %v3670
        %v4190 = vunpack.c.l.b16 %v3671
        %v4191 = vunpack.c.l.b16 %v3672
        %v4192 = vunpack.c.l.b16 %v3673
        %v4193 = vunpack.c.l.b16 %v3674
        %v4194 = vunpack.c.l.b16 %v3675
        %v4195 = vunpack.c.l.b16 %v3676
        %v4196 = vunpack.c.l.b16 %v3677
        %v4197 = vunpack.c.l.b16 %v3678
        %v4198 = vunpack.c.l.b16 %v3679
        %v4199 = vunpack.c.l.b16 %v3680
        %v4200 = vunpack.c.l.b16 %v3681
        %v4201 = vunpack.c.l.b16 %v3682
        %v4202 = vunpack.c.l.b16 %v3683
        %v4203 = vunpack.c.l.b16 %v3684
        %v4204 = vunpack.c.l.b16 %v3685
        %v4205 = vunpack.c.l.b16 %v3686
        %v4206 = vunpack.c.l.b16 %v3687
        %v4207 = vunpack.c.l.b16 %v3688
        %v4208 = vunpack.c.l.b16 %v3689
        %v4209 = vunpack.c.l.b16 %v3690
        %v4210 = vunpack.c.l.b16 %v3691
        %v4211 = vunpack.c.l.b16 %v3692
        %v4212 = vunpack.c.l.b16 %v3693
        %v4213 = vunpack.c.l.b16 %v3694
        %v4214 = vunpack.c.l.b16 %v3695
        %v4215 = vunpack.c.l.b16 %v3696
        %v4216 = vunpack.c.l.b16 %v3697
        %v4217 = vunpack.c.l.b16 %v3698
        %v4218 = vunpack.c.l.b16 %v3699
        %v4219 = vunpack.c.l.b16 %v3700
        %v4220 = vunpack.c.l.b16 %v3701
        %v4221 = vunpack.c.l.b16 %v3702
        %v4222 = vunpack.c.l.b16 %v3703
        %v4223 = vunpack.c.l.b16 %v3704
        %v4224 = vunpack.c.l.b16 %v3705
        %v4225 = vunpack.c.l.b16 %v3706
        %v4226 = vunpack.c.l.b16 %v3707
        %v4227 = vunpack.c.l.b16 %v3708
        %v4228 = vunpack.c.l.b16 %v3709
        %v4229 = vunpack.c.l.b16 %v3710
        %v4230 = vunpack.c.l.b16 %v3711
        %v4231 = vunpack.c.l.b16 %v3712
        %v4232 = vunpack.c.l.b16 %v3713
        %v4233 = vunpack.c.l.b16 %v3714
        %v4234 = vunpack.c.l.b16 %v3715
        %v4235 = vunpack.c.l.b16 %v3716
        %v4236 = vunpack.c.l.b16 %v3717
        %v4237 = vunpack.c.l.b16 %v3718
        %v4238 = vunpack.c.l.b16 %v3719
        %v4239 = vunpack.c.l.b16 %v3720
        %v4240 = vunpack.c.l.b16 %v3721
        %v4241 = vunpack.c.l.b16 %v3722
        %v4242 = vunpack.c.l.b16 %v3723
        %v4243 = vunpack.c.l.b16 %v3724
        %v4244 = vunpack.c.l.b16 %v3725
        %v4245 = vunpack.c.l.b16 %v3726
        %v4246 = vunpack.c.l.b16 %v3727
        %v4247 = vunpack.c.l.b16 %v3728
        %v4248 = vunpack.c.l.b16 %v3729
        %v4249 = vunpack.c.l.b16 %v3730
        %v4250 = vunpack.c.l.b16 %v3731
        %v4251 = vunpack.c.l.b16 %v3732
        %v4252 = vunpack.c.l.b16 %v3733
        %v4253 = vunpack.c.l.b16 %v3734
        %v4254 = vunpack.c.l.b16 %v3735
        %v4255 = vunpack.c.l.b16 %v3736
        %v4256 = vunpack.c.l.b16 %v3737
        %v4257 = vunpack.c.l.b16 %v3738
        %v4258 = vunpack.c.l.b16 %v3739
        %v4259 = vunpack.c.l.b16 %v3740
        %v4260 = vunpack.c.l.b16 %v3741
        %v4261 = vunpack.c.l.b16 %v3742
        %v4262 = vunpack.c.l.b16 %v3743
        %v4263 = vunpack.c.l.b16 %v3744
        %v4264 = vunpack.c.l.b16 %v3745
        %v4265 = vunpack.c.l.b16 %v3746
        %v4266 = vunpack.c.l.b16 %v3747
        %v4267 = vunpack.c.l.b16 %v3748
        %v4268 = vunpack.c.l.b16 %v3749
        %v4269 = vunpack.c.l.b16 %v3750
        %v4270 = vunpack.c.l.b16 %v3751
        %v4271 = vunpack.c.l.b16 %v3752
        %v4272 = vunpack.c.l.b16 %v3753
        %v4273 = vunpack.c.l.b16 %v3754
        %v4274 = vunpack.c.l.b16 %v3755
        %v4275 = vunpack.c.l.b16 %v3756
        %v4276 = vunpack.c.l.b16 %v3757
        %v4277 = vunpack.c.l.b16 %v3758
        %v4278 = vunpack.c.l.b16 %v3759
        %v4279 = vunpack.c.l.b16 %v3760
        %v4280 = vunpack.c.l.b16 %v3761
        %v4281 = vunpack.c.l.b16 %v3762
        %v4282 = vunpack.c.l.b16 %v3763
        %v4283 = vunpack.c.l.b16 %v3764
        %v4284 = vunpack.c.l.b16 %v3765
        %v4285 = vunpack.c.l.b16 %v3766
        %v4286 = vunpack.c.l.b16 %v3767
        %v4287 = vunpack.c.l.b16 %v3768
        %v4288 = vunpack.c.l.b16 %v3769
        %v4289 = vunpack.c.l.b16 %v3770
        %v4290 = vunpack.c.l.b16 %v3771
        %v4291 = vunpack.c.l.b16 %v3772
        %v4292 = vunpack.c.l.b16 %v3773
        %v4293 = vunpack.c.l.b16 %v3774
        %v4294 = vunpack.c.l.b16 %v3775
        %v4295 = vunpack.c.l.b16 %v3776
        %v4296 = vunpack.c.l.b16 %v3777
        %v4297 = vunpack.c.l.b16 %v3778
        %v4298 = vunpack.c.l.b16 %v3779
        %v4299 = vunpack.c.l.b16 %v3780
        %v4300 = vunpack.c.l.b16 %v3781
        %v4301 = vunpack.c.l.b16 %v3782
        %v4302 = vunpack.c.l.b16 %v3783
        %v4303 = vunpack.c.l.b16 %v3784
        %v4304 = vunpack.c.l.b16 %v3785
        %v4305 = vunpack.c.l.b16 %v3786
        %v4306 = vunpack.c.l.b16 %v3787
        %v4307 = vunpack.c.l.b16 %v3788
        %v4308 = vunpack.c.l.b16 %v3789
        %v4309 = vunpack.c.l.b16 %v3790
        %v4310 = vunpack.c.l.b16 %v3791
        %v4311 = vunpack.c.l.b16 %v3792
        %v4312 = vunpack.c.l.b16 %v3793
        %v4313 = vunpack.c.l.b16 %v3794
        %v4314 = vunpack.c.l.b16 %v3795
        %v4315 = vunpack.c.l.b16 %v3796
        %v4316 = vunpack.c.l.b16 %v3797
        %v4317 = vunpack.c.l.b16 %v3798
        %v4318 = vunpack.c.l.b16 %v3799
        %v4319 = vunpack.c.l.b16 %v3800
        %v4320 = vunpack.c.l.b16 %v3801
        %v4321 = vunpack.c.l.b16 %v3802
        %v4322 = vunpack.c.l.b16 %v3803
        %v4323 = vunpack.c.l.b16 %v3804
        %v4324 = vunpack.c.l.b16 %v3805
        %v4325 = vunpack.c.l.b16 %v3806
        %v4326 = vunpack.c.l.b16 %v3807
        %v4327 = vunpack.c.l.b16 %v3808
        %v4328 = vunpack.c.l.b16 %v3809
        %v4329 = vunpack.c.l.b16 %v3810
        %v4330 = vunpack.c.l.b16 %v3811
        %v4331 = vunpack.c.l.b16 %v3812
        %v4332 = vunpack.c.l.b16 %v3813
        %v4333 = vunpack.c.l.b16 %v3814
        %v4334 = vunpack.c.l.b16 %v3815
        %v4335 = vunpack.c.l.b16 %v3816
        %v4336 = vunpack.c.l.b16 %v3817
        %v4337 = vunpack.c.l.b16 %v3818
        %v4338 = vunpack.c.l.b16 %v3819
        %v4339 = vunpack.c.l.b16 %v3820
        %v4340 = vunpack.c.l.b16 %v3821
        %v4341 = vunpack.c.l.b16 %v3822
        %v4342 = vunpack.c.l.b16 %v3823
        %v4343 = vunpack.c.l.b16 %v3824
        %v4344 = vunpack.c.l.b16 %v3825
        %v4345 = vunpack.c.l.b16 %v3826
        %v4346 = vunpack.c.l.b16 %v3827
        %v4347 = vunpack.c.l.b16 %v3828
        %v4348 = vunpack.c.l.b16 %v3829
        %v4349 = vunpack.c.l.b16 %v3830
        %v4350 = vunpack.c.l.b16 %v3831
        %v4351 = vunpack.c.l.b16 %v3832
        %v4352 = vunpack.c.l.b16 %v3833
        %v4353 = vunpack.c.l.b16 %v3834
        %v4354 = vunpack.c.l.b16 %v3835
        %v4355 = vunpack.c.l.b16 %v3836
        %v4356 = vunpack.c.l.b16 %v3837
        %v4357 = vunpack.c.l.b16 %v3838
        %v4358 = vunpack.c.l.b16 %v3839
        %v4359 = vunpack.c.l.b16 %v3840
        %v4360 = vunpack.c.l.b16 %v3841
        %v4361 = vunpack.c.l.b16 %v3842
        %v4362 = vunpack.c.l.b16 %v3843
        %v4363 = vunpack.c.l.b16 %v3844
        %v4364 = vunpack.c.l.b16 %v3845
        %v4365 = vunpack.c.l.b16 %v3846
        %v4366 = vunpack.c.l.b16 %v3847
        %v4367 = vunpack.c.l.b16 %v3848
        %v4368 = vunpack.c.l.b16 %v3849
        %v4369 = vunpack.c.l.b16 %v3850
        %v4370 = vunpack.c.l.b16 %v3851
        %v4371 = vunpack.c.l.b16 %v3852
        %v4372 = vunpack.c.l.b16 %v3853
        %v4373 = vunpack.c.l.b16 %v3854
        %v4374 = vunpack.c.l.b16 %v3855
        %v4375 = vpack.c.b16 %v4120, %v4119
        %v4376 = vpack.c.b16 %v4122, %v4121
        %v4377 = vpack.c.b16 %v4124, %v4123
        %v4378 = vpack.c.b16 %v4126, %v4125
        %v4379 = vpack.c.b16 %v4128, %v4127
        %v4380 = vpack.c.b16 %v4130, %v4129
        %v4381 = vpack.c.b16 %v4132, %v4131
        %v4382 = vpack.c.b16 %v4134, %v4133
        %v4383 = vpack.c.b16 %v4136, %v4135
        %v4384 = vpack.c.b16 %v4138, %v4137
        %v4385 = vpack.c.b16 %v4140, %v4139
        %v4386 = vpack.c.b16 %v4142, %v4141
        %v4387 = vpack.c.b16 %v4144, %v4143
        %v4388 = vpack.c.b16 %v4146, %v4145
        %v4389 = vpack.c.b16 %v4148, %v4147
        %v4390 = vpack.c.b16 %v4150, %v4149
        %v4391 = vpack.c.b16 %v4152, %v4151
        %v4392 = vpack.c.b16 %v4154, %v4153
        %v4393 = vpack.c.b16 %v4156, %v4155
        %v4394 = vpack.c.b16 %v4158, %v4157
        %v4395 = vpack.c.b16 %v4160, %v4159
        %v4396 = vpack.c.b16 %v4162, %v4161
        %v4397 = vpack.c.b16 %v4164, %v4163
        %v4398 = vpack.c.b16 %v4166, %v4165
        %v4399 = vpack.c.b16 %v4168, %v4167
        %v4400 = vpack.c.b16 %v4170, %v4169
        %v4401 = vpack.c.b16 %v4172, %v4171
        %v4402 = vpack.c.b16 %v4174, %v4173
        %v4403 = vpack.c.b16 %v4176, %v4175
        %v4404 = vpack.c.b16 %v4178, %v4177
        %v4405 = vpack.c.b16 %v4180, %v4179
        %v4406 = vpack.c.b16 %v4182, %v4181
        %v4407 = vpack.c.b16 %v4184, %v4183
        %v4408 = vpack.c.b16 %v4186, %v4185
        %v4409 = vpack.c.b16 %v4188, %v4187
        %v4410 = vpack.c.b16 %v4190, %v4189
        %v4411 = vpack.c.b16 %v4192, %v4191
        %v4412 = vpack.c.b16 %v4194, %v4193
        %v4413 = vpack.c.b16 %v4196, %v4195
        %v4414 = vpack.c.b16 %v4198, %v4197
        %v4415 = vpack.c.b16 %v4200, %v4199
        %v4416 = vpack.c.b16 %v4202, %v4201
        %v4417 = vpack.c.b16 %v4204, %v4203
        %v4418 = vpack.c.b16 %v4206, %v4205
        %v4419 = vpack.c.b16 %v4208, %v4207
        %v4420 = vpack.c.b16 %v4210, %v4209
        %v4421 = vpack.c.b16 %v4212, %v4211
        %v4422 = vpack.c.b16 %v4214, %v4213
        %v4423 = vpack.c.b16 %v4216, %v4215
        %v4424 = vpack.c.b16 %v4218, %v4217
        %v4425 = vpack.c.b16 %v4220, %v4219
        %v4426 = vpack.c.b16 %v4222, %v4221
        %v4427 = vpack.c.b16 %v4224, %v4223
        %v4428 = vpack.c.b16 %v4226, %v4225
        %v4429 = vpack.c.b16 %v4228, %v4227
        %v4430 = vpack.c.b16 %v4230, %v4229
        %v4431 = vpack.c.b16 %v4232, %v4231
        %v4432 = vpack.c.b16 %v4234, %v4233
        %v4433 = vpack.c.b16 %v4236, %v4235
        %v4434 = vpack.c.b16 %v4238, %v4237
        %v4435 = vpack.c.b16 %v4240, %v4239
        %v4436 = vpack.c.b16 %v4242, %v4241
        %v4437 = vpack.c.b16 %v4244, %v4243
        %v4438 = vpack.c.b16 %v4246, %v4245
        %v4439 = vpack.c.b16 %v4248, %v4247
        %v4440 = vpack.c.b16 %v4250, %v4249
        %v4441 = vpack.c.b16 %v4252, %v4251
        %v4442 = vpack.c.b16 %v4254, %v4253
        %v4443 = vpack.c.b16 %v4256, %v4255
        %v4444 = vpack.c.b16 %v4258, %v4257
        %v4445 = vpack.c.b16 %v4260, %v4259
        %v4446 = vpack.c.b16 %v4262, %v4261
        %v4447 = vpack.c.b16 %v4264, %v4263
        %v4448 = vpack.c.b16 %v4266, %v4265
        %v4449 = vpack.c.b16 %v4268, %v4267
        %v4450 = vpack.c.b16 %v4270, %v4269
        %v4451 = vpack.c.b16 %v4272, %v4271
        %v4452 = vpack.c.b16 %v4274, %v4273
        %v4453 = vpack.c.b16 %v4276, %v4275
        %v4454 = vpack.c.b16 %v4278, %v4277
        %v4455 = vpack.c.b16 %v4280, %v4279
        %v4456 = vpack.c.b16 %v4282, %v4281
        %v4457 = vpack.c.b16 %v4284, %v4283
        %v4458 = vpack.c.b16 %v4286, %v4285
        %v4459 = vpack.c.b16 %v4288, %v4287
        %v4460 = vpack.c.b16 %v4290, %v4289
        %v4461 = vpack.c.b16 %v4292, %v4291
        %v4462 = vpack.c.b16 %v4294, %v4293
        %v4463 = vpack.c.b16 %v4296, %v4295
        %v4464 = vpack.c.b16 %v4298, %v4297
        %v4465 = vpack.c.b16 %v4300, %v4299
        %v4466 = vpack.c.b16 %v4302, %v4301
        %v4467 = vpack.c.b16 %v4304, %v4303
        %v4468 = vpack.c.b16 %v4306, %v4305
        %v4469 = vpack.c.b16 %v4308, %v4307
        %v4470 = vpack.c.b16 %v4310, %v4309
        %v4471 = vpack.c.b16 %v4312, %v4311
        %v4472 = vpack.c.b16 %v4314, %v4313
        %v4473 = vpack.c.b16 %v4316, %v4315
        %v4474 = vpack.c.b16 %v4318, %v4317
        %v4475 = vpack.c.b16 %v4320, %v4319
        %v4476 = vpack.c.b16 %v4322, %v4321
        %v4477 = vpack.c.b16 %v4324, %v4323
        %v4478 = vpack.c.b16 %v4326, %v4325
        %v4479 = vpack.c.b16 %v4328, %v4327
        %v4480 = vpack.c.b16 %v4330, %v4329
        %v4481 = vpack.c.b16 %v4332, %v4331
        %v4482 = vpack.c.b16 %v4334, %v4333
        %v4483 = vpack.c.b16 %v4336, %v4335
        %v4484 = vpack.c.b16 %v4338, %v4337
        %v4485 = vpack.c.b16 %v4340, %v4339
        %v4486 = vpack.c.b16 %v4342, %v4341
        %v4487 = vpack.c.b16 %v4344, %v4343
        %v4488 = vpack.c.b16 %v4346, %v4345
        %v4489 = vpack.c.b16 %v4348, %v4347
        %v4490 = vpack.c.b16 %v4350, %v4349
        %v4491 = vpack.c.b16 %v4352, %v4351
        %v4492 = vpack.c.b16 %v4354, %v4353
        %v4493 = vpack.c.b16 %v4356, %v4355
        %v4494 = vpack.c.b16 %v4358, %v4357
        %v4495 = vpack.c.b16 %v4360, %v4359
        %v4496 = vpack.c.b16 %v4362, %v4361
        %v4497 = vpack.c.b16 %v4364, %v4363
        %v4498 = vpack.c.b16 %v4366, %v4365
        %v4499 = vpack.c.b16 %v4368, %v4367
        %v4500 = vpack.c.b16 %v4370, %v4369
        %v4501 = vpack.c.b16 %v4372, %v4371
        %v4502 = vpack.c.b16 %v4374, %v4373
        %4631 = vmatprep.subr.bf16.mxu0 0
        %4632 = vmatpush1.bf16.msra.mxu0 %v4375
        %4633 = vmatprep.subr.bf16.mxu0 0
        %4634 = vmatpush1.bf16.msra.mxu0 %v4376
        %4635 = vmatprep.subr.bf16.mxu0 0
        %4636 = vmatpush1.bf16.msra.mxu0 %v4377
        %4637 = vmatprep.subr.bf16.mxu0 0
        %4638 = vmatpush1.bf16.msra.mxu0 %v4378
        %4639 = vmatprep.subr.bf16.mxu0 0
        %4640 = vmatpush1.bf16.msra.mxu0 %v4379
        %4641 = vmatprep.subr.bf16.mxu0 0
        %4642 = vmatpush1.bf16.msra.mxu0 %v4380
        %4643 = vmatprep.subr.bf16.mxu0 0
        %4644 = vmatpush1.bf16.msra.mxu0 %v4381
        %4645 = vmatprep.subr.bf16.mxu0 0
        %4646 = vmatpush1.bf16.msra.mxu0 %v4382
        %4647 = vmatprep.subr.bf16.mxu0 0
        %4648 = vmatpush1.bf16.msra.mxu0 %v4383
        %4649 = vmatprep.subr.bf16.mxu0 0
        %4650 = vmatpush1.bf16.msra.mxu0 %v4384
        %4651 = vmatprep.subr.bf16.mxu0 0
        %4652 = vmatpush1.bf16.msra.mxu0 %v4385
        %4653 = vmatprep.subr.bf16.mxu0 0
        %4654 = vmatpush1.bf16.msra.mxu0 %v4386
        %4655 = vmatprep.subr.bf16.mxu0 0
        %4656 = vmatpush1.bf16.msra.mxu0 %v4387
        %4657 = vmatprep.subr.bf16.mxu0 0
        %4658 = vmatpush1.bf16.msra.mxu0 %v4388
        %4659 = vmatprep.subr.bf16.mxu0 0
        %4660 = vmatpush1.bf16.msra.mxu0 %v4389
        %4661 = vmatprep.subr.bf16.mxu0 0
        %4662 = vmatpush1.bf16.msra.mxu0 %v4390
        %4663 = vmatprep.mubr.bf16.mxu0 %v3585
        %4664 = vmatmul.mubr.bf16.gmra.mrb[0].mxu0 %v3584
        %v4665 = vpop.f32.mrb[0].mxu0
        %v4666 = vadd.f32 %v3861, %v4665
        %v4667 = vpop.f32.mrb[0].mxu0
        %v4668 = vpop.f32.mrb[0].mxu0
        %v4669 = vpop.f32.mrb[0].mxu0
        %4670 = vdwg.mxu0
        %4671 = vmatprep.subr.bf16.mxu0 0
        %4672 = vmatpush1.bf16.msra.mxu0 %v4391
        %4673 = vmatprep.subr.bf16.mxu0 0
        %4674 = vmatpush1.bf16.msra.mxu0 %v4392
        %4675 = vmatprep.subr.bf16.mxu0 0
        %4676 = vmatpush1.bf16.msra.mxu0 %v4393
        %4677 = vmatprep.subr.bf16.mxu0 0
        %4678 = vmatpush1.bf16.msra.mxu0 %v4394
        %4679 = vmatprep.subr.bf16.mxu0 0
        %4680 = vmatpush1.bf16.msra.mxu0 %v4395
        %4681 = vmatprep.subr.bf16.mxu0 0
        %4682 = vmatpush1.bf16.msra.mxu0 %v4396
        %4683 = vmatprep.subr.bf16.mxu0 0
        %4684 = vmatpush1.bf16.msra.mxu0 %v4397
        %4685 = vmatprep.subr.bf16.mxu0 0
        %4686 = vmatpush1.bf16.msra.mxu0 %v4398
        %4687 = vmatprep.subr.bf16.mxu0 0
        %4688 = vmatpush1.bf16.msra.mxu0 %v4399
        %4689 = vmatprep.subr.bf16.mxu0 0
        %4690 = vmatpush1.bf16.msra.mxu0 %v4400
        %4691 = vmatprep.subr.bf16.mxu0 0
        %4692 = vmatpush1.bf16.msra.mxu0 %v4401
        %4693 = vmatprep.subr.bf16.mxu0 0
        %4694 = vmatpush1.bf16.msra.mxu0 %v4402
        %4695 = vmatprep.subr.bf16.mxu0 0
        %4696 = vmatpush1.bf16.msra.mxu0 %v4403
        %4697 = vmatprep.subr.bf16.mxu0 0
        %4698 = vmatpush1.bf16.msra.mxu0 %v4404
        %4699 = vmatprep.subr.bf16.mxu0 0
        %4700 = vmatpush1.bf16.msra.mxu0 %v4405
        %4701 = vmatprep.subr.bf16.mxu0 0
        %4702 = vmatpush1.bf16.msra.mxu0 %v4406
        %4703 = vmatprep.mubr.bf16.mxu0 %v3587
        %4704 = vmatmul.mubr.bf16.gmra.mrb[0].mxu0 %v3586
        %v4705 = vpop.f32.mrb[0].mxu0
        %v4706 = vadd.f32 %v4666, %v4705
        %v4707 = vpop.f32.mrb[0].mxu0
        %v4708 = vpop.f32.mrb[0].mxu0
        %v4709 = vpop.f32.mrb[0].mxu0
        %4710 = vdwg.mxu0
        %4711 = vmatprep.subr.bf16.mxu0 0
        %4712 = vmatpush1.bf16.msra.mxu0 %v4407
        %4713 = vmatprep.subr.bf16.mxu0 0
        %4714 = vmatpush1.bf16.msra.mxu0 %v4408
        %4715 = vmatprep.subr.bf16.mxu0 0
        %4716 = vmatpush1.bf16.msra.mxu0 %v4409
        %4717 = vmatprep.subr.bf16.mxu0 0
        %4718 = vmatpush1.bf16.msra.mxu0 %v4410
        %4719 = vmatprep.subr.bf16.mxu0 0
        %4720 = vmatpush1.bf16.msra.mxu0 %v4411
        %4721 = vmatprep.subr.bf16.mxu0 0
        %4722 = vmatpush1.bf16.msra.mxu0 %v4412
        %4723 = vmatprep.subr.bf16.mxu0 0
        %4724 = vmatpush1.bf16.msra.mxu0 %v4413
        %4725 = vmatprep.subr.bf16.mxu0 0
        %4726 = vmatpush1.bf16.msra.mxu0 %v4414
        %4727 = vmatprep.subr.bf16.mxu0 0
        %4728 = vmatpush1.bf16.msra.mxu0 %v4415
        %4729 = vmatprep.subr.bf16.mxu0 0
        %4730 = vmatpush1.bf16.msra.mxu0 %v4416
        %4731 = vmatprep.subr.bf16.mxu0 0
        %4732 = vmatpush1.bf16.msra.mxu0 %v4417
        %4733 = vmatprep.subr.bf16.mxu0 0
        %4734 = vmatpush1.bf16.msra.mxu0 %v4418
        %4735 = vmatprep.subr.bf16.mxu0 0
        %4736 = vmatpush1.bf16.msra.mxu0 %v4419
        %4737 = vmatprep.subr.bf16.mxu0 0
        %4738 = vmatpush1.bf16.msra.mxu0 %v4420
        %4739 = vmatprep.subr.bf16.mxu0 0
        %4740 = vmatpush1.bf16.msra.mxu0 %v4421
        %4741 = vmatprep.subr.bf16.mxu0 0
        %4742 = vmatpush1.bf16.msra.mxu0 %v4422
        %4743 = vmatprep.mubr.bf16.mxu0 %v3589
        %4744 = vmatmul.mubr.bf16.gmra.mrb[0].mxu0 %v3588
        %v4745 = vpop.f32.mrb[0].mxu0
        %v4746 = vadd.f32 %v4706, %v4745
        %v4747 = vpop.f32.mrb[0].mxu0
        %v4748 = vpop.f32.mrb[0].mxu0
        %v4749 = vpop.f32.mrb[0].mxu0
        %4750 = vdwg.mxu0
        %4751 = vmatprep.subr.bf16.mxu0 0
        %4752 = vmatpush1.bf16.msra.mxu0 %v4423
        %4753 = vmatprep.subr.bf16.mxu0 0
        %4754 = vmatpush1.bf16.msra.mxu0 %v4424
        %4755 = vmatprep.subr.bf16.mxu0 0
        %4756 = vmatpush1.bf16.msra.mxu0 %v4425
        %4757 = vmatprep.subr.bf16.mxu0 0
        %4758 = vmatpush1.bf16.msra.mxu0 %v4426
        %4759 = vmatprep.subr.bf16.mxu0 0
        %4760 = vmatpush1.bf16.msra.mxu0 %v4427
        %4761 = vmatprep.subr.bf16.mxu0 0
        %4762 = vmatpush1.bf16.msra.mxu0 %v4428
        %4763 = vmatprep.subr.bf16.mxu0 0
        %4764 = vmatpush1.bf16.msra.mxu0 %v4429
        %4765 = vmatprep.subr.bf16.mxu0 0
        %4766 = vmatpush1.bf16.msra.mxu0 %v4430
        %4767 = vmatprep.subr.bf16.mxu0 0
        %4768 = vmatpush1.bf16.msra.mxu0 %v4431
        %4769 = vmatprep.subr.bf16.mxu0 0
        %4770 = vmatpush1.bf16.msra.mxu0 %v4432
        %4771 = vmatprep.subr.bf16.mxu0 0
        %4772 = vmatpush1.bf16.msra.mxu0 %v4433
        %4773 = vmatprep.subr.bf16.mxu0 0
        %4774 = vmatpush1.bf16.msra.mxu0 %v4434
        %4775 = vmatprep.subr.bf16.mxu0 0
        %4776 = vmatpush1.bf16.msra.mxu0 %v4435
        %4777 = vmatprep.subr.bf16.mxu0 0
        %4778 = vmatpush1.bf16.msra.mxu0 %v4436
        %4779 = vmatprep.subr.bf16.mxu0 0
        %4780 = vmatpush1.bf16.msra.mxu0 %v4437
        %4781 = vmatprep.subr.bf16.mxu0 0
        %4782 = vmatpush1.bf16.msra.mxu0 %v4438
        %4783 = vmatprep.mubr.bf16.mxu0 %v3591
        %4784 = vmatmul.mubr.bf16.gmra.mrb[0].mxu0 %v3590
        %v4785 = vpop.f32.mrb[0].mxu0
        %v4786 = vadd.f32 %v4746, %v4785
        %v4787 = vpop.f32.mrb[0].mxu0
        %v4788 = vpop.f32.mrb[0].mxu0
        %v4789 = vpop.f32.mrb[0].mxu0
        %4790 = vdwg.mxu0
        %4791 = vmatprep.subr.bf16.mxu0 0
        %4792 = vmatpush1.bf16.msra.mxu0 %v4439
        %4793 = vmatprep.subr.bf16.mxu0 0
        %4794 = vmatpush1.bf16.msra.mxu0 %v4440
        %4795 = vmatprep.subr.bf16.mxu0 0
        %4796 = vmatpush1.bf16.msra.mxu0 %v4441
        %4797 = vmatprep.subr.bf16.mxu0 0
        %4798 = vmatpush1.bf16.msra.mxu0 %v4442
        %4799 = vmatprep.subr.bf16.mxu0 0
        %4800 = vmatpush1.bf16.msra.mxu0 %v4443
        %4801 = vmatprep.subr.bf16.mxu0 0
        %4802 = vmatpush1.bf16.msra.mxu0 %v4444
        %4803 = vmatprep.subr.bf16.mxu0 0
        %4804 = vmatpush1.bf16.msra.mxu0 %v4445
        %4805 = vmatprep.subr.bf16.mxu0 0
        %4806 = vmatpush1.bf16.msra.mxu0 %v4446
        %4807 = vmatprep.subr.bf16.mxu0 0
        %4808 = vmatpush1.bf16.msra.mxu0 %v4447
        %4809 = vmatprep.subr.bf16.mxu0 0
        %4810 = vmatpush1.bf16.msra.mxu0 %v4448
        %4811 = vmatprep.subr.bf16.mxu0 0
        %4812 = vmatpush1.bf16.msra.mxu0 %v4449
        %4813 = vmatprep.subr.bf16.mxu0 0
        %4814 = vmatpush1.bf16.msra.mxu0 %v4450
        %4815 = vmatprep.subr.bf16.mxu0 0
        %4816 = vmatpush1.bf16.msra.mxu0 %v4451
        %4817 = vmatprep.subr.bf16.mxu0 0
        %4818 = vmatpush1.bf16.msra.mxu0 %v4452
        %4819 = vmatprep.subr.bf16.mxu0 0
        %4820 = vmatpush1.bf16.msra.mxu0 %v4453
        %4821 = vmatprep.subr.bf16.mxu0 0
        %4822 = vmatpush1.bf16.msra.mxu0 %v4454
        %4823 = vmatprep.mubr.bf16.mxu0 %v3593
        %4824 = vmatmul.mubr.bf16.gmra.mrb[0].mxu0 %v3592
        %v4825 = vpop.f32.mrb[0].mxu0
        %v4826 = vadd.f32 %v4786, %v4825
        %v4827 = vpop.f32.mrb[0].mxu0
        %v4828 = vpop.f32.mrb[0].mxu0
        %v4829 = vpop.f32.mrb[0].mxu0
        %4830 = vdwg.mxu0
        %4831 = vmatprep.subr.bf16.mxu0 0
        %4832 = vmatpush1.bf16.msra.mxu0 %v4455
        %4833 = vmatprep.subr.bf16.mxu0 0
        %4834 = vmatpush1.bf16.msra.mxu0 %v4456
        %4835 = vmatprep.subr.bf16.mxu0 0
        %4836 = vmatpush1.bf16.msra.mxu0 %v4457
        %4837 = vmatprep.subr.bf16.mxu0 0
        %4838 = vmatpush1.bf16.msra.mxu0 %v4458
        %4839 = vmatprep.subr.bf16.mxu0 0
        %4840 = vmatpush1.bf16.msra.mxu0 %v4459
        %4841 = vmatprep.subr.bf16.mxu0 0
        %4842 = vmatpush1.bf16.msra.mxu0 %v4460
        %4843 = vmatprep.subr.bf16.mxu0 0
        %4844 = vmatpush1.bf16.msra.mxu0 %v4461
        %4845 = vmatprep.subr.bf16.mxu0 0
        %4846 = vmatpush1.bf16.msra.mxu0 %v4462
        %4847 = vmatprep.subr.bf16.mxu0 0
        %4848 = vmatpush1.bf16.msra.mxu0 %v4463
        %4849 = vmatprep.subr.bf16.mxu0 0
        %4850 = vmatpush1.bf16.msra.mxu0 %v4464
        %4851 = vmatprep.subr.bf16.mxu0 0
        %4852 = vmatpush1.bf16.msra.mxu0 %v4465
        %4853 = vmatprep.subr.bf16.mxu0 0
        %4854 = vmatpush1.bf16.msra.mxu0 %v4466
        %4855 = vmatprep.subr.bf16.mxu0 0
        %4856 = vmatpush1.bf16.msra.mxu0 %v4467
        %4857 = vmatprep.subr.bf16.mxu0 0
        %4858 = vmatpush1.bf16.msra.mxu0 %v4468
        %4859 = vmatprep.subr.bf16.mxu0 0
        %4860 = vmatpush1.bf16.msra.mxu0 %v4469
        %4861 = vmatprep.subr.bf16.mxu0 0
        %4862 = vmatpush1.bf16.msra.mxu0 %v4470
        %4863 = vmatprep.mubr.bf16.mxu0 %v3595
        %4864 = vmatmul.mubr.bf16.gmra.mrb[0].mxu0 %v3594
        %v4865 = vpop.f32.mrb[0].mxu0
        %v4866 = vadd.f32 %v4826, %v4865
        %v4867 = vpop.f32.mrb[0].mxu0
        %v4868 = vpop.f32.mrb[0].mxu0
        %v4869 = vpop.f32.mrb[0].mxu0
        %4870 = vdwg.mxu0
        %4871 = vmatprep.subr.bf16.mxu0 0
        %4872 = vmatpush1.bf16.msra.mxu0 %v4471
        %4873 = vmatprep.subr.bf16.mxu0 0
        %4874 = vmatpush1.bf16.msra.mxu0 %v4472
        %4875 = vmatprep.subr.bf16.mxu0 0
        %4876 = vmatpush1.bf16.msra.mxu0 %v4473
        %4877 = vmatprep.subr.bf16.mxu0 0
        %4878 = vmatpush1.bf16.msra.mxu0 %v4474
        %4879 = vmatprep.subr.bf16.mxu0 0
        %4880 = vmatpush1.bf16.msra.mxu0 %v4475
        %4881 = vmatprep.subr.bf16.mxu0 0
        %4882 = vmatpush1.bf16.msra.mxu0 %v4476
        %4883 = vmatprep.subr.bf16.mxu0 0
        %4884 = vmatpush1.bf16.msra.mxu0 %v4477
        %4885 = vmatprep.subr.bf16.mxu0 0
        %4886 = vmatpush1.bf16.msra.mxu0 %v4478
        %4887 = vmatprep.subr.bf16.mxu0 0
        %4888 = vmatpush1.bf16.msra.mxu0 %v4479
        %4889 = vmatprep.subr.bf16.mxu0 0
        %4890 = vmatpush1.bf16.msra.mxu0 %v4480
        %4891 = vmatprep.subr.bf16.mxu0 0
        %4892 = vmatpush1.bf16.msra.mxu0 %v4481
        %4893 = vmatprep.subr.bf16.mxu0 0
        %4894 = vmatpush1.bf16.msra.mxu0 %v4482
        %4895 = vmatprep.subr.bf16.mxu0 0
        %4896 = vmatpush1.bf16.msra.mxu0 %v4483
        %4897 = vmatprep.subr.bf16.mxu0 0
        %4898 = vmatpush1.bf16.msra.mxu0 %v4484
        %4899 = vmatprep.subr.bf16.mxu0 0
        %4900 = vmatpush1.bf16.msra.mxu0 %v4485
        %4901 = vmatprep.subr.bf16.mxu0 0
        %4902 = vmatpush1.bf16.msra.mxu0 %v4486
        %4903 = vmatprep.mubr.bf16.mxu0 %v3597
        %4904 = vmatmul.mubr.bf16.gmra.mrb[0].mxu0 %v3596
        %v4905 = vpop.f32.mrb[0].mxu0
        %v4906 = vadd.f32 %v4866, %v4905
        %v4907 = vpop.f32.mrb[0].mxu0
        %v4908 = vpop.f32.mrb[0].mxu0
        %v4909 = vpop.f32.mrb[0].mxu0
        %4910 = vdwg.mxu0
        %4911 = vmatprep.subr.bf16.mxu0 0
        %4912 = vmatpush1.bf16.msra.mxu0 %v4487
        %4913 = vmatprep.subr.bf16.mxu0 0
        %4914 = vmatpush1.bf16.msra.mxu0 %v4488
        %4915 = vmatprep.subr.bf16.mxu0 0
        %4916 = vmatpush1.bf16.msra.mxu0 %v4489
        %4917 = vmatprep.subr.bf16.mxu0 0
        %4918 = vmatpush1.bf16.msra.mxu0 %v4490
        %4919 = vmatprep.subr.bf16.mxu0 0
        %4920 = vmatpush1.bf16.msra.mxu0 %v4491
        %4921 = vmatprep.subr.bf16.mxu0 0
        %4922 = vmatpush1.bf16.msra.mxu0 %v4492
        %4923 = vmatprep.subr.bf16.mxu0 0
        %4924 = vmatpush1.bf16.msra.mxu0 %v4493
        %4925 = vmatprep.subr.bf16.mxu0 0
        %4926 = vmatpush1.bf16.msra.mxu0 %v4494
        %4927 = vmatprep.subr.bf16.mxu0 0
        %4928 = vmatpush1.bf16.msra.mxu0 %v4495
        %4929 = vmatprep.subr.bf16.mxu0 0
        %4930 = vmatpush1.bf16.msra.mxu0 %v4496
        %4931 = vmatprep.subr.bf16.mxu0 0
        %4932 = vmatpush1.bf16.msra.mxu0 %v4497
        %4933 = vmatprep.subr.bf16.mxu0 0
        %4934 = vmatpush1.bf16.msra.mxu0 %v4498
        %4935 = vmatprep.subr.bf16.mxu0 0
        %4936 = vmatpush1.bf16.msra.mxu0 %v4499
        %4937 = vmatprep.subr.bf16.mxu0 0
        %4938 = vmatpush1.bf16.msra.mxu0 %v4500
        %4939 = vmatprep.subr.bf16.mxu0 0
        %4940 = vmatpush1.bf16.msra.mxu0 %v4501
        %4941 = vmatprep.subr.bf16.mxu0 0
        %4942 = vmatpush1.bf16.msra.mxu0 %v4502
        %4943 = vmatprep.mubr.bf16.mxu0 %v3599
        %4944 = vmatmul.mubr.bf16.gmra.mrb[0].mxu0 %v3598
        %v4945 = vpop.f32.mrb[0].mxu0
        %v4946 = vadd.f32 %v4906, %v4945
        %v4947 = vpop.f32.mrb[0].mxu0
        %v4948 = vpop.f32.mrb[0].mxu0
        %v4949 = vpop.f32.mrb[0].mxu0
        %4950 = vdwg.mxu0
        %v4951 = vadd.f32 %v2799, %v4946
        %v4952 = vld [vmem:[%s767] sm:$0x1]
        %v4953 = vld [vmem:[%s770] sm:$0x1]
        %v4954 = vsel %vm1704, %v4951, 0.0
        %4955 = vadd.xlane.f32.xlu0 %v4954
        %v4956 = vpop.xlane.xlu0 %4955
        %v4957 = vmul.f32 %v4956, %v2775
        %v4958 = vsub.f32 %v4951, %v4957
        %v4959 = vmul.f32 %v4958, %v4958
        %v4960 = vsel %vm1704, %v4959, 0.0
        %4961 = vadd.xlane.f32.xlu0 %v4960
        %v4962 = vpop.xlane.xlu0 %4961
        %v4963 = vmul.f32 %v4962, %v2775
        %v4964 = vadd.f32 %v4963, 1e-05
        %v4965 = vrsqrt.pop %v4964
        %v4966 = vmul.f32 %v4958, %v4965
        %v4968 = vlaneseq
        %v4969 = vshrl.u32 %v4968, 7
        %v4970 = vsub.s32 0, %v4969
        %v4971 = vrot.slane %v4952, %v4970
        %v4973 = vmul.f32 %v4966, %v4971
        %v4975 = vlaneseq
        %v4976 = vshrl.u32 %v4975, 7
        %v4977 = vsub.s32 0, %v4976
        %v4978 = vrot.slane %v4953, %v4977
        %v4980 = vadd.f32 %v4973, %v4978
        %4981 = vst.msk [vmem:[#allocation2] sm:$0xff] %vm1704, %v4980
        %p4982 = scmp.eq.s32.totalorder %s36, 1
        // Predicated region
        $region93: #{tpu_custom_call.1} parent=87 // pred_check
          %p4983 = pneg %p4982
        $region94: #{tpu_custom_call.1} parent=87 // pred_check_branch
          %4985 = sbr.rel (%p4983) target = $region96
        $region95: #{tpu_custom_call.1} parent=87 // pred_region
          %4986 = vst.msk [vmem:[%s716] sm:$0xff] %vm1704, %v4980
        $region96: #{tpu_custom_call.1} parent=87 // pred_fallthru
          _
        %s4987 = sand.u32 %s478, 1
        %s4988 = scalar_lea.sflag [#allocation5], %s4987
        %s4989 = sand.u32 %s478, 1
        %s4990 = smul.addr %s4989, 8
        %s4991 = scalar_lea.vmem [#allocation4], %s4990
        // Predicated region
        $region97: #{tpu_custom_call.1} parent=87 // pred_check
          %p4992 = pneg %p488
        $region98: #{tpu_custom_call.1} parent=87 // pred_check_branch
          %4994 = sbr.rel (%p4992) target = $region100
        $region99: #{tpu_custom_call.1} parent=87 // pred_region
          %s4996 = ssub.s32 128, 128
          %4997 = vsyncadd %s4988, %s4996
          %s4998 = smul.addr %s35, 128
          %s4999 = scalar_lea.hbm %s17, %s4998
          %s5001 = sshll.u32 %s4991, 4
          %s5002 = int_to_ptr.vmem [resolvable:$true] %s5001
          %5004 = dma.vmem_to_hbm [thread:$0]  %s5002, 128, %s4999, %s4988
        $region100: #{tpu_custom_call.1} parent=87 // pred_fallthru
          _
      $region88: #{tpu_custom_call.1} parent=5 // pred_fallthru
        _
      %p5005 = scmp.le.s32.totalorder 2, %s26
      // Predicated region
      $region101: #{tpu_custom_call.1} parent=5 // pred_check
        %p5006 = pneg %p5005
      $region102: #{tpu_custom_call.1} parent=5 // pred_check_branch
        %5008 = sbr.rel (%p5006) target = $region104
      $region103: #{tpu_custom_call.1} parent=5 // pred_region
        %s5009 = ssub.s32 %s26, 2
        // Predicated region
        $region105: #{tpu_custom_call.1} parent=103 // pred_check
          %p5010 = pneg %p494
        $region106: #{tpu_custom_call.1} parent=103 // pred_check_branch
          %5012 = sbr.rel (%p5010) target = $region108
        $region107: #{tpu_custom_call.1} parent=103 // pred_region
          %s5013 = sand.u32 %s479, 1
          %s5014 = scalar_lea.sflag [#allocation5], %s5013
          %s5015 = sand.u32 %s479, 1
          %s5016 = smul.addr %s5015, 8
          %s5017 = scalar_lea.vmem [#allocation4], %s5016
          %5018 = dma.done %s5014, 128
        $region108: #{tpu_custom_call.1} parent=103 // pred_fallthru
          _
      $region104: #{tpu_custom_call.1} parent=5 // pred_fallthru
        _
    $region6: #{tpu_custom_call.1} parent=1 // loop_footer
      %s30 = sadd.s32 1, %s26
    $region7: #{tpu_custom_call.1} parent=1 // loop_footer_branch
      %25 = sbr.rel target = $region3
    $region8: #{tpu_custom_call.1} parent=1 // loop_exit
      _
    %5019 = vsyncpa [#allocation5], 1
    %s5020 = scalar_lea.sflag [#allocation5], 1
    %5021 = vsyncpa %s5020, 1

</llo_original>
